<compile_context>
chip_gen: v7x
topology: tpu7x:2x2x1
jax: 0.10.0
libtpu: 0.0.40
codegen_flags: <defaults>
</compile_context>

<pallas_src>
import jax
import jax.numpy as jnp
from jax.experimental import pallas as pl
from jax.experimental.pallas import tpu as pltpu

EPS = 1e-3


def _num_tensorcores() -> int:
    """Best-effort query of TensorCores per chip (v7x: 2, v5e/v6e: 1)."""
    try:
        info = pltpu.get_tpu_info()
    except Exception:
        return 1
    for attr in ("num_cores", "num_tensorcores", "tensorcore_count", "cores_per_chip"):
        n = getattr(info, attr, None)
        if isinstance(n, int) and n >= 1:
            return n
    return 1


def _fused_kernel(gate_ref, x_ref, w_ref, gamma_ref, beta_ref, o_ref):
    # gate_ref  : [1, C_in]      pre-sigmoid gate, lane-major
    # x_ref     : [C_in, P]      activations, channel-major (free reshape of NCHW)
    # w_ref     : [C_blk, C_in]  bf16 slice of the 1x1 conv weight
    # gamma_ref : [C_blk, 1]
    # beta_ref  : [C_blk, 1]
    # o_ref     : [C_blk, P]
    g = jax.nn.sigmoid(gate_ref[...]).astype(jnp.bfloat16)     # [1, C_in], lane-dense EUP
    # Fold the per-input-channel gate into the weight (lane-aligned broadcast):
    #   W @ (g .* x) == (W .* g) @ x   -- avoids any lane->sublane transpose.
    wg = w_ref[...] * g                                         # [C_blk, C_in] bf16
    xs = x_ref[...].astype(jnp.bfloat16)                        # [C_in, P]   bf16
    y = jnp.dot(wg, xs, preferred_element_type=jnp.float32)     # [C_blk, P], f32 acc

    # BatchNorm2d (training-mode batch stats over N*H*W), single pass:
    inv_p = 1.0 / y.shape[-1]
    mean = jnp.sum(y, axis=-1, keepdims=True) * inv_p           # E[y]
    var = jnp.sum(y * y, axis=-1, keepdims=True) * inv_p - mean * mean
    var = jnp.maximum(var, 0.0)                                 # guard f32 cancellation
    scale = jax.lax.rsqrt(var + EPS) * gamma_ref[...]           # EUP rsqrt
    o_ref[...] = ((y - mean) * scale + beta_ref[...]).astype(o_ref.dtype)


def prepare_params(conv_w, gamma, beta):
    """One-time (init-time) parameter prep: reshape + bf16 weight convert.

    Keeping the f32->bf16 convert out of the per-call path makes the halved
    weight DMA an actual saving instead of an extra XLA copy per call.
    """
    C_out, C_in = conv_w.shape[0], conv_w.shape[1]
    w2d = jnp.asarray(conv_w, jnp.float32).reshape(C_out, C_in).astype(jnp.bfloat16)
    gamma2d = jnp.asarray(gamma, jnp.float32).reshape(C_out, 1)
    beta2d = jnp.asarray(beta, jnp.float32).reshape(C_out, 1)
    return w2d, gamma2d, beta2d


def sigmoid_mul_conv_bn(x520, x516, w2d, gamma2d, beta2d):
    """x520: [N, C_in, 1, 1], x516: [N, C_in, H, W], w2d: bf16 [C_out, C_in]."""
    N, C_in, H, W = x516.shape
    C_out = w2d.shape[0]
    assert N == 1, "channel-major layout below assumes N == 1 (module spec)"
    P = N * H * W

    # Free reshapes of the contiguous NCHW buffers (no transposes, no casts).
    x2d = x516.reshape(C_in, P)
    gate2d = x520.reshape(1, C_in)          # lane-major gate row

    # 2 C_out-blocks only when two TensorCores exist (v7x); 1 step otherwise.
    n_tc = _num_tensorcores()
    n_blk = 2 if (n_tc >= 2 and C_out % 2 == 0 and (C_out // 2) % 8 == 0) else 1
    c_blk = C_out // n_blk

    bytes_accessed = (x2d.size * 4 + gate2d.size * 4 + w2d.size * 2
                      + gamma2d.size * 4 + beta2d.size * 4 + C_out * P * 4)
    cost = pl.CostEstimate(flops=2 * C_out * C_in * P,
                           transcendentals=C_in,
                           bytes_accessed=bytes_accessed)

    out2d = pl.pallas_call(
        _fused_kernel,
        out_shape=jax.ShapeDtypeStruct((C_out, P), jnp.float32),
        grid_spec=pltpu.PrefetchScalarGridSpec(
            num_scalar_prefetch=0,
            grid=(n_blk,),
            in_specs=[
                pl.BlockSpec((1, C_in), lambda i: (0, 0)),      # gate (block-invariant)
                pl.BlockSpec((C_in, P), lambda i: (0, 0)),      # x    (block-invariant)
                pl.BlockSpec((c_blk, C_in), lambda i: (i, 0)),  # weight slice
                pl.BlockSpec((c_blk, 1), lambda i: (i, 0)),     # gamma slice
                pl.BlockSpec((c_blk, 1), lambda i: (i, 0)),     # beta slice
            ],
            out_specs=pl.BlockSpec((c_blk, P), lambda i: (i, 0)),
        ),
        compiler_params=pltpu.CompilerParams(
            dimension_semantics=(("parallel",) if n_blk > 1 else ("arbitrary",))),
        cost_estimate=cost,
    )(gate2d, x2d, w2d, gamma2d, beta2d)

    # [C_out, P] -> [N, C_out, H, W]: free reshape (N == 1).
    return out2d.reshape(N, C_out, H, W)


if __name__ == "__main__":
    key = jax.random.PRNGKey(0)
    k1, k2, k3 = jax.random.split(key, 3)

    # Shapes fixed by the module definition (conv 1824 -> 304, 7x7 spatial).
    N, C_in, H, W = 1, 1824, 7, 7
    C_out = 304

    x516 = jax.random.normal(k1, (N, C_in, H, W), dtype=jnp.float32)
    x520 = jax.random.normal(k2, (N, C_in, 1, 1), dtype=jnp.float32)

    conv_w = jax.random.normal(k3, (C_out, C_in, 1, 1), dtype=jnp.float32) * 0.02
    gamma = jnp.ones((C_out,), dtype=jnp.float32)   # BatchNorm2d default weight
    beta = jnp.zeros((C_out,), dtype=jnp.float32)   # BatchNorm2d default bias

    # One-time parameter prep (kept out of the per-call path on purpose).
    w2d, gamma2d, beta2d = prepare_params(conv_w, gamma, beta)
    jax.block_until_ready((w2d, gamma2d, beta2d))

    out = sigmoid_mul_conv_bn(x520, x516, w2d, gamma2d, beta2d)
    jax.block_until_ready(out)
    assert out.shape == (N, C_out, H, W), out.shape
    assert bool(jnp.all(jnp.isfinite(out)))
    print("KERNEL_OK")
</pallas_src>

<mosaic_0001>
module attributes {stable_mosaic.version = 11 : i64} {
  func.func @_fused_kernel(%arg0: i32, %arg1: memref<1x1824xf32, #tpu.memory_space<vmem>>, %arg2: memref<1824x49xf32, #tpu.memory_space<vmem>>, %arg3: memref<304x1824xbf16, #tpu.memory_space<vmem>>, %arg4: memref<304x1xf32, #tpu.memory_space<vmem>>, %arg5: memref<304x1xf32, #tpu.memory_space<vmem>>, %arg6: memref<304x49xf32, #tpu.memory_space<vmem>>) attributes {dimension_semantics = [#tpu.dimension_semantics<arbitrary>], iteration_bounds = array<i64: 1>, scalar_prefetch = 0 : i64, scratch_operands = 0 : i64, tpu.core_type = #tpu.core_type<tc>, window_params = [{pipeline_mode = #tpu.pipeline_mode<synchronous>, transform_indices = @transform_0, window_bounds = array<i64: 1, 1824>}, {pipeline_mode = #tpu.pipeline_mode<synchronous>, transform_indices = @transform_1, window_bounds = array<i64: 1824, 49>}, {transform_indices = @transform_2, window_bounds = array<i64: 304, 1824>}, {transform_indices = @transform_3, window_bounds = array<i64: 304, 1>}, {transform_indices = @transform_4, window_bounds = array<i64: 304, 1>}, {transform_indices = @transform_5, window_bounds = array<i64: 304, 49>}]} {
    %c0 = arith.constant 0 : index
    %c0_0 = arith.constant 0 : index
    %0 = vector.load %arg1[%c0, %c0_0] : memref<1x1824xf32, #tpu.memory_space<vmem>>, vector<1x1824xf32>
    %1 = arith.negf %0 : vector<1x1824xf32>
    %2 = math.exp %1 : vector<1x1824xf32>
    %cst = arith.constant 1.000000e+00 : f32
    %3 = vector.broadcast %cst : f32 to vector<1x1824xf32>
    %4 = arith.addf %3, %2 : vector<1x1824xf32>
    %5 = arith.divf %3, %4 : vector<1x1824xf32>
    %6 = arith.truncf %5 : vector<1x1824xf32> to vector<1x1824xbf16>
    %c0_1 = arith.constant 0 : index
    %c0_2 = arith.constant 0 : index
    %7 = vector.load %arg3[%c0_1, %c0_2] : memref<304x1824xbf16, #tpu.memory_space<vmem>>, vector<304x1824xbf16>
    %8 = vector.broadcast %6 : vector<1x1824xbf16> to vector<304x1824xbf16>
    %9 = arith.mulf %7, %8 : vector<304x1824xbf16>
    %c0_3 = arith.constant 0 : index
    %c0_4 = arith.constant 0 : index
    %10 = vector.load %arg2[%c0_3, %c0_4] : memref<1824x49xf32, #tpu.memory_space<vmem>>, vector<1824x49xf32>
    %11 = arith.truncf %10 : vector<1824x49xf32> to vector<1824x49xbf16>
    %cst_5 = arith.constant dense<0.000000e+00> : vector<304x49xf32>
    %12 = tpu.matmul %9, %11, %cst_5 {dimension_numbers = #tpu.dot_dimension_numbers<[1], [0], [0], [1], [0, 0, 1, 1], [], []>} : vector<304x1824xbf16>, vector<1824x49xbf16>, vector<304x49xf32> -> vector<304x49xf32>
    %cst_6 = arith.constant dense<0.000000e+00> : vector<304xf32>
    %13 = vector.multi_reduction <add>, %12, %cst_6 [1] : vector<304x49xf32> to vector<304xf32>
    %14 = vector.shape_cast %13 : vector<304xf32> to vector<304x1xf32>
    %cst_7 = arith.constant 0.0204081628 : f32
    %15 = vector.broadcast %cst_7 : f32 to vector<304x1xf32>
    %16 = arith.mulf %14, %15 : vector<304x1xf32>
    %17 = arith.mulf %12, %12 : vector<304x49xf32>
    %cst_8 = arith.constant dense<0.000000e+00> : vector<304xf32>
    %18 = vector.multi_reduction <add>, %17, %cst_8 [1] : vector<304x49xf32> to vector<304xf32>
    %19 = vector.shape_cast %18 : vector<304xf32> to vector<304x1xf32>
    %cst_9 = arith.constant 0.0204081628 : f32
    %20 = vector.broadcast %cst_9 : f32 to vector<304x1xf32>
    %21 = arith.mulf %19, %20 : vector<304x1xf32>
    %22 = arith.mulf %16, %16 : vector<304x1xf32>
    %23 = arith.subf %21, %22 : vector<304x1xf32>
    %cst_10 = arith.constant 0.000000e+00 : f32
    %24 = vector.broadcast %cst_10 : f32 to vector<304x1xf32>
    %25 = arith.maximumf %23, %24 : vector<304x1xf32>
    %cst_11 = arith.constant 1.000000e-03 : f32
    %26 = vector.broadcast %cst_11 : f32 to vector<304x1xf32>
    %27 = arith.addf %25, %26 : vector<304x1xf32>
    %28 = math.rsqrt %27 : vector<304x1xf32>
    %c0_12 = arith.constant 0 : index
    %c0_13 = arith.constant 0 : index
    %29 = vector.load %arg4[%c0_12, %c0_13] : memref<304x1xf32, #tpu.memory_space<vmem>>, vector<304x1xf32>
    %30 = arith.mulf %28, %29 : vector<304x1xf32>
    %31 = vector.broadcast %16 : vector<304x1xf32> to vector<304x49xf32>
    %32 = arith.subf %12, %31 : vector<304x49xf32>
    %33 = vector.broadcast %30 : vector<304x1xf32> to vector<304x49xf32>
    %34 = arith.mulf %32, %33 : vector<304x49xf32>
    %c0_14 = arith.constant 0 : index
    %c0_15 = arith.constant 0 : index
    %35 = vector.load %arg5[%c0_14, %c0_15] : memref<304x1xf32, #tpu.memory_space<vmem>>, vector<304x1xf32>
    %36 = vector.broadcast %35 : vector<304x1xf32> to vector<304x49xf32>
    %37 = arith.addf %34, %36 : vector<304x49xf32>
    %c0_16 = arith.constant 0 : index
    %c0_17 = arith.constant 0 : index
    %38 = vector.load %arg6[%c0_16, %c0_17] : memref<304x49xf32, #tpu.memory_space<vmem>>, vector<304x49xf32>
    tpu.vector_store %arg6[%c0_16, %c0_17], %37 {strides = array<i32>} : memref<304x49xf32, #tpu.memory_space<vmem>>, vector<304x49xf32>,
    return
  }
  func.func @transform_0(%arg0: i32) -> (i32, i32) {
    %c0_i32 = arith.constant 0 : i32
    %c0_i32_0 = arith.constant 0 : i32
    %c0_i32_1 = arith.constant 0 : i32
    return %c0_i32, %c0_i32_0 : i32, i32
  }
  func.func @transform_1(%arg0: i32) -> (i32, i32) {
    %c0_i32 = arith.constant 0 : i32
    %c0_i32_0 = arith.constant 0 : i32
    %c0_i32_1 = arith.constant 0 : i32
    return %c0_i32, %c0_i32_0 : i32, i32
  }
  func.func @transform_2(%arg0: i32) -> (i32, i32) {
    %c0_i32 = arith.constant 0 : i32
    %c0_i32_0 = arith.constant 0 : i32
    return %arg0, %c0_i32 : i32, i32
  }
  func.func @transform_3(%arg0: i32) -> (i32, i32) {
    %c0_i32 = arith.constant 0 : i32
    %c0_i32_0 = arith.constant 0 : i32
    return %arg0, %c0_i32 : i32, i32
  }
  func.func @transform_4(%arg0: i32) -> (i32, i32) {
    %c0_i32 = arith.constant 0 : i32
    %c0_i32_0 = arith.constant 0 : i32
    return %arg0, %c0_i32 : i32, i32
  }
  func.func @transform_5(%arg0: i32) -> (i32, i32) {
    %c0_i32 = arith.constant 0 : i32
    %c0_i32_0 = arith.constant 0 : i32
    return %arg0, %c0_i32 : i32, i32
  }
}

</mosaic_0001>

<llo_original>
// kernel: tpu_custom_call.1
$region0: #{tpu_custom_call.1}
  #allocation0 [shape = 'u32[]', space=smem, size = 0x4, offset = 0x4, fixed_abs, tag = 'smem constant byte address 0x4 - core index']
  #allocation1 [shape = 'u32[144,128]{1,0:T(1,128)}', space=vmem, size = 0x12000, scoped, tag = 'internal scratch']
  %s0 = inlined_call_operand.vmem [shape: f32[1,1824], index: 0, kind: input, shape index: {}]
  %s1 = inlined_call_operand.vmem [shape: f32[1824,49], index: 1, kind: input, shape index: {}]
  %s2 = inlined_call_operand.vmem [shape: bf16[304,1824], index: 2, kind: input, shape index: {}]
  %s3 = inlined_call_operand.vmem [shape: f32[304,1], index: 3, kind: input, shape index: {}]
  %s4 = inlined_call_operand.vmem [shape: f32[304,1], index: 4, kind: input, shape index: {}]
  %s5 = inlined_call_operand.vmem [shape: f32[304,49], index: 5, kind: output, shape index: {}]
  %s6 = sld [smem:[#allocation0]]
  $region30: #{tpu_custom_call.1} parent=0
    _
  %s8 = ssub.s32 1, %s6
  %s9 = scalar_select 0, %s8, %s6
  // Predicated region
  $region2: #{tpu_custom_call.1} parent=0 // pred_check
    _
  $region3: #{tpu_custom_call.1} parent=0 // pred_check_branch
    %11 = sbr.rel (0) target = $region5
  $region4: #{tpu_custom_call.1} parent=0 // pred_region
    _
  $region5: #{tpu_custom_call.1} parent=0 // pred_fallthru
    _
  // Predicated region
  $region6: #{tpu_custom_call.1} parent=0 // pred_check
    _
  $region7: #{tpu_custom_call.1} parent=0 // pred_check_branch
    %13 = sbr.rel (0) target = $region9
  $region8: #{tpu_custom_call.1} parent=0 // pred_region
    _
  $region9: #{tpu_custom_call.1} parent=0 // pred_fallthru
    _
  // Predicated region
  $region10: #{tpu_custom_call.1} parent=0 // pred_check
    _
  $region11: #{tpu_custom_call.1} parent=0 // pred_check_branch
    %15 = sbr.rel (0) target = $region13
  $region12: #{tpu_custom_call.1} parent=0 // pred_region
    _
  $region13: #{tpu_custom_call.1} parent=0 // pred_fallthru
    _
  // Predicated region
  $region14: #{tpu_custom_call.1} parent=0 // pred_check
    _
  $region15: #{tpu_custom_call.1} parent=0 // pred_check_branch
    %17 = sbr.rel (0) target = $region17
  $region16: #{tpu_custom_call.1} parent=0 // pred_region
    _
  $region17: #{tpu_custom_call.1} parent=0 // pred_fallthru
    _
  // Predicated region
  $region18: #{tpu_custom_call.1} parent=0 // pred_check
    _
  $region19: #{tpu_custom_call.1} parent=0 // pred_check_branch
    %19 = sbr.rel (0) target = $region21
  $region20: #{tpu_custom_call.1} parent=0 // pred_region
    _
  $region21: #{tpu_custom_call.1} parent=0 // pred_fallthru
    _
  %v21 = vld [vmem:[%s0] sm:$0xff]
  %v22 = vld [vmem:[%s0 + $0x8] sm:$0x7f]
  %v23 = vxor.u32 %v21, 2147483648
  %v24 = vxor.u32 %v22, 2147483648
  %v25 = vmul.f32 %v23, 1.442695
  %v26 = vpow.pop %v25
  %v27 = vmul.f32 %v24, 1.442695
  %v28 = vpow.pop %v27
  %v29 = vadd.f32 %v26, 1.0
  %v30 = vadd.f32 %v28, 1.0
  %v31 = vrcp.pop %v29
  %v32 = vmul.f32 1.0, %v31
  %v33 = vrcp.pop %v30
  %v34 = vmul.f32 1.0, %v33
  %v37 = vlaneseq
  %v38 = vshrl.u32 %v37, 7
  %v39 = vsub.s32 0, %v38
  %v40 = vrot.slane %v32, %v39
  %v41 = vlaneseq
  %v42 = vshrl.u32 %v41, 7
  %v43 = vsub.s32 1, %v42
  %v44 = vrot.slane %v32, %v43
  %v45 = vlaneseq
  %v46 = vshrl.u32 %v45, 7
  %v47 = vsub.s32 2, %v46
  %v48 = vrot.slane %v32, %v47
  %v49 = vlaneseq
  %v50 = vshrl.u32 %v49, 7
  %v51 = vsub.s32 3, %v50
  %v52 = vrot.slane %v32, %v51
  %v53 = vlaneseq
  %v54 = vshrl.u32 %v53, 7
  %v55 = vsub.s32 4, %v54
  %v56 = vrot.slane %v32, %v55
  %v57 = vlaneseq
  %v58 = vshrl.u32 %v57, 7
  %v59 = vsub.s32 5, %v58
  %v60 = vrot.slane %v32, %v59
  %v61 = vlaneseq
  %v62 = vshrl.u32 %v61, 7
  %v63 = vsub.s32 6, %v62
  %v64 = vrot.slane %v32, %v63
  %v65 = vlaneseq
  %v66 = vshrl.u32 %v65, 7
  %v67 = vsub.s32 7, %v66
  %v68 = vrot.slane %v32, %v67
  %v69 = vlaneseq
  %v70 = vshrl.u32 %v69, 7
  %v71 = vsub.s32 0, %v70
  %v72 = vrot.slane %v34, %v71
  %v73 = vlaneseq
  %v74 = vshrl.u32 %v73, 7
  %v75 = vsub.s32 1, %v74
  %v76 = vrot.slane %v34, %v75
  %v77 = vlaneseq
  %v78 = vshrl.u32 %v77, 7
  %v79 = vsub.s32 2, %v78
  %v80 = vrot.slane %v34, %v79
  %v81 = vlaneseq
  %v82 = vshrl.u32 %v81, 7
  %v83 = vsub.s32 3, %v82
  %v84 = vrot.slane %v34, %v83
  %v85 = vlaneseq
  %v86 = vshrl.u32 %v85, 7
  %v87 = vsub.s32 4, %v86
  %v88 = vrot.slane %v34, %v87
  %v89 = vlaneseq
  %v90 = vshrl.u32 %v89, 7
  %v91 = vsub.s32 5, %v90
  %v92 = vrot.slane %v34, %v91
  %v93 = vlaneseq
  %v94 = vshrl.u32 %v93, 7
  %v95 = vsub.s32 6, %v94
  %v96 = vrot.slane %v34, %v95
  %v112 = vpack.c.bf16 %v40, %v40
  %v113 = vpack.c.bf16 %v44, %v44
  %v114 = vpack.c.bf16 %v48, %v48
  %v115 = vpack.c.bf16 %v52, %v52
  %v116 = vpack.c.bf16 %v56, %v56
  %v117 = vpack.c.bf16 %v60, %v60
  %v118 = vpack.c.bf16 %v64, %v64
  %v119 = vpack.c.bf16 %v68, %v68
  %v120 = vpack.c.bf16 %v72, %v72
  %v121 = vpack.c.bf16 %v76, %v76
  %v122 = vpack.c.bf16 %v80, %v80
  %v123 = vpack.c.bf16 %v84, %v84
  %v124 = vpack.c.bf16 %v88, %v88
  %v125 = vpack.c.bf16 %v92, %v92
  %v126 = vpack.c.bf16 %v96, %v96
  %v127 = vld [vmem:[%s2] sm:$0xff]
  %v128 = vld [vmem:[%s2 + $0x8] sm:$0xff]
  %v129 = vld [vmem:[%s2 + $0x10] sm:$0xff]
  %v130 = vld [vmem:[%s2 + $0x18] sm:$0xff]
  %v131 = vld [vmem:[%s2 + $0x20] sm:$0xff]
  %v132 = vld [vmem:[%s2 + $0x28] sm:$0xff]
  %v133 = vld [vmem:[%s2 + $0x30] sm:$0xff]
  %v134 = vld [vmem:[%s2 + $0x38] sm:$0xf]
  %v135 = vld [vmem:[%s2 + $0x3c] sm:$0xff]
  %v136 = vld [vmem:[%s2 + $0x44] sm:$0xff]
  %v137 = vld [vmem:[%s2 + $0x4c] sm:$0xff]
  %v138 = vld [vmem:[%s2 + $0x54] sm:$0xff]
  %v139 = vld [vmem:[%s2 + $0x5c] sm:$0xff]
  %v140 = vld [vmem:[%s2 + $0x64] sm:$0xff]
  %v141 = vld [vmem:[%s2 + $0x6c] sm:$0xff]
  %v142 = vld [vmem:[%s2 + $0x74] sm:$0xf]
  %v143 = vld [vmem:[%s2 + $0x78] sm:$0xff]
  %v144 = vld [vmem:[%s2 + $0x80] sm:$0xff]
  %v145 = vld [vmem:[%s2 + $0x88] sm:$0xff]
  %v146 = vld [vmem:[%s2 + $0x90] sm:$0xff]
  %v147 = vld [vmem:[%s2 + $0x98] sm:$0xff]
  %v148 = vld [vmem:[%s2 + $0xa0] sm:$0xff]
  %v149 = vld [vmem:[%s2 + $0xa8] sm:$0xff]
  %v150 = vld [vmem:[%s2 + $0xb0] sm:$0xf]
  %v151 = vld [vmem:[%s2 + $0xb4] sm:$0xff]
  %v152 = vld [vmem:[%s2 + $0xbc] sm:$0xff]
  %v153 = vld [vmem:[%s2 + $0xc4] sm:$0xff]
  %v154 = vld [vmem:[%s2 + $0xcc] sm:$0xff]
  %v155 = vld [vmem:[%s2 + $0xd4] sm:$0xff]
  %v156 = vld [vmem:[%s2 + $0xdc] sm:$0xff]
  %v157 = vld [vmem:[%s2 + $0xe4] sm:$0xff]
  %v158 = vld [vmem:[%s2 + $0xec] sm:$0xf]
  %v159 = vld [vmem:[%s2 + $0xf0] sm:$0xff]
  %v160 = vld [vmem:[%s2 + $0xf8] sm:$0xff]
  %v161 = vld [vmem:[%s2 + $0x100] sm:$0xff]
  %v162 = vld [vmem:[%s2 + $0x108] sm:$0xff]
  %v163 = vld [vmem:[%s2 + $0x110] sm:$0xff]
  %v164 = vld [vmem:[%s2 + $0x118] sm:$0xff]
  %v165 = vld [vmem:[%s2 + $0x120] sm:$0xff]
  %v166 = vld [vmem:[%s2 + $0x128] sm:$0xf]
  %v167 = vld [vmem:[%s2 + $0x12c] sm:$0xff]
  %v168 = vld [vmem:[%s2 + $0x134] sm:$0xff]
  %v169 = vld [vmem:[%s2 + $0x13c] sm:$0xff]
  %v170 = vld [vmem:[%s2 + $0x144] sm:$0xff]
  %v171 = vld [vmem:[%s2 + $0x14c] sm:$0xff]
  %v172 = vld [vmem:[%s2 + $0x154] sm:$0xff]
  %v173 = vld [vmem:[%s2 + $0x15c] sm:$0xff]
  %v174 = vld [vmem:[%s2 + $0x164] sm:$0xf]
  %v175 = vld [vmem:[%s2 + $0x168] sm:$0xff]
  %v176 = vld [vmem:[%s2 + $0x170] sm:$0xff]
  %v177 = vld [vmem:[%s2 + $0x178] sm:$0xff]
  %v178 = vld [vmem:[%s2 + $0x180] sm:$0xff]
  %v179 = vld [vmem:[%s2 + $0x188] sm:$0xff]
  %v180 = vld [vmem:[%s2 + $0x190] sm:$0xff]
  %v181 = vld [vmem:[%s2 + $0x198] sm:$0xff]
  %v182 = vld [vmem:[%s2 + $0x1a0] sm:$0xf]
  %v183 = vld [vmem:[%s2 + $0x1a4] sm:$0xff]
  %v184 = vld [vmem:[%s2 + $0x1ac] sm:$0xff]
  %v185 = vld [vmem:[%s2 + $0x1b4] sm:$0xff]
  %v186 = vld [vmem:[%s2 + $0x1bc] sm:$0xff]
  %v187 = vld [vmem:[%s2 + $0x1c4] sm:$0xff]
  %v188 = vld [vmem:[%s2 + $0x1cc] sm:$0xff]
  %v189 = vld [vmem:[%s2 + $0x1d4] sm:$0xff]
  %v190 = vld [vmem:[%s2 + $0x1dc] sm:$0xf]
  %v191 = vld [vmem:[%s2 + $0x1e0] sm:$0xff]
  %v192 = vld [vmem:[%s2 + $0x1e8] sm:$0xff]
  %v193 = vld [vmem:[%s2 + $0x1f0] sm:$0xff]
  %v194 = vld [vmem:[%s2 + $0x1f8] sm:$0xff]
  %v195 = vld [vmem:[%s2 + $0x200] sm:$0xff]
  %v196 = vld [vmem:[%s2 + $0x208] sm:$0xff]
  %v197 = vld [vmem:[%s2 + $0x210] sm:$0xff]
  %v198 = vld [vmem:[%s2 + $0x218] sm:$0xf]
  %v199 = vld [vmem:[%s2 + $0x21c] sm:$0xff]
  %v200 = vld [vmem:[%s2 + $0x224] sm:$0xff]
  %v201 = vld [vmem:[%s2 + $0x22c] sm:$0xff]
  %v202 = vld [vmem:[%s2 + $0x234] sm:$0xff]
  %v203 = vld [vmem:[%s2 + $0x23c] sm:$0xff]
  %v204 = vld [vmem:[%s2 + $0x244] sm:$0xff]
  %v205 = vld [vmem:[%s2 + $0x24c] sm:$0xff]
  %v206 = vld [vmem:[%s2 + $0x254] sm:$0xf]
  %v207 = vld [vmem:[%s2 + $0x258] sm:$0xff]
  %v208 = vld [vmem:[%s2 + $0x260] sm:$0xff]
  %v209 = vld [vmem:[%s2 + $0x268] sm:$0xff]
  %v210 = vld [vmem:[%s2 + $0x270] sm:$0xff]
  %v211 = vld [vmem:[%s2 + $0x278] sm:$0xff]
  %v212 = vld [vmem:[%s2 + $0x280] sm:$0xff]
  %v213 = vld [vmem:[%s2 + $0x288] sm:$0xff]
  %v214 = vld [vmem:[%s2 + $0x290] sm:$0xf]
  %v215 = vld [vmem:[%s2 + $0x294] sm:$0xff]
  %v216 = vld [vmem:[%s2 + $0x29c] sm:$0xff]
  %v217 = vld [vmem:[%s2 + $0x2a4] sm:$0xff]
  %v218 = vld [vmem:[%s2 + $0x2ac] sm:$0xff]
  %v219 = vld [vmem:[%s2 + $0x2b4] sm:$0xff]
  %v220 = vld [vmem:[%s2 + $0x2bc] sm:$0xff]
  %v221 = vld [vmem:[%s2 + $0x2c4] sm:$0xff]
  %v222 = vld [vmem:[%s2 + $0x2cc] sm:$0xf]
  %v223 = vld [vmem:[%s2 + $0x2d0] sm:$0xff]
  %v224 = vld [vmem:[%s2 + $0x2d8] sm:$0xff]
  %v225 = vld [vmem:[%s2 + $0x2e0] sm:$0xff]
  %v226 = vld [vmem:[%s2 + $0x2e8] sm:$0xff]
  %v227 = vld [vmem:[%s2 + $0x2f0] sm:$0xff]
  %v228 = vld [vmem:[%s2 + $0x2f8] sm:$0xff]
  %v229 = vld [vmem:[%s2 + $0x300] sm:$0xff]
  %v230 = vld [vmem:[%s2 + $0x308] sm:$0xf]
  %v231 = vld [vmem:[%s2 + $0x30c] sm:$0xff]
  %v232 = vld [vmem:[%s2 + $0x314] sm:$0xff]
  %v233 = vld [vmem:[%s2 + $0x31c] sm:$0xff]
  %v234 = vld [vmem:[%s2 + $0x324] sm:$0xff]
  %v235 = vld [vmem:[%s2 + $0x32c] sm:$0xff]
  %v236 = vld [vmem:[%s2 + $0x334] sm:$0xff]
  %v237 = vld [vmem:[%s2 + $0x33c] sm:$0xff]
  %v238 = vld [vmem:[%s2 + $0x344] sm:$0xf]
  %v239 = vld [vmem:[%s2 + $0x348] sm:$0xff]
  %v240 = vld [vmem:[%s2 + $0x350] sm:$0xff]
  %v241 = vld [vmem:[%s2 + $0x358] sm:$0xff]
  %v242 = vld [vmem:[%s2 + $0x360] sm:$0xff]
  %v243 = vld [vmem:[%s2 + $0x368] sm:$0xff]
  %v244 = vld [vmem:[%s2 + $0x370] sm:$0xff]
  %v245 = vld [vmem:[%s2 + $0x378] sm:$0xff]
  %v246 = vld [vmem:[%s2 + $0x380] sm:$0xf]
  %v247 = vld [vmem:[%s2 + $0x384] sm:$0xff]
  %v248 = vld [vmem:[%s2 + $0x38c] sm:$0xff]
  %v249 = vld [vmem:[%s2 + $0x394] sm:$0xff]
  %v250 = vld [vmem:[%s2 + $0x39c] sm:$0xff]
  %v251 = vld [vmem:[%s2 + $0x3a4] sm:$0xff]
  %v252 = vld [vmem:[%s2 + $0x3ac] sm:$0xff]
  %v253 = vld [vmem:[%s2 + $0x3b4] sm:$0xff]
  %v254 = vld [vmem:[%s2 + $0x3bc] sm:$0xf]
  %v255 = vld [vmem:[%s2 + $0x3c0] sm:$0xff]
  %v256 = vld [vmem:[%s2 + $0x3c8] sm:$0xff]
  %v257 = vld [vmem:[%s2 + $0x3d0] sm:$0xff]
  %v258 = vld [vmem:[%s2 + $0x3d8] sm:$0xff]
  %v259 = vld [vmem:[%s2 + $0x3e0] sm:$0xff]
  %v260 = vld [vmem:[%s2 + $0x3e8] sm:$0xff]
  %v261 = vld [vmem:[%s2 + $0x3f0] sm:$0xff]
  %v262 = vld [vmem:[%s2 + $0x3f8] sm:$0xf]
  %v263 = vld [vmem:[%s2 + $0x3fc] sm:$0xff]
  %v264 = vld [vmem:[%s2 + $0x404] sm:$0xff]
  %v265 = vld [vmem:[%s2 + $0x40c] sm:$0xff]
  %v266 = vld [vmem:[%s2 + $0x414] sm:$0xff]
  %v267 = vld [vmem:[%s2 + $0x41c] sm:$0xff]
  %v268 = vld [vmem:[%s2 + $0x424] sm:$0xff]
  %v269 = vld [vmem:[%s2 + $0x42c] sm:$0xff]
  %v270 = vld [vmem:[%s2 + $0x434] sm:$0xf]
  %v271 = vld [vmem:[%s2 + $0x438] sm:$0xff]
  %v272 = vld [vmem:[%s2 + $0x440] sm:$0xff]
  %v273 = vld [vmem:[%s2 + $0x448] sm:$0xff]
  %v274 = vld [vmem:[%s2 + $0x450] sm:$0xff]
  %v275 = vld [vmem:[%s2 + $0x458] sm:$0xff]
  %v276 = vld [vmem:[%s2 + $0x460] sm:$0xff]
  %v277 = vld [vmem:[%s2 + $0x468] sm:$0xff]
  %v278 = vld [vmem:[%s2 + $0x470] sm:$0xf]
  %v279 = vld [vmem:[%s2 + $0x474] sm:$0xff]
  %v280 = vld [vmem:[%s2 + $0x47c] sm:$0xff]
  %v281 = vld [vmem:[%s2 + $0x484] sm:$0xff]
  %v282 = vld [vmem:[%s2 + $0x48c] sm:$0xff]
  %v283 = vld [vmem:[%s2 + $0x494] sm:$0xff]
  %v284 = vld [vmem:[%s2 + $0x49c] sm:$0xff]
  %v285 = vld [vmem:[%s2 + $0x4a4] sm:$0xff]
  %v286 = vld [vmem:[%s2 + $0x4ac] sm:$0xf]
  %v287 = vld [vmem:[%s2 + $0x4b0] sm:$0xff]
  %v288 = vld [vmem:[%s2 + $0x4b8] sm:$0xff]
  %v289 = vld [vmem:[%s2 + $0x4c0] sm:$0xff]
  %v290 = vld [vmem:[%s2 + $0x4c8] sm:$0xff]
  %v291 = vld [vmem:[%s2 + $0x4d0] sm:$0xff]
  %v292 = vld [vmem:[%s2 + $0x4d8] sm:$0xff]
  %v293 = vld [vmem:[%s2 + $0x4e0] sm:$0xff]
  %v294 = vld [vmem:[%s2 + $0x4e8] sm:$0xf]
  %v295 = vld [vmem:[%s2 + $0x4ec] sm:$0xff]
  %v296 = vld [vmem:[%s2 + $0x4f4] sm:$0xff]
  %v297 = vld [vmem:[%s2 + $0x4fc] sm:$0xff]
  %v298 = vld [vmem:[%s2 + $0x504] sm:$0xff]
  %v299 = vld [vmem:[%s2 + $0x50c] sm:$0xff]
  %v300 = vld [vmem:[%s2 + $0x514] sm:$0xff]
  %v301 = vld [vmem:[%s2 + $0x51c] sm:$0xff]
  %v302 = vld [vmem:[%s2 + $0x524] sm:$0xf]
  %v303 = vld [vmem:[%s2 + $0x528] sm:$0xff]
  %v304 = vld [vmem:[%s2 + $0x530] sm:$0xff]
  %v305 = vld [vmem:[%s2 + $0x538] sm:$0xff]
  %v306 = vld [vmem:[%s2 + $0x540] sm:$0xff]
  %v307 = vld [vmem:[%s2 + $0x548] sm:$0xff]
  %v308 = vld [vmem:[%s2 + $0x550] sm:$0xff]
  %v309 = vld [vmem:[%s2 + $0x558] sm:$0xff]
  %v310 = vld [vmem:[%s2 + $0x560] sm:$0xf]
  %v311 = vld [vmem:[%s2 + $0x564] sm:$0xff]
  %v312 = vld [vmem:[%s2 + $0x56c] sm:$0xff]
  %v313 = vld [vmem:[%s2 + $0x574] sm:$0xff]
  %v314 = vld [vmem:[%s2 + $0x57c] sm:$0xff]
  %v315 = vld [vmem:[%s2 + $0x584] sm:$0xff]
  %v316 = vld [vmem:[%s2 + $0x58c] sm:$0xff]
  %v317 = vld [vmem:[%s2 + $0x594] sm:$0xff]
  %v318 = vld [vmem:[%s2 + $0x59c] sm:$0xf]
  %v319 = vld [vmem:[%s2 + $0x5a0] sm:$0xff]
  %v320 = vld [vmem:[%s2 + $0x5a8] sm:$0xff]
  %v321 = vld [vmem:[%s2 + $0x5b0] sm:$0xff]
  %v322 = vld [vmem:[%s2 + $0x5b8] sm:$0xff]
  %v323 = vld [vmem:[%s2 + $0x5c0] sm:$0xff]
  %v324 = vld [vmem:[%s2 + $0x5c8] sm:$0xff]
  %v325 = vld [vmem:[%s2 + $0x5d0] sm:$0xff]
  %v326 = vld [vmem:[%s2 + $0x5d8] sm:$0xf]
  %v327 = vld [vmem:[%s2 + $0x5dc] sm:$0xff]
  %v328 = vld [vmem:[%s2 + $0x5e4] sm:$0xff]
  %v329 = vld [vmem:[%s2 + $0x5ec] sm:$0xff]
  %v330 = vld [vmem:[%s2 + $0x5f4] sm:$0xff]
  %v331 = vld [vmem:[%s2 + $0x5fc] sm:$0xff]
  %v332 = vld [vmem:[%s2 + $0x604] sm:$0xff]
  %v333 = vld [vmem:[%s2 + $0x60c] sm:$0xff]
  %v334 = vld [vmem:[%s2 + $0x614] sm:$0xf]
  %v335 = vld [vmem:[%s2 + $0x618] sm:$0xff]
  %v336 = vld [vmem:[%s2 + $0x620] sm:$0xff]
  %v337 = vld [vmem:[%s2 + $0x628] sm:$0xff]
  %v338 = vld [vmem:[%s2 + $0x630] sm:$0xff]
  %v339 = vld [vmem:[%s2 + $0x638] sm:$0xff]
  %v340 = vld [vmem:[%s2 + $0x640] sm:$0xff]
  %v341 = vld [vmem:[%s2 + $0x648] sm:$0xff]
  %v342 = vld [vmem:[%s2 + $0x650] sm:$0xf]
  %v343 = vld [vmem:[%s2 + $0x654] sm:$0xff]
  %v344 = vld [vmem:[%s2 + $0x65c] sm:$0xff]
  %v345 = vld [vmem:[%s2 + $0x664] sm:$0xff]
  %v346 = vld [vmem:[%s2 + $0x66c] sm:$0xff]
  %v347 = vld [vmem:[%s2 + $0x674] sm:$0xff]
  %v348 = vld [vmem:[%s2 + $0x67c] sm:$0xff]
  %v349 = vld [vmem:[%s2 + $0x684] sm:$0xff]
  %v350 = vld [vmem:[%s2 + $0x68c] sm:$0xf]
  %v351 = vld [vmem:[%s2 + $0x690] sm:$0xff]
  %v352 = vld [vmem:[%s2 + $0x698] sm:$0xff]
  %v353 = vld [vmem:[%s2 + $0x6a0] sm:$0xff]
  %v354 = vld [vmem:[%s2 + $0x6a8] sm:$0xff]
  %v355 = vld [vmem:[%s2 + $0x6b0] sm:$0xff]
  %v356 = vld [vmem:[%s2 + $0x6b8] sm:$0xff]
  %v357 = vld [vmem:[%s2 + $0x6c0] sm:$0xff]
  %v358 = vld [vmem:[%s2 + $0x6c8] sm:$0xf]
  %v359 = vld [vmem:[%s2 + $0x6cc] sm:$0xff]
  %v360 = vld [vmem:[%s2 + $0x6d4] sm:$0xff]
  %v361 = vld [vmem:[%s2 + $0x6dc] sm:$0xff]
  %v362 = vld [vmem:[%s2 + $0x6e4] sm:$0xff]
  %v363 = vld [vmem:[%s2 + $0x6ec] sm:$0xff]
  %v364 = vld [vmem:[%s2 + $0x6f4] sm:$0xff]
  %v365 = vld [vmem:[%s2 + $0x6fc] sm:$0xff]
  %v366 = vld [vmem:[%s2 + $0x704] sm:$0xf]
  %v367 = vld [vmem:[%s2 + $0x708] sm:$0xff]
  %v368 = vld [vmem:[%s2 + $0x710] sm:$0xff]
  %v369 = vld [vmem:[%s2 + $0x718] sm:$0xff]
  %v370 = vld [vmem:[%s2 + $0x720] sm:$0xff]
  %v371 = vld [vmem:[%s2 + $0x728] sm:$0xff]
  %v372 = vld [vmem:[%s2 + $0x730] sm:$0xff]
  %v373 = vld [vmem:[%s2 + $0x738] sm:$0xff]
  %v374 = vld [vmem:[%s2 + $0x740] sm:$0xf]
  %v375 = vld [vmem:[%s2 + $0x744] sm:$0xff]
  %v376 = vld [vmem:[%s2 + $0x74c] sm:$0xff]
  %v377 = vld [vmem:[%s2 + $0x754] sm:$0xff]
  %v378 = vld [vmem:[%s2 + $0x75c] sm:$0xff]
  %v379 = vld [vmem:[%s2 + $0x764] sm:$0xff]
  %v380 = vld [vmem:[%s2 + $0x76c] sm:$0xff]
  %v381 = vld [vmem:[%s2 + $0x774] sm:$0xff]
  %v382 = vld [vmem:[%s2 + $0x77c] sm:$0xf]
  %v383 = vld [vmem:[%s2 + $0x780] sm:$0xff]
  %v384 = vld [vmem:[%s2 + $0x788] sm:$0xff]
  %v385 = vld [vmem:[%s2 + $0x790] sm:$0xff]
  %v386 = vld [vmem:[%s2 + $0x798] sm:$0xff]
  %v387 = vld [vmem:[%s2 + $0x7a0] sm:$0xff]
  %v388 = vld [vmem:[%s2 + $0x7a8] sm:$0xff]
  %v389 = vld [vmem:[%s2 + $0x7b0] sm:$0xff]
  %v390 = vld [vmem:[%s2 + $0x7b8] sm:$0xf]
  %v391 = vld [vmem:[%s2 + $0x7bc] sm:$0xff]
  %v392 = vld [vmem:[%s2 + $0x7c4] sm:$0xff]
  %v393 = vld [vmem:[%s2 + $0x7cc] sm:$0xff]
  %v394 = vld [vmem:[%s2 + $0x7d4] sm:$0xff]
  %v395 = vld [vmem:[%s2 + $0x7dc] sm:$0xff]
  %v396 = vld [vmem:[%s2 + $0x7e4] sm:$0xff]
  %v397 = vld [vmem:[%s2 + $0x7ec] sm:$0xff]
  %v398 = vld [vmem:[%s2 + $0x7f4] sm:$0xf]
  %v399 = vld [vmem:[%s2 + $0x7f8] sm:$0xff]
  %v400 = vld [vmem:[%s2 + $0x800] sm:$0xff]
  %v401 = vld [vmem:[%s2 + $0x808] sm:$0xff]
  %v402 = vld [vmem:[%s2 + $0x810] sm:$0xff]
  %v403 = vld [vmem:[%s2 + $0x818] sm:$0xff]
  %v404 = vld [vmem:[%s2 + $0x820] sm:$0xff]
  %v405 = vld [vmem:[%s2 + $0x828] sm:$0xff]
  %v406 = vld [vmem:[%s2 + $0x830] sm:$0xf]
  %v407 = vld [vmem:[%s2 + $0x834] sm:$0xff]
  %v408 = vld [vmem:[%s2 + $0x83c] sm:$0xff]
  %v409 = vld [vmem:[%s2 + $0x844] sm:$0xff]
  %v410 = vld [vmem:[%s2 + $0x84c] sm:$0xff]
  %v411 = vld [vmem:[%s2 + $0x854] sm:$0xff]
  %v412 = vld [vmem:[%s2 + $0x85c] sm:$0xff]
  %v413 = vld [vmem:[%s2 + $0x864] sm:$0xff]
  %v414 = vld [vmem:[%s2 + $0x86c] sm:$0xf]
  %v415 = vld [vmem:[%s2 + $0x870] sm:$0xff]
  %v416 = vld [vmem:[%s2 + $0x878] sm:$0xff]
  %v417 = vld [vmem:[%s2 + $0x880] sm:$0xff]
  %v418 = vld [vmem:[%s2 + $0x888] sm:$0xff]
  %v419 = vld [vmem:[%s2 + $0x890] sm:$0xff]
  %v420 = vld [vmem:[%s2 + $0x898] sm:$0xff]
  %v421 = vld [vmem:[%s2 + $0x8a0] sm:$0xff]
  %v422 = vld [vmem:[%s2 + $0x8a8] sm:$0xf]
  %v423 = vld [vmem:[%s2 + $0x8ac] sm:$0xff]
  %v424 = vld [vmem:[%s2 + $0x8b4] sm:$0xff]
  %v425 = vld [vmem:[%s2 + $0x8bc] sm:$0xff]
  %v426 = vld [vmem:[%s2 + $0x8c4] sm:$0xff]
  %v427 = vld [vmem:[%s2 + $0x8cc] sm:$0xff]
  %v428 = vld [vmem:[%s2 + $0x8d4] sm:$0xff]
  %v429 = vld [vmem:[%s2 + $0x8dc] sm:$0xff]
  %v430 = vld [vmem:[%s2 + $0x8e4] sm:$0xf]
  %v432 = vpack.i.b16 %v112, %v112
  %v434 = vlaneseq
  %v435 = vshrl.u32 %v434, 7
  %v436 = vsub.s32 0, %v435
  %v437 = vrot.slane %v432, %v436
  %v439 = vpack.i.b16 %v113, %v113
  %v441 = vlaneseq
  %v442 = vshrl.u32 %v441, 7
  %v443 = vsub.s32 0, %v442
  %v444 = vrot.slane %v439, %v443
  %v446 = vpack.i.b16 %v114, %v114
  %v448 = vlaneseq
  %v449 = vshrl.u32 %v448, 7
  %v450 = vsub.s32 0, %v449
  %v451 = vrot.slane %v446, %v450
  %v453 = vpack.i.b16 %v115, %v115
  %v455 = vlaneseq
  %v456 = vshrl.u32 %v455, 7
  %v457 = vsub.s32 0, %v456
  %v458 = vrot.slane %v453, %v457
  %v460 = vpack.i.b16 %v116, %v116
  %v462 = vlaneseq
  %v463 = vshrl.u32 %v462, 7
  %v464 = vsub.s32 0, %v463
  %v465 = vrot.slane %v460, %v464
  %v467 = vpack.i.b16 %v117, %v117
  %v469 = vlaneseq
  %v470 = vshrl.u32 %v469, 7
  %v471 = vsub.s32 0, %v470
  %v472 = vrot.slane %v467, %v471
  %v474 = vpack.i.b16 %v118, %v118
  %v476 = vlaneseq
  %v477 = vshrl.u32 %v476, 7
  %v478 = vsub.s32 0, %v477
  %v479 = vrot.slane %v474, %v478
  %v481 = vpack.i.b16 %v119, %v119
  %v483 = vlaneseq
  %v484 = vshrl.u32 %v483, 7
  %v485 = vsub.s32 0, %v484
  %v486 = vrot.slane %v481, %v485
  %v488 = vpack.i.b16 %v120, %v120
  %v490 = vlaneseq
  %v491 = vshrl.u32 %v490, 7
  %v492 = vsub.s32 0, %v491
  %v493 = vrot.slane %v488, %v492
  %v495 = vpack.i.b16 %v121, %v121
  %v497 = vlaneseq
  %v498 = vshrl.u32 %v497, 7
  %v499 = vsub.s32 0, %v498
  %v500 = vrot.slane %v495, %v499
  %v502 = vpack.i.b16 %v122, %v122
  %v504 = vlaneseq
  %v505 = vshrl.u32 %v504, 7
  %v506 = vsub.s32 0, %v505
  %v507 = vrot.slane %v502, %v506
  %v509 = vpack.i.b16 %v123, %v123
  %v511 = vlaneseq
  %v512 = vshrl.u32 %v511, 7
  %v513 = vsub.s32 0, %v512
  %v514 = vrot.slane %v509, %v513
  %v516 = vpack.i.b16 %v124, %v124
  %v518 = vlaneseq
  %v519 = vshrl.u32 %v518, 7
  %v520 = vsub.s32 0, %v519
  %v521 = vrot.slane %v516, %v520
  %v523 = vpack.i.b16 %v125, %v125
  %v525 = vlaneseq
  %v526 = vshrl.u32 %v525, 7
  %v527 = vsub.s32 0, %v526
  %v528 = vrot.slane %v523, %v527
  %v530 = vpack.i.b16 %v126, %v126
  %v532 = vlaneseq
  %v533 = vshrl.u32 %v532, 7
  %v534 = vsub.s32 0, %v533
  %v535 = vrot.slane %v530, %v534
  %v551 = vunpack.c.l.b16 %v437
  %v552 = vunpack.c.l.b16 %v444
  %v553 = vunpack.c.l.b16 %v451
  %v554 = vunpack.c.l.b16 %v458
  %v555 = vunpack.c.l.b16 %v465
  %v556 = vunpack.c.l.b16 %v472
  %v557 = vunpack.c.l.b16 %v479
  %v558 = vunpack.c.l.b16 %v486
  %v559 = vunpack.c.l.b16 %v493
  %v560 = vunpack.c.l.b16 %v500
  %v561 = vunpack.c.l.b16 %v507
  %v562 = vunpack.c.l.b16 %v514
  %v563 = vunpack.c.l.b16 %v521
  %v564 = vunpack.c.l.b16 %v528
  %v565 = vunpack.c.l.b16 %v535
  %v566 = vpack.c.b16 %v552, %v551
  %v567 = vpack.c.b16 %v554, %v553
  %v568 = vpack.c.b16 %v556, %v555
  %v569 = vpack.c.b16 %v558, %v557
  %v570 = vpack.c.b16 %v560, %v559
  %v571 = vpack.c.b16 %v562, %v561
  %v572 = vpack.c.b16 %v564, %v563
  %v573 = vpack.c.b16 %v565, %v565
  %v582 = vmul.bf16 %v127, %v566
  %v583 = vmul.bf16 %v128, %v567
  %v584 = vmul.bf16 %v129, %v568
  %v585 = vmul.bf16 %v130, %v569
  %v586 = vmul.bf16 %v131, %v570
  %v587 = vmul.bf16 %v132, %v571
  %v588 = vmul.bf16 %v133, %v572
  %v589 = vmul.bf16 %v134, %v573
  %v590 = vmul.bf16 %v135, %v566
  %v591 = vmul.bf16 %v136, %v567
  %v592 = vmul.bf16 %v137, %v568
  %v593 = vmul.bf16 %v138, %v569
  %v594 = vmul.bf16 %v139, %v570
  %v595 = vmul.bf16 %v140, %v571
  %v596 = vmul.bf16 %v141, %v572
  %v597 = vmul.bf16 %v142, %v573
  %v598 = vmul.bf16 %v143, %v566
  %v599 = vmul.bf16 %v144, %v567
  %v600 = vmul.bf16 %v145, %v568
  %v601 = vmul.bf16 %v146, %v569
  %v602 = vmul.bf16 %v147, %v570
  %v603 = vmul.bf16 %v148, %v571
  %v604 = vmul.bf16 %v149, %v572
  %v605 = vmul.bf16 %v150, %v573
  %v606 = vmul.bf16 %v151, %v566
  %v607 = vmul.bf16 %v152, %v567
  %v608 = vmul.bf16 %v153, %v568
  %v609 = vmul.bf16 %v154, %v569
  %v610 = vmul.bf16 %v155, %v570
  %v611 = vmul.bf16 %v156, %v571
  %v612 = vmul.bf16 %v157, %v572
  %v613 = vmul.bf16 %v158, %v573
  %v614 = vmul.bf16 %v159, %v566
  %v615 = vmul.bf16 %v160, %v567
  %v616 = vmul.bf16 %v161, %v568
  %v617 = vmul.bf16 %v162, %v569
  %v618 = vmul.bf16 %v163, %v570
  %v619 = vmul.bf16 %v164, %v571
  %v620 = vmul.bf16 %v165, %v572
  %v621 = vmul.bf16 %v166, %v573
  %v622 = vmul.bf16 %v167, %v566
  %v623 = vmul.bf16 %v168, %v567
  %v624 = vmul.bf16 %v169, %v568
  %v625 = vmul.bf16 %v170, %v569
  %v626 = vmul.bf16 %v171, %v570
  %v627 = vmul.bf16 %v172, %v571
  %v628 = vmul.bf16 %v173, %v572
  %v629 = vmul.bf16 %v174, %v573
  %v630 = vmul.bf16 %v175, %v566
  %v631 = vmul.bf16 %v176, %v567
  %v632 = vmul.bf16 %v177, %v568
  %v633 = vmul.bf16 %v178, %v569
  %v634 = vmul.bf16 %v179, %v570
  %v635 = vmul.bf16 %v180, %v571
  %v636 = vmul.bf16 %v181, %v572
  %v637 = vmul.bf16 %v182, %v573
  %v638 = vmul.bf16 %v183, %v566
  %v639 = vmul.bf16 %v184, %v567
  %v640 = vmul.bf16 %v185, %v568
  %v641 = vmul.bf16 %v186, %v569
  %v642 = vmul.bf16 %v187, %v570
  %v643 = vmul.bf16 %v188, %v571
  %v644 = vmul.bf16 %v189, %v572
  %v645 = vmul.bf16 %v190, %v573
  %v646 = vmul.bf16 %v191, %v566
  %v647 = vmul.bf16 %v192, %v567
  %v648 = vmul.bf16 %v193, %v568
  %v649 = vmul.bf16 %v194, %v569
  %v650 = vmul.bf16 %v195, %v570
  %v651 = vmul.bf16 %v196, %v571
  %v652 = vmul.bf16 %v197, %v572
  %v653 = vmul.bf16 %v198, %v573
  %v654 = vmul.bf16 %v199, %v566
  %v655 = vmul.bf16 %v200, %v567
  %v656 = vmul.bf16 %v201, %v568
  %v657 = vmul.bf16 %v202, %v569
  %v658 = vmul.bf16 %v203, %v570
  %v659 = vmul.bf16 %v204, %v571
  %v660 = vmul.bf16 %v205, %v572
  %v661 = vmul.bf16 %v206, %v573
  %v662 = vmul.bf16 %v207, %v566
  %v663 = vmul.bf16 %v208, %v567
  %v664 = vmul.bf16 %v209, %v568
  %v665 = vmul.bf16 %v210, %v569
  %v666 = vmul.bf16 %v211, %v570
  %v667 = vmul.bf16 %v212, %v571
  %v668 = vmul.bf16 %v213, %v572
  %v669 = vmul.bf16 %v214, %v573
  %v670 = vmul.bf16 %v215, %v566
  %v671 = vmul.bf16 %v216, %v567
  %v672 = vmul.bf16 %v217, %v568
  %v673 = vmul.bf16 %v218, %v569
  %v674 = vmul.bf16 %v219, %v570
  %v675 = vmul.bf16 %v220, %v571
  %v676 = vmul.bf16 %v221, %v572
  %v677 = vmul.bf16 %v222, %v573
  %v678 = vmul.bf16 %v223, %v566
  %v679 = vmul.bf16 %v224, %v567
  %v680 = vmul.bf16 %v225, %v568
  %v681 = vmul.bf16 %v226, %v569
  %v682 = vmul.bf16 %v227, %v570
  %v683 = vmul.bf16 %v228, %v571
  %v684 = vmul.bf16 %v229, %v572
  %v685 = vmul.bf16 %v230, %v573
  %v686 = vmul.bf16 %v231, %v566
  %v687 = vmul.bf16 %v232, %v567
  %v688 = vmul.bf16 %v233, %v568
  %v689 = vmul.bf16 %v234, %v569
  %v690 = vmul.bf16 %v235, %v570
  %v691 = vmul.bf16 %v236, %v571
  %v692 = vmul.bf16 %v237, %v572
  %v693 = vmul.bf16 %v238, %v573
  %v694 = vmul.bf16 %v239, %v566
  %v695 = vmul.bf16 %v240, %v567
  %v696 = vmul.bf16 %v241, %v568
  %v697 = vmul.bf16 %v242, %v569
  %v698 = vmul.bf16 %v243, %v570
  %v699 = vmul.bf16 %v244, %v571
  %v700 = vmul.bf16 %v245, %v572
  %v701 = vmul.bf16 %v246, %v573
  %v702 = vmul.bf16 %v247, %v566
  %v703 = vmul.bf16 %v248, %v567
  %v704 = vmul.bf16 %v249, %v568
  %v705 = vmul.bf16 %v250, %v569
  %v706 = vmul.bf16 %v251, %v570
  %v707 = vmul.bf16 %v252, %v571
  %v708 = vmul.bf16 %v253, %v572
  %v709 = vmul.bf16 %v254, %v573
  %v710 = vmul.bf16 %v255, %v566
  %v711 = vmul.bf16 %v256, %v567
  %v712 = vmul.bf16 %v257, %v568
  %v713 = vmul.bf16 %v258, %v569
  %v714 = vmul.bf16 %v259, %v570
  %v715 = vmul.bf16 %v260, %v571
  %v716 = vmul.bf16 %v261, %v572
  %v717 = vmul.bf16 %v262, %v573
  %v718 = vmul.bf16 %v263, %v566
  %v719 = vmul.bf16 %v264, %v567
  %v720 = vmul.bf16 %v265, %v568
  %v721 = vmul.bf16 %v266, %v569
  %v722 = vmul.bf16 %v267, %v570
  %v723 = vmul.bf16 %v268, %v571
  %v724 = vmul.bf16 %v269, %v572
  %v725 = vmul.bf16 %v270, %v573
  %v726 = vmul.bf16 %v271, %v566
  %v727 = vmul.bf16 %v272, %v567
  %v728 = vmul.bf16 %v273, %v568
  %v729 = vmul.bf16 %v274, %v569
  %v730 = vmul.bf16 %v275, %v570
  %v731 = vmul.bf16 %v276, %v571
  %v732 = vmul.bf16 %v277, %v572
  %v733 = vmul.bf16 %v278, %v573
  %v734 = vmul.bf16 %v279, %v566
  %v735 = vmul.bf16 %v280, %v567
  %v736 = vmul.bf16 %v281, %v568
  %v737 = vmul.bf16 %v282, %v569
  %v738 = vmul.bf16 %v283, %v570
  %v739 = vmul.bf16 %v284, %v571
  %v740 = vmul.bf16 %v285, %v572
  %v741 = vmul.bf16 %v286, %v573
  %v742 = vmul.bf16 %v287, %v566
  %v743 = vmul.bf16 %v288, %v567
  %v744 = vmul.bf16 %v289, %v568
  %v745 = vmul.bf16 %v290, %v569
  %v746 = vmul.bf16 %v291, %v570
  %v747 = vmul.bf16 %v292, %v571
  %v748 = vmul.bf16 %v293, %v572
  %v749 = vmul.bf16 %v294, %v573
  %v750 = vmul.bf16 %v295, %v566
  %v751 = vmul.bf16 %v296, %v567
  %v752 = vmul.bf16 %v297, %v568
  %v753 = vmul.bf16 %v298, %v569
  %v754 = vmul.bf16 %v299, %v570
  %v755 = vmul.bf16 %v300, %v571
  %v756 = vmul.bf16 %v301, %v572
  %v757 = vmul.bf16 %v302, %v573
  %v758 = vmul.bf16 %v303, %v566
  %v759 = vmul.bf16 %v304, %v567
  %v760 = vmul.bf16 %v305, %v568
  %v761 = vmul.bf16 %v306, %v569
  %v762 = vmul.bf16 %v307, %v570
  %v763 = vmul.bf16 %v308, %v571
  %v764 = vmul.bf16 %v309, %v572
  %v765 = vmul.bf16 %v310, %v573
  %v766 = vmul.bf16 %v311, %v566
  %v767 = vmul.bf16 %v312, %v567
  %v768 = vmul.bf16 %v313, %v568
  %v769 = vmul.bf16 %v314, %v569
  %v770 = vmul.bf16 %v315, %v570
  %v771 = vmul.bf16 %v316, %v571
  %v772 = vmul.bf16 %v317, %v572
  %v773 = vmul.bf16 %v318, %v573
  %v774 = vmul.bf16 %v319, %v566
  %v775 = vmul.bf16 %v320, %v567
  %v776 = vmul.bf16 %v321, %v568
  %v777 = vmul.bf16 %v322, %v569
  %v778 = vmul.bf16 %v323, %v570
  %v779 = vmul.bf16 %v324, %v571
  %v780 = vmul.bf16 %v325, %v572
  %v781 = vmul.bf16 %v326, %v573
  %v782 = vmul.bf16 %v327, %v566
  %v783 = vmul.bf16 %v328, %v567
  %v784 = vmul.bf16 %v329, %v568
  %v785 = vmul.bf16 %v330, %v569
  %v786 = vmul.bf16 %v331, %v570
  %v787 = vmul.bf16 %v332, %v571
  %v788 = vmul.bf16 %v333, %v572
  %v789 = vmul.bf16 %v334, %v573
  %v790 = vmul.bf16 %v335, %v566
  %v791 = vmul.bf16 %v336, %v567
  %v792 = vmul.bf16 %v337, %v568
  %v793 = vmul.bf16 %v338, %v569
  %v794 = vmul.bf16 %v339, %v570
  %v795 = vmul.bf16 %v340, %v571
  %v796 = vmul.bf16 %v341, %v572
  %v797 = vmul.bf16 %v342, %v573
  %v798 = vmul.bf16 %v343, %v566
  %v799 = vmul.bf16 %v344, %v567
  %v800 = vmul.bf16 %v345, %v568
  %v801 = vmul.bf16 %v346, %v569
  %v802 = vmul.bf16 %v347, %v570
  %v803 = vmul.bf16 %v348, %v571
  %v804 = vmul.bf16 %v349, %v572
  %v805 = vmul.bf16 %v350, %v573
  %v806 = vmul.bf16 %v351, %v566
  %v807 = vmul.bf16 %v352, %v567
  %v808 = vmul.bf16 %v353, %v568
  %v809 = vmul.bf16 %v354, %v569
  %v810 = vmul.bf16 %v355, %v570
  %v811 = vmul.bf16 %v356, %v571
  %v812 = vmul.bf16 %v357, %v572
  %v813 = vmul.bf16 %v358, %v573
  %v814 = vmul.bf16 %v359, %v566
  %v815 = vmul.bf16 %v360, %v567
  %v816 = vmul.bf16 %v361, %v568
  %v817 = vmul.bf16 %v362, %v569
  %v818 = vmul.bf16 %v363, %v570
  %v819 = vmul.bf16 %v364, %v571
  %v820 = vmul.bf16 %v365, %v572
  %v821 = vmul.bf16 %v366, %v573
  %v822 = vmul.bf16 %v367, %v566
  %v823 = vmul.bf16 %v368, %v567
  %v824 = vmul.bf16 %v369, %v568
  %v825 = vmul.bf16 %v370, %v569
  %v826 = vmul.bf16 %v371, %v570
  %v827 = vmul.bf16 %v372, %v571
  %v828 = vmul.bf16 %v373, %v572
  %v829 = vmul.bf16 %v374, %v573
  %v830 = vmul.bf16 %v375, %v566
  %v831 = vmul.bf16 %v376, %v567
  %v832 = vmul.bf16 %v377, %v568
  %v833 = vmul.bf16 %v378, %v569
  %v834 = vmul.bf16 %v379, %v570
  %v835 = vmul.bf16 %v380, %v571
  %v836 = vmul.bf16 %v381, %v572
  %v837 = vmul.bf16 %v382, %v573
  %v838 = vmul.bf16 %v383, %v566
  %v839 = vmul.bf16 %v384, %v567
  %v840 = vmul.bf16 %v385, %v568
  %v841 = vmul.bf16 %v386, %v569
  %v842 = vmul.bf16 %v387, %v570
  %v843 = vmul.bf16 %v388, %v571
  %v844 = vmul.bf16 %v389, %v572
  %v845 = vmul.bf16 %v390, %v573
  %v846 = vmul.bf16 %v391, %v566
  %v847 = vmul.bf16 %v392, %v567
  %v848 = vmul.bf16 %v393, %v568
  %v849 = vmul.bf16 %v394, %v569
  %v850 = vmul.bf16 %v395, %v570
  %v851 = vmul.bf16 %v396, %v571
  %v852 = vmul.bf16 %v397, %v572
  %v853 = vmul.bf16 %v398, %v573
  %v854 = vmul.bf16 %v399, %v566
  %v855 = vmul.bf16 %v400, %v567
  %v856 = vmul.bf16 %v401, %v568
  %v857 = vmul.bf16 %v402, %v569
  %v858 = vmul.bf16 %v403, %v570
  %v859 = vmul.bf16 %v404, %v571
  %v860 = vmul.bf16 %v405, %v572
  %v861 = vmul.bf16 %v406, %v573
  %v862 = vmul.bf16 %v407, %v566
  %v863 = vmul.bf16 %v408, %v567
  %v864 = vmul.bf16 %v409, %v568
  %v865 = vmul.bf16 %v410, %v569
  %v866 = vmul.bf16 %v411, %v570
  %v867 = vmul.bf16 %v412, %v571
  %v868 = vmul.bf16 %v413, %v572
  %v869 = vmul.bf16 %v414, %v573
  %v870 = vmul.bf16 %v415, %v566
  %v871 = vmul.bf16 %v416, %v567
  %v872 = vmul.bf16 %v417, %v568
  %v873 = vmul.bf16 %v418, %v569
  %v874 = vmul.bf16 %v419, %v570
  %v875 = vmul.bf16 %v420, %v571
  %v876 = vmul.bf16 %v421, %v572
  %v877 = vmul.bf16 %v422, %v573
  %v878 = vmul.bf16 %v423, %v566
  %v879 = vmul.bf16 %v424, %v567
  %v880 = vmul.bf16 %v425, %v568
  %v881 = vmul.bf16 %v426, %v569
  %v882 = vmul.bf16 %v427, %v570
  %v883 = vmul.bf16 %v428, %v571
  %v884 = vmul.bf16 %v429, %v572
  %v885 = vmul.bf16 %v430, %v573
  %v886 = vld [vmem:[%s1] sm:$0xff]
  %v887 = vld [vmem:[%s1 + $0x8] sm:$0xff]
  %v888 = vld [vmem:[%s1 + $0x10] sm:$0xff]
  %v889 = vld [vmem:[%s1 + $0x18] sm:$0xff]
  %v890 = vld [vmem:[%s1 + $0x20] sm:$0xff]
  %v891 = vld [vmem:[%s1 + $0x28] sm:$0xff]
  %v892 = vld [vmem:[%s1 + $0x30] sm:$0xff]
  %v893 = vld [vmem:[%s1 + $0x38] sm:$0xff]
  %v894 = vld [vmem:[%s1 + $0x40] sm:$0xff]
  %v895 = vld [vmem:[%s1 + $0x48] sm:$0xff]
  %v896 = vld [vmem:[%s1 + $0x50] sm:$0xff]
  %v897 = vld [vmem:[%s1 + $0x58] sm:$0xff]
  %v898 = vld [vmem:[%s1 + $0x60] sm:$0xff]
  %v899 = vld [vmem:[%s1 + $0x68] sm:$0xff]
  %v900 = vld [vmem:[%s1 + $0x70] sm:$0xff]
  %v901 = vld [vmem:[%s1 + $0x78] sm:$0xff]
  %v902 = vld [vmem:[%s1 + $0x80] sm:$0xff]
  %v903 = vld [vmem:[%s1 + $0x88] sm:$0xff]
  %v904 = vld [vmem:[%s1 + $0x90] sm:$0xff]
  %v905 = vld [vmem:[%s1 + $0x98] sm:$0xff]
  %v906 = vld [vmem:[%s1 + $0xa0] sm:$0xff]
  %v907 = vld [vmem:[%s1 + $0xa8] sm:$0xff]
  %v908 = vld [vmem:[%s1 + $0xb0] sm:$0xff]
  %v909 = vld [vmem:[%s1 + $0xb8] sm:$0xff]
  %v910 = vld [vmem:[%s1 + $0xc0] sm:$0xff]
  %v911 = vld [vmem:[%s1 + $0xc8] sm:$0xff]
  %v912 = vld [vmem:[%s1 + $0xd0] sm:$0xff]
  %v913 = vld [vmem:[%s1 + $0xd8] sm:$0xff]
  %v914 = vld [vmem:[%s1 + $0xe0] sm:$0xff]
  %v915 = vld [vmem:[%s1 + $0xe8] sm:$0xff]
  %v916 = vld [vmem:[%s1 + $0xf0] sm:$0xff]
  %v917 = vld [vmem:[%s1 + $0xf8] sm:$0xff]
  %v918 = vld [vmem:[%s1 + $0x100] sm:$0xff]
  %v919 = vld [vmem:[%s1 + $0x108] sm:$0xff]
  %v920 = vld [vmem:[%s1 + $0x110] sm:$0xff]
  %v921 = vld [vmem:[%s1 + $0x118] sm:$0xff]
  %v922 = vld [vmem:[%s1 + $0x120] sm:$0xff]
  %v923 = vld [vmem:[%s1 + $0x128] sm:$0xff]
  %v924 = vld [vmem:[%s1 + $0x130] sm:$0xff]
  %v925 = vld [vmem:[%s1 + $0x138] sm:$0xff]
  %v926 = vld [vmem:[%s1 + $0x140] sm:$0xff]
  %v927 = vld [vmem:[%s1 + $0x148] sm:$0xff]
  %v928 = vld [vmem:[%s1 + $0x150] sm:$0xff]
  %v929 = vld [vmem:[%s1 + $0x158] sm:$0xff]
  %v930 = vld [vmem:[%s1 + $0x160] sm:$0xff]
  %v931 = vld [vmem:[%s1 + $0x168] sm:$0xff]
  %v932 = vld [vmem:[%s1 + $0x170] sm:$0xff]
  %v933 = vld [vmem:[%s1 + $0x178] sm:$0xff]
  %v934 = vld [vmem:[%s1 + $0x180] sm:$0xff]
  %v935 = vld [vmem:[%s1 + $0x188] sm:$0xff]
  %v936 = vld [vmem:[%s1 + $0x190] sm:$0xff]
  %v937 = vld [vmem:[%s1 + $0x198] sm:$0xff]
  %v938 = vld [vmem:[%s1 + $0x1a0] sm:$0xff]
  %v939 = vld [vmem:[%s1 + $0x1a8] sm:$0xff]
  %v940 = vld [vmem:[%s1 + $0x1b0] sm:$0xff]
  %v941 = vld [vmem:[%s1 + $0x1b8] sm:$0xff]
  %v942 = vld [vmem:[%s1 + $0x1c0] sm:$0xff]
  %v943 = vld [vmem:[%s1 + $0x1c8] sm:$0xff]
  %v944 = vld [vmem:[%s1 + $0x1d0] sm:$0xff]
  %v945 = vld [vmem:[%s1 + $0x1d8] sm:$0xff]
  %v946 = vld [vmem:[%s1 + $0x1e0] sm:$0xff]
  %v947 = vld [vmem:[%s1 + $0x1e8] sm:$0xff]
  %v948 = vld [vmem:[%s1 + $0x1f0] sm:$0xff]
  %v949 = vld [vmem:[%s1 + $0x1f8] sm:$0xff]
  %v950 = vld [vmem:[%s1 + $0x200] sm:$0xff]
  %v951 = vld [vmem:[%s1 + $0x208] sm:$0xff]
  %v952 = vld [vmem:[%s1 + $0x210] sm:$0xff]
  %v953 = vld [vmem:[%s1 + $0x218] sm:$0xff]
  %v954 = vld [vmem:[%s1 + $0x220] sm:$0xff]
  %v955 = vld [vmem:[%s1 + $0x228] sm:$0xff]
  %v956 = vld [vmem:[%s1 + $0x230] sm:$0xff]
  %v957 = vld [vmem:[%s1 + $0x238] sm:$0xff]
  %v958 = vld [vmem:[%s1 + $0x240] sm:$0xff]
  %v959 = vld [vmem:[%s1 + $0x248] sm:$0xff]
  %v960 = vld [vmem:[%s1 + $0x250] sm:$0xff]
  %v961 = vld [vmem:[%s1 + $0x258] sm:$0xff]
  %v962 = vld [vmem:[%s1 + $0x260] sm:$0xff]
  %v963 = vld [vmem:[%s1 + $0x268] sm:$0xff]
  %v964 = vld [vmem:[%s1 + $0x270] sm:$0xff]
  %v965 = vld [vmem:[%s1 + $0x278] sm:$0xff]
  %v966 = vld [vmem:[%s1 + $0x280] sm:$0xff]
  %v967 = vld [vmem:[%s1 + $0x288] sm:$0xff]
  %v968 = vld [vmem:[%s1 + $0x290] sm:$0xff]
  %v969 = vld [vmem:[%s1 + $0x298] sm:$0xff]
  %v970 = vld [vmem:[%s1 + $0x2a0] sm:$0xff]
  %v971 = vld [vmem:[%s1 + $0x2a8] sm:$0xff]
  %v972 = vld [vmem:[%s1 + $0x2b0] sm:$0xff]
  %v973 = vld [vmem:[%s1 + $0x2b8] sm:$0xff]
  %v974 = vld [vmem:[%s1 + $0x2c0] sm:$0xff]
  %v975 = vld [vmem:[%s1 + $0x2c8] sm:$0xff]
  %v976 = vld [vmem:[%s1 + $0x2d0] sm:$0xff]
  %v977 = vld [vmem:[%s1 + $0x2d8] sm:$0xff]
  %v978 = vld [vmem:[%s1 + $0x2e0] sm:$0xff]
  %v979 = vld [vmem:[%s1 + $0x2e8] sm:$0xff]
  %v980 = vld [vmem:[%s1 + $0x2f0] sm:$0xff]
  %v981 = vld [vmem:[%s1 + $0x2f8] sm:$0xff]
  %v982 = vld [vmem:[%s1 + $0x300] sm:$0xff]
  %v983 = vld [vmem:[%s1 + $0x308] sm:$0xff]
  %v984 = vld [vmem:[%s1 + $0x310] sm:$0xff]
  %v985 = vld [vmem:[%s1 + $0x318] sm:$0xff]
  %v986 = vld [vmem:[%s1 + $0x320] sm:$0xff]
  %v987 = vld [vmem:[%s1 + $0x328] sm:$0xff]
  %v988 = vld [vmem:[%s1 + $0x330] sm:$0xff]
  %v989 = vld [vmem:[%s1 + $0x338] sm:$0xff]
  %v990 = vld [vmem:[%s1 + $0x340] sm:$0xff]
  %v991 = vld [vmem:[%s1 + $0x348] sm:$0xff]
  %v992 = vld [vmem:[%s1 + $0x350] sm:$0xff]
  %v993 = vld [vmem:[%s1 + $0x358] sm:$0xff]
  %v994 = vld [vmem:[%s1 + $0x360] sm:$0xff]
  %v995 = vld [vmem:[%s1 + $0x368] sm:$0xff]
  %v996 = vld [vmem:[%s1 + $0x370] sm:$0xff]
  %v997 = vld [vmem:[%s1 + $0x378] sm:$0xff]
  %v998 = vld [vmem:[%s1 + $0x380] sm:$0xff]
  %v999 = vld [vmem:[%s1 + $0x388] sm:$0xff]
  %v1000 = vld [vmem:[%s1 + $0x390] sm:$0xff]
  %v1001 = vld [vmem:[%s1 + $0x398] sm:$0xff]
  %v1002 = vld [vmem:[%s1 + $0x3a0] sm:$0xff]
  %v1003 = vld [vmem:[%s1 + $0x3a8] sm:$0xff]
  %v1004 = vld [vmem:[%s1 + $0x3b0] sm:$0xff]
  %v1005 = vld [vmem:[%s1 + $0x3b8] sm:$0xff]
  %v1006 = vld [vmem:[%s1 + $0x3c0] sm:$0xff]
  %v1007 = vld [vmem:[%s1 + $0x3c8] sm:$0xff]
  %v1008 = vld [vmem:[%s1 + $0x3d0] sm:$0xff]
  %v1009 = vld [vmem:[%s1 + $0x3d8] sm:$0xff]
  %v1010 = vld [vmem:[%s1 + $0x3e0] sm:$0xff]
  %v1011 = vld [vmem:[%s1 + $0x3e8] sm:$0xff]
  %v1012 = vld [vmem:[%s1 + $0x3f0] sm:$0xff]
  %v1013 = vld [vmem:[%s1 + $0x3f8] sm:$0xff]
  %v1014 = vld [vmem:[%s1 + $0x400] sm:$0xff]
  %v1015 = vld [vmem:[%s1 + $0x408] sm:$0xff]
  %v1016 = vld [vmem:[%s1 + $0x410] sm:$0xff]
  %v1017 = vld [vmem:[%s1 + $0x418] sm:$0xff]
  %v1018 = vld [vmem:[%s1 + $0x420] sm:$0xff]
  %v1019 = vld [vmem:[%s1 + $0x428] sm:$0xff]
  %v1020 = vld [vmem:[%s1 + $0x430] sm:$0xff]
  %v1021 = vld [vmem:[%s1 + $0x438] sm:$0xff]
  %v1022 = vld [vmem:[%s1 + $0x440] sm:$0xff]
  %v1023 = vld [vmem:[%s1 + $0x448] sm:$0xff]
  %v1024 = vld [vmem:[%s1 + $0x450] sm:$0xff]
  %v1025 = vld [vmem:[%s1 + $0x458] sm:$0xff]
  %v1026 = vld [vmem:[%s1 + $0x460] sm:$0xff]
  %v1027 = vld [vmem:[%s1 + $0x468] sm:$0xff]
  %v1028 = vld [vmem:[%s1 + $0x470] sm:$0xff]
  %v1029 = vld [vmem:[%s1 + $0x478] sm:$0xff]
  %v1030 = vld [vmem:[%s1 + $0x480] sm:$0xff]
  %v1031 = vld [vmem:[%s1 + $0x488] sm:$0xff]
  %v1032 = vld [vmem:[%s1 + $0x490] sm:$0xff]
  %v1033 = vld [vmem:[%s1 + $0x498] sm:$0xff]
  %v1034 = vld [vmem:[%s1 + $0x4a0] sm:$0xff]
  %v1035 = vld [vmem:[%s1 + $0x4a8] sm:$0xff]
  %v1036 = vld [vmem:[%s1 + $0x4b0] sm:$0xff]
  %v1037 = vld [vmem:[%s1 + $0x4b8] sm:$0xff]
  %v1038 = vld [vmem:[%s1 + $0x4c0] sm:$0xff]
  %v1039 = vld [vmem:[%s1 + $0x4c8] sm:$0xff]
  %v1040 = vld [vmem:[%s1 + $0x4d0] sm:$0xff]
  %v1041 = vld [vmem:[%s1 + $0x4d8] sm:$0xff]
  %v1042 = vld [vmem:[%s1 + $0x4e0] sm:$0xff]
  %v1043 = vld [vmem:[%s1 + $0x4e8] sm:$0xff]
  %v1044 = vld [vmem:[%s1 + $0x4f0] sm:$0xff]
  %v1045 = vld [vmem:[%s1 + $0x4f8] sm:$0xff]
  %v1046 = vld [vmem:[%s1 + $0x500] sm:$0xff]
  %v1047 = vld [vmem:[%s1 + $0x508] sm:$0xff]
  %v1048 = vld [vmem:[%s1 + $0x510] sm:$0xff]
  %v1049 = vld [vmem:[%s1 + $0x518] sm:$0xff]
  %v1050 = vld [vmem:[%s1 + $0x520] sm:$0xff]
  %v1051 = vld [vmem:[%s1 + $0x528] sm:$0xff]
  %v1052 = vld [vmem:[%s1 + $0x530] sm:$0xff]
  %v1053 = vld [vmem:[%s1 + $0x538] sm:$0xff]
  %v1054 = vld [vmem:[%s1 + $0x540] sm:$0xff]
  %v1055 = vld [vmem:[%s1 + $0x548] sm:$0xff]
  %v1056 = vld [vmem:[%s1 + $0x550] sm:$0xff]
  %v1057 = vld [vmem:[%s1 + $0x558] sm:$0xff]
  %v1058 = vld [vmem:[%s1 + $0x560] sm:$0xff]
  %v1059 = vld [vmem:[%s1 + $0x568] sm:$0xff]
  %v1060 = vld [vmem:[%s1 + $0x570] sm:$0xff]
  %v1061 = vld [vmem:[%s1 + $0x578] sm:$0xff]
  %v1062 = vld [vmem:[%s1 + $0x580] sm:$0xff]
  %v1063 = vld [vmem:[%s1 + $0x588] sm:$0xff]
  %v1064 = vld [vmem:[%s1 + $0x590] sm:$0xff]
  %v1065 = vld [vmem:[%s1 + $0x598] sm:$0xff]
  %v1066 = vld [vmem:[%s1 + $0x5a0] sm:$0xff]
  %v1067 = vld [vmem:[%s1 + $0x5a8] sm:$0xff]
  %v1068 = vld [vmem:[%s1 + $0x5b0] sm:$0xff]
  %v1069 = vld [vmem:[%s1 + $0x5b8] sm:$0xff]
  %v1070 = vld [vmem:[%s1 + $0x5c0] sm:$0xff]
  %v1071 = vld [vmem:[%s1 + $0x5c8] sm:$0xff]
  %v1072 = vld [vmem:[%s1 + $0x5d0] sm:$0xff]
  %v1073 = vld [vmem:[%s1 + $0x5d8] sm:$0xff]
  %v1074 = vld [vmem:[%s1 + $0x5e0] sm:$0xff]
  %v1075 = vld [vmem:[%s1 + $0x5e8] sm:$0xff]
  %v1076 = vld [vmem:[%s1 + $0x5f0] sm:$0xff]
  %v1077 = vld [vmem:[%s1 + $0x5f8] sm:$0xff]
  %v1078 = vld [vmem:[%s1 + $0x600] sm:$0xff]
  %v1079 = vld [vmem:[%s1 + $0x608] sm:$0xff]
  %v1080 = vld [vmem:[%s1 + $0x610] sm:$0xff]
  %v1081 = vld [vmem:[%s1 + $0x618] sm:$0xff]
  %v1082 = vld [vmem:[%s1 + $0x620] sm:$0xff]
  %v1083 = vld [vmem:[%s1 + $0x628] sm:$0xff]
  %v1084 = vld [vmem:[%s1 + $0x630] sm:$0xff]
  %v1085 = vld [vmem:[%s1 + $0x638] sm:$0xff]
  %v1086 = vld [vmem:[%s1 + $0x640] sm:$0xff]
  %v1087 = vld [vmem:[%s1 + $0x648] sm:$0xff]
  %v1088 = vld [vmem:[%s1 + $0x650] sm:$0xff]
  %v1089 = vld [vmem:[%s1 + $0x658] sm:$0xff]
  %v1090 = vld [vmem:[%s1 + $0x660] sm:$0xff]
  %v1091 = vld [vmem:[%s1 + $0x668] sm:$0xff]
  %v1092 = vld [vmem:[%s1 + $0x670] sm:$0xff]
  %v1093 = vld [vmem:[%s1 + $0x678] sm:$0xff]
  %v1094 = vld [vmem:[%s1 + $0x680] sm:$0xff]
  %v1095 = vld [vmem:[%s1 + $0x688] sm:$0xff]
  %v1096 = vld [vmem:[%s1 + $0x690] sm:$0xff]
  %v1097 = vld [vmem:[%s1 + $0x698] sm:$0xff]
  %v1098 = vld [vmem:[%s1 + $0x6a0] sm:$0xff]
  %v1099 = vld [vmem:[%s1 + $0x6a8] sm:$0xff]
  %v1100 = vld [vmem:[%s1 + $0x6b0] sm:$0xff]
  %v1101 = vld [vmem:[%s1 + $0x6b8] sm:$0xff]
  %v1102 = vld [vmem:[%s1 + $0x6c0] sm:$0xff]
  %v1103 = vld [vmem:[%s1 + $0x6c8] sm:$0xff]
  %v1104 = vld [vmem:[%s1 + $0x6d0] sm:$0xff]
  %v1105 = vld [vmem:[%s1 + $0x6d8] sm:$0xff]
  %v1106 = vld [vmem:[%s1 + $0x6e0] sm:$0xff]
  %v1107 = vld [vmem:[%s1 + $0x6e8] sm:$0xff]
  %v1108 = vld [vmem:[%s1 + $0x6f0] sm:$0xff]
  %v1109 = vld [vmem:[%s1 + $0x6f8] sm:$0xff]
  %v1110 = vld [vmem:[%s1 + $0x700] sm:$0xff]
  %v1111 = vld [vmem:[%s1 + $0x708] sm:$0xff]
  %v1112 = vld [vmem:[%s1 + $0x710] sm:$0xff]
  %v1113 = vld [vmem:[%s1 + $0x718] sm:$0xff]
  %v1114 = vpack.c.bf16 %v887, %v886
  %v1115 = vpack.c.bf16 %v889, %v888
  %v1116 = vpack.c.bf16 %v891, %v890
  %v1117 = vpack.c.bf16 %v893, %v892
  %v1118 = vpack.c.bf16 %v895, %v894
  %v1119 = vpack.c.bf16 %v897, %v896
  %v1120 = vpack.c.bf16 %v899, %v898
  %v1121 = vpack.c.bf16 %v901, %v900
  %v1122 = vpack.c.bf16 %v903, %v902
  %v1123 = vpack.c.bf16 %v905, %v904
  %v1124 = vpack.c.bf16 %v907, %v906
  %v1125 = vpack.c.bf16 %v909, %v908
  %v1126 = vpack.c.bf16 %v911, %v910
  %v1127 = vpack.c.bf16 %v913, %v912
  %v1128 = vpack.c.bf16 %v915, %v914
  %v1129 = vpack.c.bf16 %v917, %v916
  %v1130 = vpack.c.bf16 %v919, %v918
  %v1131 = vpack.c.bf16 %v921, %v920
  %v1132 = vpack.c.bf16 %v923, %v922
  %v1133 = vpack.c.bf16 %v925, %v924
  %v1134 = vpack.c.bf16 %v927, %v926
  %v1135 = vpack.c.bf16 %v929, %v928
  %v1136 = vpack.c.bf16 %v931, %v930
  %v1137 = vpack.c.bf16 %v933, %v932
  %v1138 = vpack.c.bf16 %v935, %v934
  %v1139 = vpack.c.bf16 %v937, %v936
  %v1140 = vpack.c.bf16 %v939, %v938
  %v1141 = vpack.c.bf16 %v941, %v940
  %v1142 = vpack.c.bf16 %v943, %v942
  %v1143 = vpack.c.bf16 %v945, %v944
  %v1144 = vpack.c.bf16 %v947, %v946
  %v1145 = vpack.c.bf16 %v949, %v948
  %v1146 = vpack.c.bf16 %v951, %v950
  %v1147 = vpack.c.bf16 %v953, %v952
  %v1148 = vpack.c.bf16 %v955, %v954
  %v1149 = vpack.c.bf16 %v957, %v956
  %v1150 = vpack.c.bf16 %v959, %v958
  %v1151 = vpack.c.bf16 %v961, %v960
  %v1152 = vpack.c.bf16 %v963, %v962
  %v1153 = vpack.c.bf16 %v965, %v964
  %v1154 = vpack.c.bf16 %v967, %v966
  %v1155 = vpack.c.bf16 %v969, %v968
  %v1156 = vpack.c.bf16 %v971, %v970
  %v1157 = vpack.c.bf16 %v973, %v972
  %v1158 = vpack.c.bf16 %v975, %v974
  %v1159 = vpack.c.bf16 %v977, %v976
  %v1160 = vpack.c.bf16 %v979, %v978
  %v1161 = vpack.c.bf16 %v981, %v980
  %v1162 = vpack.c.bf16 %v983, %v982
  %v1163 = vpack.c.bf16 %v985, %v984
  %v1164 = vpack.c.bf16 %v987, %v986
  %v1165 = vpack.c.bf16 %v989, %v988
  %v1166 = vpack.c.bf16 %v991, %v990
  %v1167 = vpack.c.bf16 %v993, %v992
  %v1168 = vpack.c.bf16 %v995, %v994
  %v1169 = vpack.c.bf16 %v997, %v996
  %v1170 = vpack.c.bf16 %v999, %v998
  %v1171 = vpack.c.bf16 %v1001, %v1000
  %v1172 = vpack.c.bf16 %v1003, %v1002
  %v1173 = vpack.c.bf16 %v1005, %v1004
  %v1174 = vpack.c.bf16 %v1007, %v1006
  %v1175 = vpack.c.bf16 %v1009, %v1008
  %v1176 = vpack.c.bf16 %v1011, %v1010
  %v1177 = vpack.c.bf16 %v1013, %v1012
  %v1178 = vpack.c.bf16 %v1015, %v1014
  %v1179 = vpack.c.bf16 %v1017, %v1016
  %v1180 = vpack.c.bf16 %v1019, %v1018
  %v1181 = vpack.c.bf16 %v1021, %v1020
  %v1182 = vpack.c.bf16 %v1023, %v1022
  %v1183 = vpack.c.bf16 %v1025, %v1024
  %v1184 = vpack.c.bf16 %v1027, %v1026
  %v1185 = vpack.c.bf16 %v1029, %v1028
  %v1186 = vpack.c.bf16 %v1031, %v1030
  %v1187 = vpack.c.bf16 %v1033, %v1032
  %v1188 = vpack.c.bf16 %v1035, %v1034
  %v1189 = vpack.c.bf16 %v1037, %v1036
  %v1190 = vpack.c.bf16 %v1039, %v1038
  %v1191 = vpack.c.bf16 %v1041, %v1040
  %v1192 = vpack.c.bf16 %v1043, %v1042
  %v1193 = vpack.c.bf16 %v1045, %v1044
  %v1194 = vpack.c.bf16 %v1047, %v1046
  %v1195 = vpack.c.bf16 %v1049, %v1048
  %v1196 = vpack.c.bf16 %v1051, %v1050
  %v1197 = vpack.c.bf16 %v1053, %v1052
  %v1198 = vpack.c.bf16 %v1055, %v1054
  %v1199 = vpack.c.bf16 %v1057, %v1056
  %v1200 = vpack.c.bf16 %v1059, %v1058
  %v1201 = vpack.c.bf16 %v1061, %v1060
  %v1202 = vpack.c.bf16 %v1063, %v1062
  %v1203 = vpack.c.bf16 %v1065, %v1064
  %v1204 = vpack.c.bf16 %v1067, %v1066
  %v1205 = vpack.c.bf16 %v1069, %v1068
  %v1206 = vpack.c.bf16 %v1071, %v1070
  %v1207 = vpack.c.bf16 %v1073, %v1072
  %v1208 = vpack.c.bf16 %v1075, %v1074
  %v1209 = vpack.c.bf16 %v1077, %v1076
  %v1210 = vpack.c.bf16 %v1079, %v1078
  %v1211 = vpack.c.bf16 %v1081, %v1080
  %v1212 = vpack.c.bf16 %v1083, %v1082
  %v1213 = vpack.c.bf16 %v1085, %v1084
  %v1214 = vpack.c.bf16 %v1087, %v1086
  %v1215 = vpack.c.bf16 %v1089, %v1088
  %v1216 = vpack.c.bf16 %v1091, %v1090
  %v1217 = vpack.c.bf16 %v1093, %v1092
  %v1218 = vpack.c.bf16 %v1095, %v1094
  %v1219 = vpack.c.bf16 %v1097, %v1096
  %v1220 = vpack.c.bf16 %v1099, %v1098
  %v1221 = vpack.c.bf16 %v1101, %v1100
  %v1222 = vpack.c.bf16 %v1103, %v1102
  %v1223 = vpack.c.bf16 %v1105, %v1104
  %v1224 = vpack.c.bf16 %v1107, %v1106
  %v1225 = vpack.c.bf16 %v1109, %v1108
  %v1226 = vpack.c.bf16 %v1111, %v1110
  %v1227 = vpack.c.bf16 %v1113, %v1112
  %v1532 = vunpack.c.l.b16 %v582
  %v1533 = vunpack.c.h.b16 %v582
  %v1534 = vunpack.c.l.b16 %v583
  %v1535 = vunpack.c.h.b16 %v583
  %v1536 = vunpack.c.l.b16 %v584
  %v1537 = vunpack.c.h.b16 %v584
  %v1538 = vunpack.c.l.b16 %v585
  %v1539 = vunpack.c.h.b16 %v585
  %v1540 = vunpack.c.l.b16 %v586
  %v1541 = vunpack.c.h.b16 %v586
  %v1542 = vunpack.c.l.b16 %v587
  %v1543 = vunpack.c.h.b16 %v587
  %v1544 = vunpack.c.l.b16 %v588
  %v1545 = vunpack.c.h.b16 %v588
  %v1546 = vunpack.c.l.b16 %v589
  %v1547 = vunpack.c.l.b16 %v590
  %v1548 = vunpack.c.h.b16 %v590
  %v1549 = vunpack.c.l.b16 %v591
  %v1550 = vunpack.c.h.b16 %v591
  %v1551 = vunpack.c.l.b16 %v592
  %v1552 = vunpack.c.h.b16 %v592
  %v1553 = vunpack.c.l.b16 %v593
  %v1554 = vunpack.c.h.b16 %v593
  %v1555 = vunpack.c.l.b16 %v594
  %v1556 = vunpack.c.h.b16 %v594
  %v1557 = vunpack.c.l.b16 %v595
  %v1558 = vunpack.c.h.b16 %v595
  %v1559 = vunpack.c.l.b16 %v596
  %v1560 = vunpack.c.h.b16 %v596
  %v1561 = vunpack.c.l.b16 %v597
  %v1562 = vunpack.c.l.b16 %v598
  %v1563 = vunpack.c.h.b16 %v598
  %v1564 = vunpack.c.l.b16 %v599
  %v1565 = vunpack.c.h.b16 %v599
  %v1566 = vunpack.c.l.b16 %v600
  %v1567 = vunpack.c.h.b16 %v600
  %v1568 = vunpack.c.l.b16 %v601
  %v1569 = vunpack.c.h.b16 %v601
  %v1570 = vunpack.c.l.b16 %v602
  %v1571 = vunpack.c.h.b16 %v602
  %v1572 = vunpack.c.l.b16 %v603
  %v1573 = vunpack.c.h.b16 %v603
  %v1574 = vunpack.c.l.b16 %v604
  %v1575 = vunpack.c.h.b16 %v604
  %v1576 = vunpack.c.l.b16 %v605
  %v1577 = vunpack.c.l.b16 %v606
  %v1578 = vunpack.c.h.b16 %v606
  %v1579 = vunpack.c.l.b16 %v607
  %v1580 = vunpack.c.h.b16 %v607
  %v1581 = vunpack.c.l.b16 %v608
  %v1582 = vunpack.c.h.b16 %v608
  %v1583 = vunpack.c.l.b16 %v609
  %v1584 = vunpack.c.h.b16 %v609
  %v1585 = vunpack.c.l.b16 %v610
  %v1586 = vunpack.c.h.b16 %v610
  %v1587 = vunpack.c.l.b16 %v611
  %v1588 = vunpack.c.h.b16 %v611
  %v1589 = vunpack.c.l.b16 %v612
  %v1590 = vunpack.c.h.b16 %v612
  %v1591 = vunpack.c.l.b16 %v613
  %v1592 = vunpack.c.l.b16 %v614
  %v1593 = vunpack.c.h.b16 %v614
  %v1594 = vunpack.c.l.b16 %v615
  %v1595 = vunpack.c.h.b16 %v615
  %v1596 = vunpack.c.l.b16 %v616
  %v1597 = vunpack.c.h.b16 %v616
  %v1598 = vunpack.c.l.b16 %v617
  %v1599 = vunpack.c.h.b16 %v617
  %v1600 = vunpack.c.l.b16 %v618
  %v1601 = vunpack.c.h.b16 %v618
  %v1602 = vunpack.c.l.b16 %v619
  %v1603 = vunpack.c.h.b16 %v619
  %v1604 = vunpack.c.l.b16 %v620
  %v1605 = vunpack.c.h.b16 %v620
  %v1606 = vunpack.c.l.b16 %v621
  %v1607 = vunpack.c.l.b16 %v622
  %v1608 = vunpack.c.h.b16 %v622
  %v1609 = vunpack.c.l.b16 %v623
  %v1610 = vunpack.c.h.b16 %v623
  %v1611 = vunpack.c.l.b16 %v624
  %v1612 = vunpack.c.h.b16 %v624
  %v1613 = vunpack.c.l.b16 %v625
  %v1614 = vunpack.c.h.b16 %v625
  %v1615 = vunpack.c.l.b16 %v626
  %v1616 = vunpack.c.h.b16 %v626
  %v1617 = vunpack.c.l.b16 %v627
  %v1618 = vunpack.c.h.b16 %v627
  %v1619 = vunpack.c.l.b16 %v628
  %v1620 = vunpack.c.h.b16 %v628
  %v1621 = vunpack.c.l.b16 %v629
  %v1622 = vunpack.c.l.b16 %v630
  %v1623 = vunpack.c.h.b16 %v630
  %v1624 = vunpack.c.l.b16 %v631
  %v1625 = vunpack.c.h.b16 %v631
  %v1626 = vunpack.c.l.b16 %v632
  %v1627 = vunpack.c.h.b16 %v632
  %v1628 = vunpack.c.l.b16 %v633
  %v1629 = vunpack.c.h.b16 %v633
  %v1630 = vunpack.c.l.b16 %v634
  %v1631 = vunpack.c.h.b16 %v634
  %v1632 = vunpack.c.l.b16 %v635
  %v1633 = vunpack.c.h.b16 %v635
  %v1634 = vunpack.c.l.b16 %v636
  %v1635 = vunpack.c.h.b16 %v636
  %v1636 = vunpack.c.l.b16 %v637
  %v1637 = vunpack.c.l.b16 %v638
  %v1638 = vunpack.c.h.b16 %v638
  %v1639 = vunpack.c.l.b16 %v639
  %v1640 = vunpack.c.h.b16 %v639
  %v1641 = vunpack.c.l.b16 %v640
  %v1642 = vunpack.c.h.b16 %v640
  %v1643 = vunpack.c.l.b16 %v641
  %v1644 = vunpack.c.h.b16 %v641
  %v1645 = vunpack.c.l.b16 %v642
  %v1646 = vunpack.c.h.b16 %v642
  %v1647 = vunpack.c.l.b16 %v643
  %v1648 = vunpack.c.h.b16 %v643
  %v1649 = vunpack.c.l.b16 %v644
  %v1650 = vunpack.c.h.b16 %v644
  %v1651 = vunpack.c.l.b16 %v645
  %v1652 = vunpack.c.l.b16 %v646
  %v1653 = vunpack.c.h.b16 %v646
  %v1654 = vunpack.c.l.b16 %v647
  %v1655 = vunpack.c.h.b16 %v647
  %v1656 = vunpack.c.l.b16 %v648
  %v1657 = vunpack.c.h.b16 %v648
  %v1658 = vunpack.c.l.b16 %v649
  %v1659 = vunpack.c.h.b16 %v649
  %v1660 = vunpack.c.l.b16 %v650
  %v1661 = vunpack.c.h.b16 %v650
  %v1662 = vunpack.c.l.b16 %v651
  %v1663 = vunpack.c.h.b16 %v651
  %v1664 = vunpack.c.l.b16 %v652
  %v1665 = vunpack.c.h.b16 %v652
  %v1666 = vunpack.c.l.b16 %v653
  %v1667 = vunpack.c.l.b16 %v654
  %v1668 = vunpack.c.h.b16 %v654
  %v1669 = vunpack.c.l.b16 %v655
  %v1670 = vunpack.c.h.b16 %v655
  %v1671 = vunpack.c.l.b16 %v656
  %v1672 = vunpack.c.h.b16 %v656
  %v1673 = vunpack.c.l.b16 %v657
  %v1674 = vunpack.c.h.b16 %v657
  %v1675 = vunpack.c.l.b16 %v658
  %v1676 = vunpack.c.h.b16 %v658
  %v1677 = vunpack.c.l.b16 %v659
  %v1678 = vunpack.c.h.b16 %v659
  %v1679 = vunpack.c.l.b16 %v660
  %v1680 = vunpack.c.h.b16 %v660
  %v1681 = vunpack.c.l.b16 %v661
  %v1682 = vunpack.c.l.b16 %v662
  %v1683 = vunpack.c.h.b16 %v662
  %v1684 = vunpack.c.l.b16 %v663
  %v1685 = vunpack.c.h.b16 %v663
  %v1686 = vunpack.c.l.b16 %v664
  %v1687 = vunpack.c.h.b16 %v664
  %v1688 = vunpack.c.l.b16 %v665
  %v1689 = vunpack.c.h.b16 %v665
  %v1690 = vunpack.c.l.b16 %v666
  %v1691 = vunpack.c.h.b16 %v666
  %v1692 = vunpack.c.l.b16 %v667
  %v1693 = vunpack.c.h.b16 %v667
  %v1694 = vunpack.c.l.b16 %v668
  %v1695 = vunpack.c.h.b16 %v668
  %v1696 = vunpack.c.l.b16 %v669
  %v1697 = vunpack.c.l.b16 %v670
  %v1698 = vunpack.c.h.b16 %v670
  %v1699 = vunpack.c.l.b16 %v671
  %v1700 = vunpack.c.h.b16 %v671
  %v1701 = vunpack.c.l.b16 %v672
  %v1702 = vunpack.c.h.b16 %v672
  %v1703 = vunpack.c.l.b16 %v673
  %v1704 = vunpack.c.h.b16 %v673
  %v1705 = vunpack.c.l.b16 %v674
  %v1706 = vunpack.c.h.b16 %v674
  %v1707 = vunpack.c.l.b16 %v675
  %v1708 = vunpack.c.h.b16 %v675
  %v1709 = vunpack.c.l.b16 %v676
  %v1710 = vunpack.c.h.b16 %v676
  %v1711 = vunpack.c.l.b16 %v677
  %v1712 = vunpack.c.l.b16 %v678
  %v1713 = vunpack.c.h.b16 %v678
  %v1714 = vunpack.c.l.b16 %v679
  %v1715 = vunpack.c.h.b16 %v679
  %v1716 = vunpack.c.l.b16 %v680
  %v1717 = vunpack.c.h.b16 %v680
  %v1718 = vunpack.c.l.b16 %v681
  %v1719 = vunpack.c.h.b16 %v681
  %v1720 = vunpack.c.l.b16 %v682
  %v1721 = vunpack.c.h.b16 %v682
  %v1722 = vunpack.c.l.b16 %v683
  %v1723 = vunpack.c.h.b16 %v683
  %v1724 = vunpack.c.l.b16 %v684
  %v1725 = vunpack.c.h.b16 %v684
  %v1726 = vunpack.c.l.b16 %v685
  %v1727 = vunpack.c.l.b16 %v686
  %v1728 = vunpack.c.h.b16 %v686
  %v1729 = vunpack.c.l.b16 %v687
  %v1730 = vunpack.c.h.b16 %v687
  %v1731 = vunpack.c.l.b16 %v688
  %v1732 = vunpack.c.h.b16 %v688
  %v1733 = vunpack.c.l.b16 %v689
  %v1734 = vunpack.c.h.b16 %v689
  %v1735 = vunpack.c.l.b16 %v690
  %v1736 = vunpack.c.h.b16 %v690
  %v1737 = vunpack.c.l.b16 %v691
  %v1738 = vunpack.c.h.b16 %v691
  %v1739 = vunpack.c.l.b16 %v692
  %v1740 = vunpack.c.h.b16 %v692
  %v1741 = vunpack.c.l.b16 %v693
  %v1742 = vunpack.c.l.b16 %v694
  %v1743 = vunpack.c.h.b16 %v694
  %v1744 = vunpack.c.l.b16 %v695
  %v1745 = vunpack.c.h.b16 %v695
  %v1746 = vunpack.c.l.b16 %v696
  %v1747 = vunpack.c.h.b16 %v696
  %v1748 = vunpack.c.l.b16 %v697
  %v1749 = vunpack.c.h.b16 %v697
  %v1750 = vunpack.c.l.b16 %v698
  %v1751 = vunpack.c.h.b16 %v698
  %v1752 = vunpack.c.l.b16 %v699
  %v1753 = vunpack.c.h.b16 %v699
  %v1754 = vunpack.c.l.b16 %v700
  %v1755 = vunpack.c.h.b16 %v700
  %v1756 = vunpack.c.l.b16 %v701
  %v1757 = vunpack.c.l.b16 %v702
  %v1758 = vunpack.c.h.b16 %v702
  %v1759 = vunpack.c.l.b16 %v703
  %v1760 = vunpack.c.h.b16 %v703
  %v1761 = vunpack.c.l.b16 %v704
  %v1762 = vunpack.c.h.b16 %v704
  %v1763 = vunpack.c.l.b16 %v705
  %v1764 = vunpack.c.h.b16 %v705
  %v1765 = vunpack.c.l.b16 %v706
  %v1766 = vunpack.c.h.b16 %v706
  %v1767 = vunpack.c.l.b16 %v707
  %v1768 = vunpack.c.h.b16 %v707
  %v1769 = vunpack.c.l.b16 %v708
  %v1770 = vunpack.c.h.b16 %v708
  %v1771 = vunpack.c.l.b16 %v709
  %v1772 = vunpack.c.l.b16 %v710
  %v1773 = vunpack.c.h.b16 %v710
  %v1774 = vunpack.c.l.b16 %v711
  %v1775 = vunpack.c.h.b16 %v711
  %v1776 = vunpack.c.l.b16 %v712
  %v1777 = vunpack.c.h.b16 %v712
  %v1778 = vunpack.c.l.b16 %v713
  %v1779 = vunpack.c.h.b16 %v713
  %v1780 = vunpack.c.l.b16 %v714
  %v1781 = vunpack.c.h.b16 %v714
  %v1782 = vunpack.c.l.b16 %v715
  %v1783 = vunpack.c.h.b16 %v715
  %v1784 = vunpack.c.l.b16 %v716
  %v1785 = vunpack.c.h.b16 %v716
  %v1786 = vunpack.c.l.b16 %v717
  %v1787 = vunpack.c.l.b16 %v718
  %v1788 = vunpack.c.h.b16 %v718
  %v1789 = vunpack.c.l.b16 %v719
  %v1790 = vunpack.c.h.b16 %v719
  %v1791 = vunpack.c.l.b16 %v720
  %v1792 = vunpack.c.h.b16 %v720
  %v1793 = vunpack.c.l.b16 %v721
  %v1794 = vunpack.c.h.b16 %v721
  %v1795 = vunpack.c.l.b16 %v722
  %v1796 = vunpack.c.h.b16 %v722
  %v1797 = vunpack.c.l.b16 %v723
  %v1798 = vunpack.c.h.b16 %v723
  %v1799 = vunpack.c.l.b16 %v724
  %v1800 = vunpack.c.h.b16 %v724
  %v1801 = vunpack.c.l.b16 %v725
  %v1802 = vunpack.c.l.b16 %v726
  %v1803 = vunpack.c.h.b16 %v726
  %v1804 = vunpack.c.l.b16 %v727
  %v1805 = vunpack.c.h.b16 %v727
  %v1806 = vunpack.c.l.b16 %v728
  %v1807 = vunpack.c.h.b16 %v728
  %v1808 = vunpack.c.l.b16 %v729
  %v1809 = vunpack.c.h.b16 %v729
  %v1810 = vunpack.c.l.b16 %v730
  %v1811 = vunpack.c.h.b16 %v730
  %v1812 = vunpack.c.l.b16 %v731
  %v1813 = vunpack.c.h.b16 %v731
  %v1814 = vunpack.c.l.b16 %v732
  %v1815 = vunpack.c.h.b16 %v732
  %v1816 = vunpack.c.l.b16 %v733
  %v1817 = vunpack.c.l.b16 %v734
  %v1818 = vunpack.c.h.b16 %v734
  %v1819 = vunpack.c.l.b16 %v735
  %v1820 = vunpack.c.h.b16 %v735
  %v1821 = vunpack.c.l.b16 %v736
  %v1822 = vunpack.c.h.b16 %v736
  %v1823 = vunpack.c.l.b16 %v737
  %v1824 = vunpack.c.h.b16 %v737
  %v1825 = vunpack.c.l.b16 %v738
  %v1826 = vunpack.c.h.b16 %v738
  %v1827 = vunpack.c.l.b16 %v739
  %v1828 = vunpack.c.h.b16 %v739
  %v1829 = vunpack.c.l.b16 %v740
  %v1830 = vunpack.c.h.b16 %v740
  %v1831 = vunpack.c.l.b16 %v741
  %v1832 = vunpack.c.l.b16 %v742
  %v1833 = vunpack.c.h.b16 %v742
  %v1834 = vunpack.c.l.b16 %v743
  %v1835 = vunpack.c.h.b16 %v743
  %v1836 = vunpack.c.l.b16 %v744
  %v1837 = vunpack.c.h.b16 %v744
  %v1838 = vunpack.c.l.b16 %v745
  %v1839 = vunpack.c.h.b16 %v745
  %v1840 = vunpack.c.l.b16 %v746
  %v1841 = vunpack.c.h.b16 %v746
  %v1842 = vunpack.c.l.b16 %v747
  %v1843 = vunpack.c.h.b16 %v747
  %v1844 = vunpack.c.l.b16 %v748
  %v1845 = vunpack.c.h.b16 %v748
  %v1846 = vunpack.c.l.b16 %v749
  %v1847 = vunpack.c.l.b16 %v750
  %v1848 = vunpack.c.h.b16 %v750
  %v1849 = vunpack.c.l.b16 %v751
  %v1850 = vunpack.c.h.b16 %v751
  %v1851 = vunpack.c.l.b16 %v752
  %v1852 = vunpack.c.h.b16 %v752
  %v1853 = vunpack.c.l.b16 %v753
  %v1854 = vunpack.c.h.b16 %v753
  %v1855 = vunpack.c.l.b16 %v754
  %v1856 = vunpack.c.h.b16 %v754
  %v1857 = vunpack.c.l.b16 %v755
  %v1858 = vunpack.c.h.b16 %v755
  %v1859 = vunpack.c.l.b16 %v756
  %v1860 = vunpack.c.h.b16 %v756
  %v1861 = vunpack.c.l.b16 %v757
  %v1862 = vunpack.c.l.b16 %v758
  %v1863 = vunpack.c.h.b16 %v758
  %v1864 = vunpack.c.l.b16 %v759
  %v1865 = vunpack.c.h.b16 %v759
  %v1866 = vunpack.c.l.b16 %v760
  %v1867 = vunpack.c.h.b16 %v760
  %v1868 = vunpack.c.l.b16 %v761
  %v1869 = vunpack.c.h.b16 %v761
  %v1870 = vunpack.c.l.b16 %v762
  %v1871 = vunpack.c.h.b16 %v762
  %v1872 = vunpack.c.l.b16 %v763
  %v1873 = vunpack.c.h.b16 %v763
  %v1874 = vunpack.c.l.b16 %v764
  %v1875 = vunpack.c.h.b16 %v764
  %v1876 = vunpack.c.l.b16 %v765
  %v1877 = vunpack.c.l.b16 %v766
  %v1878 = vunpack.c.h.b16 %v766
  %v1879 = vunpack.c.l.b16 %v767
  %v1880 = vunpack.c.h.b16 %v767
  %v1881 = vunpack.c.l.b16 %v768
  %v1882 = vunpack.c.h.b16 %v768
  %v1883 = vunpack.c.l.b16 %v769
  %v1884 = vunpack.c.h.b16 %v769
  %v1885 = vunpack.c.l.b16 %v770
  %v1886 = vunpack.c.h.b16 %v770
  %v1887 = vunpack.c.l.b16 %v771
  %v1888 = vunpack.c.h.b16 %v771
  %v1889 = vunpack.c.l.b16 %v772
  %v1890 = vunpack.c.h.b16 %v772
  %v1891 = vunpack.c.l.b16 %v773
  %v1892 = vunpack.c.l.b16 %v774
  %v1893 = vunpack.c.h.b16 %v774
  %v1894 = vunpack.c.l.b16 %v775
  %v1895 = vunpack.c.h.b16 %v775
  %v1896 = vunpack.c.l.b16 %v776
  %v1897 = vunpack.c.h.b16 %v776
  %v1898 = vunpack.c.l.b16 %v777
  %v1899 = vunpack.c.h.b16 %v777
  %v1900 = vunpack.c.l.b16 %v778
  %v1901 = vunpack.c.h.b16 %v778
  %v1902 = vunpack.c.l.b16 %v779
  %v1903 = vunpack.c.h.b16 %v779
  %v1904 = vunpack.c.l.b16 %v780
  %v1905 = vunpack.c.h.b16 %v780
  %v1906 = vunpack.c.l.b16 %v781
  %v1907 = vunpack.c.l.b16 %v782
  %v1908 = vunpack.c.h.b16 %v782
  %v1909 = vunpack.c.l.b16 %v783
  %v1910 = vunpack.c.h.b16 %v783
  %v1911 = vunpack.c.l.b16 %v784
  %v1912 = vunpack.c.h.b16 %v784
  %v1913 = vunpack.c.l.b16 %v785
  %v1914 = vunpack.c.h.b16 %v785
  %v1915 = vunpack.c.l.b16 %v786
  %v1916 = vunpack.c.h.b16 %v786
  %v1917 = vunpack.c.l.b16 %v787
  %v1918 = vunpack.c.h.b16 %v787
  %v1919 = vunpack.c.l.b16 %v788
  %v1920 = vunpack.c.h.b16 %v788
  %v1921 = vunpack.c.l.b16 %v789
  %v1922 = vunpack.c.l.b16 %v790
  %v1923 = vunpack.c.h.b16 %v790
  %v1924 = vunpack.c.l.b16 %v791
  %v1925 = vunpack.c.h.b16 %v791
  %v1926 = vunpack.c.l.b16 %v792
  %v1927 = vunpack.c.h.b16 %v792
  %v1928 = vunpack.c.l.b16 %v793
  %v1929 = vunpack.c.h.b16 %v793
  %v1930 = vunpack.c.l.b16 %v794
  %v1931 = vunpack.c.h.b16 %v794
  %v1932 = vunpack.c.l.b16 %v795
  %v1933 = vunpack.c.h.b16 %v795
  %v1934 = vunpack.c.l.b16 %v796
  %v1935 = vunpack.c.h.b16 %v796
  %v1936 = vunpack.c.l.b16 %v797
  %v1937 = vunpack.c.l.b16 %v798
  %v1938 = vunpack.c.h.b16 %v798
  %v1939 = vunpack.c.l.b16 %v799
  %v1940 = vunpack.c.h.b16 %v799
  %v1941 = vunpack.c.l.b16 %v800
  %v1942 = vunpack.c.h.b16 %v800
  %v1943 = vunpack.c.l.b16 %v801
  %v1944 = vunpack.c.h.b16 %v801
  %v1945 = vunpack.c.l.b16 %v802
  %v1946 = vunpack.c.h.b16 %v802
  %v1947 = vunpack.c.l.b16 %v803
  %v1948 = vunpack.c.h.b16 %v803
  %v1949 = vunpack.c.l.b16 %v804
  %v1950 = vunpack.c.h.b16 %v804
  %v1951 = vunpack.c.l.b16 %v805
  %v1952 = vunpack.c.l.b16 %v806
  %v1953 = vunpack.c.h.b16 %v806
  %v1954 = vunpack.c.l.b16 %v807
  %v1955 = vunpack.c.h.b16 %v807
  %v1956 = vunpack.c.l.b16 %v808
  %v1957 = vunpack.c.h.b16 %v808
  %v1958 = vunpack.c.l.b16 %v809
  %v1959 = vunpack.c.h.b16 %v809
  %v1960 = vunpack.c.l.b16 %v810
  %v1961 = vunpack.c.h.b16 %v810
  %v1962 = vunpack.c.l.b16 %v811
  %v1963 = vunpack.c.h.b16 %v811
  %v1964 = vunpack.c.l.b16 %v812
  %v1965 = vunpack.c.h.b16 %v812
  %v1966 = vunpack.c.l.b16 %v813
  %v1967 = vunpack.c.l.b16 %v814
  %v1968 = vunpack.c.h.b16 %v814
  %v1969 = vunpack.c.l.b16 %v815
  %v1970 = vunpack.c.h.b16 %v815
  %v1971 = vunpack.c.l.b16 %v816
  %v1972 = vunpack.c.h.b16 %v816
  %v1973 = vunpack.c.l.b16 %v817
  %v1974 = vunpack.c.h.b16 %v817
  %v1975 = vunpack.c.l.b16 %v818
  %v1976 = vunpack.c.h.b16 %v818
  %v1977 = vunpack.c.l.b16 %v819
  %v1978 = vunpack.c.h.b16 %v819
  %v1979 = vunpack.c.l.b16 %v820
  %v1980 = vunpack.c.h.b16 %v820
  %v1981 = vunpack.c.l.b16 %v821
  %v1982 = vunpack.c.l.b16 %v822
  %v1983 = vunpack.c.h.b16 %v822
  %v1984 = vunpack.c.l.b16 %v823
  %v1985 = vunpack.c.h.b16 %v823
  %v1986 = vunpack.c.l.b16 %v824
  %v1987 = vunpack.c.h.b16 %v824
  %v1988 = vunpack.c.l.b16 %v825
  %v1989 = vunpack.c.h.b16 %v825
  %v1990 = vunpack.c.l.b16 %v826
  %v1991 = vunpack.c.h.b16 %v826
  %v1992 = vunpack.c.l.b16 %v827
  %v1993 = vunpack.c.h.b16 %v827
  %v1994 = vunpack.c.l.b16 %v828
  %v1995 = vunpack.c.h.b16 %v828
  %v1996 = vunpack.c.l.b16 %v829
  %v1997 = vunpack.c.l.b16 %v830
  %v1998 = vunpack.c.h.b16 %v830
  %v1999 = vunpack.c.l.b16 %v831
  %v2000 = vunpack.c.h.b16 %v831
  %v2001 = vunpack.c.l.b16 %v832
  %v2002 = vunpack.c.h.b16 %v832
  %v2003 = vunpack.c.l.b16 %v833
  %v2004 = vunpack.c.h.b16 %v833
  %v2005 = vunpack.c.l.b16 %v834
  %v2006 = vunpack.c.h.b16 %v834
  %v2007 = vunpack.c.l.b16 %v835
  %v2008 = vunpack.c.h.b16 %v835
  %v2009 = vunpack.c.l.b16 %v836
  %v2010 = vunpack.c.h.b16 %v836
  %v2011 = vunpack.c.l.b16 %v837
  %v2012 = vunpack.c.l.b16 %v838
  %v2013 = vunpack.c.h.b16 %v838
  %v2014 = vunpack.c.l.b16 %v839
  %v2015 = vunpack.c.h.b16 %v839
  %v2016 = vunpack.c.l.b16 %v840
  %v2017 = vunpack.c.h.b16 %v840
  %v2018 = vunpack.c.l.b16 %v841
  %v2019 = vunpack.c.h.b16 %v841
  %v2020 = vunpack.c.l.b16 %v842
  %v2021 = vunpack.c.h.b16 %v842
  %v2022 = vunpack.c.l.b16 %v843
  %v2023 = vunpack.c.h.b16 %v843
  %v2024 = vunpack.c.l.b16 %v844
  %v2025 = vunpack.c.h.b16 %v844
  %v2026 = vunpack.c.l.b16 %v845
  %v2027 = vunpack.c.l.b16 %v846
  %v2028 = vunpack.c.h.b16 %v846
  %v2029 = vunpack.c.l.b16 %v847
  %v2030 = vunpack.c.h.b16 %v847
  %v2031 = vunpack.c.l.b16 %v848
  %v2032 = vunpack.c.h.b16 %v848
  %v2033 = vunpack.c.l.b16 %v849
  %v2034 = vunpack.c.h.b16 %v849
  %v2035 = vunpack.c.l.b16 %v850
  %v2036 = vunpack.c.h.b16 %v850
  %v2037 = vunpack.c.l.b16 %v851
  %v2038 = vunpack.c.h.b16 %v851
  %v2039 = vunpack.c.l.b16 %v852
  %v2040 = vunpack.c.h.b16 %v852
  %v2041 = vunpack.c.l.b16 %v853
  %v2042 = vunpack.c.l.b16 %v854
  %v2043 = vunpack.c.h.b16 %v854
  %v2044 = vunpack.c.l.b16 %v855
  %v2045 = vunpack.c.h.b16 %v855
  %v2046 = vunpack.c.l.b16 %v856
  %v2047 = vunpack.c.h.b16 %v856
  %v2048 = vunpack.c.l.b16 %v857
  %v2049 = vunpack.c.h.b16 %v857
  %v2050 = vunpack.c.l.b16 %v858
  %v2051 = vunpack.c.h.b16 %v858
  %v2052 = vunpack.c.l.b16 %v859
  %v2053 = vunpack.c.h.b16 %v859
  %v2054 = vunpack.c.l.b16 %v860
  %v2055 = vunpack.c.h.b16 %v860
  %v2056 = vunpack.c.l.b16 %v861
  %v2057 = vunpack.c.l.b16 %v862
  %v2058 = vunpack.c.h.b16 %v862
  %v2059 = vunpack.c.l.b16 %v863
  %v2060 = vunpack.c.h.b16 %v863
  %v2061 = vunpack.c.l.b16 %v864
  %v2062 = vunpack.c.h.b16 %v864
  %v2063 = vunpack.c.l.b16 %v865
  %v2064 = vunpack.c.h.b16 %v865
  %v2065 = vunpack.c.l.b16 %v866
  %v2066 = vunpack.c.h.b16 %v866
  %v2067 = vunpack.c.l.b16 %v867
  %v2068 = vunpack.c.h.b16 %v867
  %v2069 = vunpack.c.l.b16 %v868
  %v2070 = vunpack.c.h.b16 %v868
  %v2071 = vunpack.c.l.b16 %v869
  %v2072 = vunpack.c.l.b16 %v870
  %v2073 = vunpack.c.h.b16 %v870
  %v2074 = vunpack.c.l.b16 %v871
  %v2075 = vunpack.c.h.b16 %v871
  %v2076 = vunpack.c.l.b16 %v872
  %v2077 = vunpack.c.h.b16 %v872
  %v2078 = vunpack.c.l.b16 %v873
  %v2079 = vunpack.c.h.b16 %v873
  %v2080 = vunpack.c.l.b16 %v874
  %v2081 = vunpack.c.h.b16 %v874
  %v2082 = vunpack.c.l.b16 %v875
  %v2083 = vunpack.c.h.b16 %v875
  %v2084 = vunpack.c.l.b16 %v876
  %v2085 = vunpack.c.h.b16 %v876
  %v2086 = vunpack.c.l.b16 %v877
  %v2087 = vunpack.c.l.b16 %v878
  %v2088 = vunpack.c.h.b16 %v878
  %v2089 = vunpack.c.l.b16 %v879
  %v2090 = vunpack.c.h.b16 %v879
  %v2091 = vunpack.c.l.b16 %v880
  %v2092 = vunpack.c.h.b16 %v880
  %v2093 = vunpack.c.l.b16 %v881
  %v2094 = vunpack.c.h.b16 %v881
  %v2095 = vunpack.c.l.b16 %v882
  %v2096 = vunpack.c.h.b16 %v882
  %v2097 = vunpack.c.l.b16 %v883
  %v2098 = vunpack.c.h.b16 %v883
  %v2099 = vunpack.c.l.b16 %v884
  %v2100 = vunpack.c.h.b16 %v884
  %v2101 = vunpack.c.l.b16 %v885
  %v2102 = vpack.c.b16 %v1547, %v1532
  %v2103 = vpack.c.b16 %v1548, %v1533
  %v2104 = vpack.c.b16 %v1549, %v1534
  %v2105 = vpack.c.b16 %v1550, %v1535
  %v2106 = vpack.c.b16 %v1551, %v1536
  %v2107 = vpack.c.b16 %v1552, %v1537
  %v2108 = vpack.c.b16 %v1553, %v1538
  %v2109 = vpack.c.b16 %v1554, %v1539
  %v2110 = vpack.c.b16 %v1555, %v1540
  %v2111 = vpack.c.b16 %v1556, %v1541
  %v2112 = vpack.c.b16 %v1557, %v1542
  %v2113 = vpack.c.b16 %v1558, %v1543
  %v2114 = vpack.c.b16 %v1559, %v1544
  %v2115 = vpack.c.b16 %v1560, %v1545
  %v2116 = vpack.c.b16 %v1561, %v1546
  %v2117 = vpack.c.b16 %v1577, %v1562
  %v2118 = vpack.c.b16 %v1578, %v1563
  %v2119 = vpack.c.b16 %v1579, %v1564
  %v2120 = vpack.c.b16 %v1580, %v1565
  %v2121 = vpack.c.b16 %v1581, %v1566
  %v2122 = vpack.c.b16 %v1582, %v1567
  %v2123 = vpack.c.b16 %v1583, %v1568
  %v2124 = vpack.c.b16 %v1584, %v1569
  %v2125 = vpack.c.b16 %v1585, %v1570
  %v2126 = vpack.c.b16 %v1586, %v1571
  %v2127 = vpack.c.b16 %v1587, %v1572
  %v2128 = vpack.c.b16 %v1588, %v1573
  %v2129 = vpack.c.b16 %v1589, %v1574
  %v2130 = vpack.c.b16 %v1590, %v1575
  %v2131 = vpack.c.b16 %v1591, %v1576
  %v2132 = vpack.c.b16 %v1607, %v1592
  %v2133 = vpack.c.b16 %v1608, %v1593
  %v2134 = vpack.c.b16 %v1609, %v1594
  %v2135 = vpack.c.b16 %v1610, %v1595
  %v2136 = vpack.c.b16 %v1611, %v1596
  %v2137 = vpack.c.b16 %v1612, %v1597
  %v2138 = vpack.c.b16 %v1613, %v1598
  %v2139 = vpack.c.b16 %v1614, %v1599
  %v2140 = vpack.c.b16 %v1615, %v1600
  %v2141 = vpack.c.b16 %v1616, %v1601
  %v2142 = vpack.c.b16 %v1617, %v1602
  %v2143 = vpack.c.b16 %v1618, %v1603
  %v2144 = vpack.c.b16 %v1619, %v1604
  %v2145 = vpack.c.b16 %v1620, %v1605
  %v2146 = vpack.c.b16 %v1621, %v1606
  %v2147 = vpack.c.b16 %v1637, %v1622
  %v2148 = vpack.c.b16 %v1638, %v1623
  %v2149 = vpack.c.b16 %v1639, %v1624
  %v2150 = vpack.c.b16 %v1640, %v1625
  %v2151 = vpack.c.b16 %v1641, %v1626
  %v2152 = vpack.c.b16 %v1642, %v1627
  %v2153 = vpack.c.b16 %v1643, %v1628
  %v2154 = vpack.c.b16 %v1644, %v1629
  %v2155 = vpack.c.b16 %v1645, %v1630
  %v2156 = vpack.c.b16 %v1646, %v1631
  %v2157 = vpack.c.b16 %v1647, %v1632
  %v2158 = vpack.c.b16 %v1648, %v1633
  %v2159 = vpack.c.b16 %v1649, %v1634
  %v2160 = vpack.c.b16 %v1650, %v1635
  %v2161 = vpack.c.b16 %v1651, %v1636
  %v2162 = vpack.c.b16 %v1667, %v1652
  %v2163 = vpack.c.b16 %v1668, %v1653
  %v2164 = vpack.c.b16 %v1669, %v1654
  %v2165 = vpack.c.b16 %v1670, %v1655
  %v2166 = vpack.c.b16 %v1671, %v1656
  %v2167 = vpack.c.b16 %v1672, %v1657
  %v2168 = vpack.c.b16 %v1673, %v1658
  %v2169 = vpack.c.b16 %v1674, %v1659
  %v2170 = vpack.c.b16 %v1675, %v1660
  %v2171 = vpack.c.b16 %v1676, %v1661
  %v2172 = vpack.c.b16 %v1677, %v1662
  %v2173 = vpack.c.b16 %v1678, %v1663
  %v2174 = vpack.c.b16 %v1679, %v1664
  %v2175 = vpack.c.b16 %v1680, %v1665
  %v2176 = vpack.c.b16 %v1681, %v1666
  %v2177 = vpack.c.b16 %v1697, %v1682
  %v2178 = vpack.c.b16 %v1698, %v1683
  %v2179 = vpack.c.b16 %v1699, %v1684
  %v2180 = vpack.c.b16 %v1700, %v1685
  %v2181 = vpack.c.b16 %v1701, %v1686
  %v2182 = vpack.c.b16 %v1702, %v1687
  %v2183 = vpack.c.b16 %v1703, %v1688
  %v2184 = vpack.c.b16 %v1704, %v1689
  %v2185 = vpack.c.b16 %v1705, %v1690
  %v2186 = vpack.c.b16 %v1706, %v1691
  %v2187 = vpack.c.b16 %v1707, %v1692
  %v2188 = vpack.c.b16 %v1708, %v1693
  %v2189 = vpack.c.b16 %v1709, %v1694
  %v2190 = vpack.c.b16 %v1710, %v1695
  %v2191 = vpack.c.b16 %v1711, %v1696
  %v2192 = vpack.c.b16 %v1727, %v1712
  %v2193 = vpack.c.b16 %v1728, %v1713
  %v2194 = vpack.c.b16 %v1729, %v1714
  %v2195 = vpack.c.b16 %v1730, %v1715
  %v2196 = vpack.c.b16 %v1731, %v1716
  %v2197 = vpack.c.b16 %v1732, %v1717
  %v2198 = vpack.c.b16 %v1733, %v1718
  %v2199 = vpack.c.b16 %v1734, %v1719
  %v2200 = vpack.c.b16 %v1735, %v1720
  %v2201 = vpack.c.b16 %v1736, %v1721
  %v2202 = vpack.c.b16 %v1737, %v1722
  %v2203 = vpack.c.b16 %v1738, %v1723
  %v2204 = vpack.c.b16 %v1739, %v1724
  %v2205 = vpack.c.b16 %v1740, %v1725
  %v2206 = vpack.c.b16 %v1741, %v1726
  %v2207 = vpack.c.b16 %v1757, %v1742
  %v2208 = vpack.c.b16 %v1758, %v1743
  %v2209 = vpack.c.b16 %v1759, %v1744
  %v2210 = vpack.c.b16 %v1760, %v1745
  %v2211 = vpack.c.b16 %v1761, %v1746
  %v2212 = vpack.c.b16 %v1762, %v1747
  %v2213 = vpack.c.b16 %v1763, %v1748
  %v2214 = vpack.c.b16 %v1764, %v1749
  %v2215 = vpack.c.b16 %v1765, %v1750
  %v2216 = vpack.c.b16 %v1766, %v1751
  %v2217 = vpack.c.b16 %v1767, %v1752
  %v2218 = vpack.c.b16 %v1768, %v1753
  %v2219 = vpack.c.b16 %v1769, %v1754
  %v2220 = vpack.c.b16 %v1770, %v1755
  %v2221 = vpack.c.b16 %v1771, %v1756
  %v2222 = vpack.c.b16 %v1787, %v1772
  %v2223 = vpack.c.b16 %v1788, %v1773
  %v2224 = vpack.c.b16 %v1789, %v1774
  %v2225 = vpack.c.b16 %v1790, %v1775
  %v2226 = vpack.c.b16 %v1791, %v1776
  %v2227 = vpack.c.b16 %v1792, %v1777
  %v2228 = vpack.c.b16 %v1793, %v1778
  %v2229 = vpack.c.b16 %v1794, %v1779
  %v2230 = vpack.c.b16 %v1795, %v1780
  %v2231 = vpack.c.b16 %v1796, %v1781
  %v2232 = vpack.c.b16 %v1797, %v1782
  %v2233 = vpack.c.b16 %v1798, %v1783
  %v2234 = vpack.c.b16 %v1799, %v1784
  %v2235 = vpack.c.b16 %v1800, %v1785
  %v2236 = vpack.c.b16 %v1801, %v1786
  %v2237 = vpack.c.b16 %v1817, %v1802
  %v2238 = vpack.c.b16 %v1818, %v1803
  %v2239 = vpack.c.b16 %v1819, %v1804
  %v2240 = vpack.c.b16 %v1820, %v1805
  %v2241 = vpack.c.b16 %v1821, %v1806
  %v2242 = vpack.c.b16 %v1822, %v1807
  %v2243 = vpack.c.b16 %v1823, %v1808
  %v2244 = vpack.c.b16 %v1824, %v1809
  %v2245 = vpack.c.b16 %v1825, %v1810
  %v2246 = vpack.c.b16 %v1826, %v1811
  %v2247 = vpack.c.b16 %v1827, %v1812
  %v2248 = vpack.c.b16 %v1828, %v1813
  %v2249 = vpack.c.b16 %v1829, %v1814
  %v2250 = vpack.c.b16 %v1830, %v1815
  %v2251 = vpack.c.b16 %v1831, %v1816
  %v2252 = vpack.c.b16 %v1847, %v1832
  %v2253 = vpack.c.b16 %v1848, %v1833
  %v2254 = vpack.c.b16 %v1849, %v1834
  %v2255 = vpack.c.b16 %v1850, %v1835
  %v2256 = vpack.c.b16 %v1851, %v1836
  %v2257 = vpack.c.b16 %v1852, %v1837
  %v2258 = vpack.c.b16 %v1853, %v1838
  %v2259 = vpack.c.b16 %v1854, %v1839
  %v2260 = vpack.c.b16 %v1855, %v1840
  %v2261 = vpack.c.b16 %v1856, %v1841
  %v2262 = vpack.c.b16 %v1857, %v1842
  %v2263 = vpack.c.b16 %v1858, %v1843
  %v2264 = vpack.c.b16 %v1859, %v1844
  %v2265 = vpack.c.b16 %v1860, %v1845
  %v2266 = vpack.c.b16 %v1861, %v1846
  %v2267 = vpack.c.b16 %v1877, %v1862
  %v2268 = vpack.c.b16 %v1878, %v1863
  %v2269 = vpack.c.b16 %v1879, %v1864
  %v2270 = vpack.c.b16 %v1880, %v1865
  %v2271 = vpack.c.b16 %v1881, %v1866
  %v2272 = vpack.c.b16 %v1882, %v1867
  %v2273 = vpack.c.b16 %v1883, %v1868
  %v2274 = vpack.c.b16 %v1884, %v1869
  %v2275 = vpack.c.b16 %v1885, %v1870
  %v2276 = vpack.c.b16 %v1886, %v1871
  %v2277 = vpack.c.b16 %v1887, %v1872
  %v2278 = vpack.c.b16 %v1888, %v1873
  %v2279 = vpack.c.b16 %v1889, %v1874
  %v2280 = vpack.c.b16 %v1890, %v1875
  %v2281 = vpack.c.b16 %v1891, %v1876
  %v2282 = vpack.c.b16 %v1907, %v1892
  %v2283 = vpack.c.b16 %v1908, %v1893
  %v2284 = vpack.c.b16 %v1909, %v1894
  %v2285 = vpack.c.b16 %v1910, %v1895
  %v2286 = vpack.c.b16 %v1911, %v1896
  %v2287 = vpack.c.b16 %v1912, %v1897
  %v2288 = vpack.c.b16 %v1913, %v1898
  %v2289 = vpack.c.b16 %v1914, %v1899
  %v2290 = vpack.c.b16 %v1915, %v1900
  %v2291 = vpack.c.b16 %v1916, %v1901
  %v2292 = vpack.c.b16 %v1917, %v1902
  %v2293 = vpack.c.b16 %v1918, %v1903
  %v2294 = vpack.c.b16 %v1919, %v1904
  %v2295 = vpack.c.b16 %v1920, %v1905
  %v2296 = vpack.c.b16 %v1921, %v1906
  %v2297 = vpack.c.b16 %v1937, %v1922
  %v2298 = vpack.c.b16 %v1938, %v1923
  %v2299 = vpack.c.b16 %v1939, %v1924
  %v2300 = vpack.c.b16 %v1940, %v1925
  %v2301 = vpack.c.b16 %v1941, %v1926
  %v2302 = vpack.c.b16 %v1942, %v1927
  %v2303 = vpack.c.b16 %v1943, %v1928
  %v2304 = vpack.c.b16 %v1944, %v1929
  %v2305 = vpack.c.b16 %v1945, %v1930
  %v2306 = vpack.c.b16 %v1946, %v1931
  %v2307 = vpack.c.b16 %v1947, %v1932
  %v2308 = vpack.c.b16 %v1948, %v1933
  %v2309 = vpack.c.b16 %v1949, %v1934
  %v2310 = vpack.c.b16 %v1950, %v1935
  %v2311 = vpack.c.b16 %v1951, %v1936
  %v2312 = vpack.c.b16 %v1967, %v1952
  %v2313 = vpack.c.b16 %v1968, %v1953
  %v2314 = vpack.c.b16 %v1969, %v1954
  %v2315 = vpack.c.b16 %v1970, %v1955
  %v2316 = vpack.c.b16 %v1971, %v1956
  %v2317 = vpack.c.b16 %v1972, %v1957
  %v2318 = vpack.c.b16 %v1973, %v1958
  %v2319 = vpack.c.b16 %v1974, %v1959
  %v2320 = vpack.c.b16 %v1975, %v1960
  %v2321 = vpack.c.b16 %v1976, %v1961
  %v2322 = vpack.c.b16 %v1977, %v1962
  %v2323 = vpack.c.b16 %v1978, %v1963
  %v2324 = vpack.c.b16 %v1979, %v1964
  %v2325 = vpack.c.b16 %v1980, %v1965
  %v2326 = vpack.c.b16 %v1981, %v1966
  %v2327 = vpack.c.b16 %v1997, %v1982
  %v2328 = vpack.c.b16 %v1998, %v1983
  %v2329 = vpack.c.b16 %v1999, %v1984
  %v2330 = vpack.c.b16 %v2000, %v1985
  %v2331 = vpack.c.b16 %v2001, %v1986
  %v2332 = vpack.c.b16 %v2002, %v1987
  %v2333 = vpack.c.b16 %v2003, %v1988
  %v2334 = vpack.c.b16 %v2004, %v1989
  %v2335 = vpack.c.b16 %v2005, %v1990
  %v2336 = vpack.c.b16 %v2006, %v1991
  %v2337 = vpack.c.b16 %v2007, %v1992
  %v2338 = vpack.c.b16 %v2008, %v1993
  %v2339 = vpack.c.b16 %v2009, %v1994
  %v2340 = vpack.c.b16 %v2010, %v1995
  %v2341 = vpack.c.b16 %v2011, %v1996
  %v2342 = vpack.c.b16 %v2027, %v2012
  %v2343 = vpack.c.b16 %v2028, %v2013
  %v2344 = vpack.c.b16 %v2029, %v2014
  %v2345 = vpack.c.b16 %v2030, %v2015
  %v2346 = vpack.c.b16 %v2031, %v2016
  %v2347 = vpack.c.b16 %v2032, %v2017
  %v2348 = vpack.c.b16 %v2033, %v2018
  %v2349 = vpack.c.b16 %v2034, %v2019
  %v2350 = vpack.c.b16 %v2035, %v2020
  %v2351 = vpack.c.b16 %v2036, %v2021
  %v2352 = vpack.c.b16 %v2037, %v2022
  %v2353 = vpack.c.b16 %v2038, %v2023
  %v2354 = vpack.c.b16 %v2039, %v2024
  %v2355 = vpack.c.b16 %v2040, %v2025
  %v2356 = vpack.c.b16 %v2041, %v2026
  %v2357 = vpack.c.b16 %v2057, %v2042
  %v2358 = vpack.c.b16 %v2058, %v2043
  %v2359 = vpack.c.b16 %v2059, %v2044
  %v2360 = vpack.c.b16 %v2060, %v2045
  %v2361 = vpack.c.b16 %v2061, %v2046
  %v2362 = vpack.c.b16 %v2062, %v2047
  %v2363 = vpack.c.b16 %v2063, %v2048
  %v2364 = vpack.c.b16 %v2064, %v2049
  %v2365 = vpack.c.b16 %v2065, %v2050
  %v2366 = vpack.c.b16 %v2066, %v2051
  %v2367 = vpack.c.b16 %v2067, %v2052
  %v2368 = vpack.c.b16 %v2068, %v2053
  %v2369 = vpack.c.b16 %v2069, %v2054
  %v2370 = vpack.c.b16 %v2070, %v2055
  %v2371 = vpack.c.b16 %v2071, %v2056
  %v2372 = vpack.c.b16 %v2087, %v2072
  %v2373 = vpack.c.b16 %v2088, %v2073
  %v2374 = vpack.c.b16 %v2089, %v2074
  %v2375 = vpack.c.b16 %v2090, %v2075
  %v2376 = vpack.c.b16 %v2091, %v2076
  %v2377 = vpack.c.b16 %v2092, %v2077
  %v2378 = vpack.c.b16 %v2093, %v2078
  %v2379 = vpack.c.b16 %v2094, %v2079
  %v2380 = vpack.c.b16 %v2095, %v2080
  %v2381 = vpack.c.b16 %v2096, %v2081
  %v2382 = vpack.c.b16 %v2097, %v2082
  %v2383 = vpack.c.b16 %v2098, %v2083
  %v2384 = vpack.c.b16 %v2099, %v2084
  %v2385 = vpack.c.b16 %v2100, %v2085
  %v2386 = vpack.c.b16 %v2101, %v2086
  %vm2653 = vcmask 261120
  %v2655 = vsel %vm2653, %v2116, 0
  %v2658 = vsel %vm2653, %v2131, 0
  %v2661 = vsel %vm2653, %v2146, 0
  %v2664 = vsel %vm2653, %v2161, 0
  %v2667 = vsel %vm2653, %v2176, 0
  %v2670 = vsel %vm2653, %v2191, 0
  %v2673 = vsel %vm2653, %v2206, 0
  %v2676 = vsel %vm2653, %v2221, 0
  %v2679 = vsel %vm2653, %v2236, 0
  %v2682 = vsel %vm2653, %v2251, 0
  %v2685 = vsel %vm2653, %v2266, 0
  %v2688 = vsel %vm2653, %v2281, 0
  %v2691 = vsel %vm2653, %v2296, 0
  %v2694 = vsel %vm2653, %v2311, 0
  %v2697 = vsel %vm2653, %v2326, 0
  %v2700 = vsel %vm2653, %v2341, 0
  %v2703 = vsel %vm2653, %v2356, 0
  %v2706 = vsel %vm2653, %v2371, 0
  %v2709 = vsel %vm2653, %v2386, 0
  %2711 = vmatprep.subr.bf16.mxu0 0
  %2712 = vmatpush1.bf16.msra.mxu0 %v1114
  %2713 = vmatprep.subr.bf16.mxu0 0
  %2714 = vmatpush1.bf16.msra.mxu0 %v1115
  %2715 = vmatprep.subr.bf16.mxu0 0
  %2716 = vmatpush1.bf16.msra.mxu0 %v1116
  %2717 = vmatprep.subr.bf16.mxu0 0
  %2718 = vmatpush1.bf16.msra.mxu0 %v1117
  %2719 = vmatprep.subr.bf16.mxu0 0
  %2720 = vmatpush1.bf16.msra.mxu0 %v1118
  %2721 = vmatprep.subr.bf16.mxu0 0
  %2722 = vmatpush1.bf16.msra.mxu0 %v1119
  %2723 = vmatprep.subr.bf16.mxu0 0
  %2724 = vmatpush1.bf16.msra.mxu0 %v1120
  %2725 = vmatprep.subr.bf16.mxu0 0
  %2726 = vmatpush1.bf16.msra.mxu0 %v1121
  %2727 = vmatprep.subr.bf16.mxu0 0
  %2728 = vmatpush1.bf16.msra.mxu0 %v1122
  %2729 = vmatprep.subr.bf16.mxu0 0
  %2730 = vmatpush1.bf16.msra.mxu0 %v1123
  %2731 = vmatprep.subr.bf16.mxu0 0
  %2732 = vmatpush1.bf16.msra.mxu0 %v1124
  %2733 = vmatprep.subr.bf16.mxu0 0
  %2734 = vmatpush1.bf16.msra.mxu0 %v1125
  %2735 = vmatprep.subr.bf16.mxu0 0
  %2736 = vmatpush1.bf16.msra.mxu0 %v1126
  %2737 = vmatprep.subr.bf16.mxu0 0
  %2738 = vmatpush1.bf16.msra.mxu0 %v1127
  %2739 = vmatprep.subr.bf16.mxu0 0
  %2740 = vmatpush1.bf16.msra.mxu0 %v1128
  %2741 = vmatprep.subr.bf16.mxu0 0
  %2742 = vmatpush1.bf16.msra.mxu0 %v1129
  %2743 = vmatprep.mubr.bf16.mxu0 %v2103
  %2744 = vmatmul.mubr.bf16.gmra.mrb[0].mxu0 %v2102
  %v2745 = vpop.f32.mrb[0].mxu0
  %v2746 = vadd.f32 0.0, %v2745
  %v2747 = vpop.f32.mrb[0].mxu0
  %v2748 = vpop.f32.mrb[0].mxu0
  %v2749 = vadd.f32 0.0, %v2748
  %v2750 = vpop.f32.mrb[0].mxu0
  %2751 = vmatprep.mubr.bf16.mxu0 %v2118
  %2752 = vmatmul.mubr.bf16.gmra.mrb[0].mxu0 %v2117
  %v2753 = vpop.f32.mrb[0].mxu0
  %v2754 = vadd.f32 0.0, %v2753
  %v2755 = vpop.f32.mrb[0].mxu0
  %v2756 = vpop.f32.mrb[0].mxu0
  %v2757 = vadd.f32 0.0, %v2756
  %v2758 = vpop.f32.mrb[0].mxu0
  %2759 = vmatprep.mubr.bf16.mxu0 %v2133
  %2760 = vmatmul.mubr.bf16.gmra.mrb[0].mxu0 %v2132
  %v2761 = vpop.f32.mrb[0].mxu0
  %v2762 = vadd.f32 0.0, %v2761
  %v2763 = vpop.f32.mrb[0].mxu0
  %v2764 = vpop.f32.mrb[0].mxu0
  %v2765 = vadd.f32 0.0, %v2764
  %v2766 = vpop.f32.mrb[0].mxu0
  %2767 = vmatprep.mubr.bf16.mxu0 %v2148
  %2768 = vmatmul.mubr.bf16.gmra.mrb[0].mxu0 %v2147
  %v2769 = vpop.f32.mrb[0].mxu0
  %v2770 = vadd.f32 0.0, %v2769
  %v2771 = vpop.f32.mrb[0].mxu0
  %v2772 = vpop.f32.mrb[0].mxu0
  %v2773 = vadd.f32 0.0, %v2772
  %v2774 = vpop.f32.mrb[0].mxu0
  %2775 = vmatprep.mubr.bf16.mxu0 %v2163
  %2776 = vmatmul.mubr.bf16.gmra.mrb[0].mxu0 %v2162
  %v2777 = vpop.f32.mrb[0].mxu0
  %v2778 = vadd.f32 0.0, %v2777
  %v2779 = vpop.f32.mrb[0].mxu0
  %v2780 = vpop.f32.mrb[0].mxu0
  %v2781 = vadd.f32 0.0, %v2780
  %v2782 = vpop.f32.mrb[0].mxu0
  %2783 = vmatprep.mubr.bf16.mxu0 %v2178
  %2784 = vmatmul.mubr.bf16.gmra.mrb[0].mxu0 %v2177
  %v2785 = vpop.f32.mrb[0].mxu0
  %v2786 = vadd.f32 0.0, %v2785
  %v2787 = vpop.f32.mrb[0].mxu0
  %v2788 = vpop.f32.mrb[0].mxu0
  %v2789 = vadd.f32 0.0, %v2788
  %v2790 = vpop.f32.mrb[0].mxu0
  %2791 = vmatprep.mubr.bf16.mxu0 %v2193
  %2792 = vmatmul.mubr.bf16.gmra.mrb[0].mxu0 %v2192
  %v2793 = vpop.f32.mrb[0].mxu0
  %v2794 = vadd.f32 0.0, %v2793
  %v2795 = vpop.f32.mrb[0].mxu0
  %v2796 = vpop.f32.mrb[0].mxu0
  %v2797 = vadd.f32 0.0, %v2796
  %v2798 = vpop.f32.mrb[0].mxu0
  %2799 = vmatprep.mubr.bf16.mxu0 %v2208
  %2800 = vmatmul.mubr.bf16.gmra.mrb[0].mxu0 %v2207
  %v2801 = vpop.f32.mrb[0].mxu0
  %v2802 = vadd.f32 0.0, %v2801
  %v2803 = vpop.f32.mrb[0].mxu0
  %v2804 = vpop.f32.mrb[0].mxu0
  %v2805 = vadd.f32 0.0, %v2804
  %v2806 = vpop.f32.mrb[0].mxu0
  %2807 = vmatprep.mubr.bf16.mxu0 %v2223
  %2808 = vmatmul.mubr.bf16.gmra.mrb[0].mxu0 %v2222
  %v2809 = vpop.f32.mrb[0].mxu0
  %v2810 = vadd.f32 0.0, %v2809
  %v2811 = vpop.f32.mrb[0].mxu0
  %v2812 = vpop.f32.mrb[0].mxu0
  %v2813 = vadd.f32 0.0, %v2812
  %v2814 = vpop.f32.mrb[0].mxu0
  %2815 = vmatprep.mubr.bf16.mxu0 %v2238
  %2816 = vmatmul.mubr.bf16.gmra.mrb[0].mxu0 %v2237
  %v2817 = vpop.f32.mrb[0].mxu0
  %v2818 = vadd.f32 0.0, %v2817
  %v2819 = vpop.f32.mrb[0].mxu0
  %v2820 = vpop.f32.mrb[0].mxu0
  %v2821 = vadd.f32 0.0, %v2820
  %v2822 = vpop.f32.mrb[0].mxu0
  %2823 = vmatprep.mubr.bf16.mxu0 %v2253
  %2824 = vmatmul.mubr.bf16.gmra.mrb[0].mxu0 %v2252
  %v2825 = vpop.f32.mrb[0].mxu0
  %v2826 = vadd.f32 0.0, %v2825
  %v2827 = vpop.f32.mrb[0].mxu0
  %v2828 = vpop.f32.mrb[0].mxu0
  %v2829 = vadd.f32 0.0, %v2828
  %v2830 = vpop.f32.mrb[0].mxu0
  %2831 = vmatprep.mubr.bf16.mxu0 %v2268
  %2832 = vmatmul.mubr.bf16.gmra.mrb[0].mxu0 %v2267
  %v2833 = vpop.f32.mrb[0].mxu0
  %v2834 = vadd.f32 0.0, %v2833
  %v2835 = vpop.f32.mrb[0].mxu0
  %v2836 = vpop.f32.mrb[0].mxu0
  %v2837 = vadd.f32 0.0, %v2836
  %v2838 = vpop.f32.mrb[0].mxu0
  %2839 = vmatprep.mubr.bf16.mxu0 %v2283
  %2840 = vmatmul.mubr.bf16.gmra.mrb[0].mxu0 %v2282
  %v2841 = vpop.f32.mrb[0].mxu0
  %v2842 = vadd.f32 0.0, %v2841
  %v2843 = vpop.f32.mrb[0].mxu0
  %v2844 = vpop.f32.mrb[0].mxu0
  %v2845 = vadd.f32 0.0, %v2844
  %v2846 = vpop.f32.mrb[0].mxu0
  %2847 = vmatprep.mubr.bf16.mxu0 %v2298
  %2848 = vmatmul.mubr.bf16.gmra.mrb[0].mxu0 %v2297
  %v2849 = vpop.f32.mrb[0].mxu0
  %v2850 = vadd.f32 0.0, %v2849
  %v2851 = vpop.f32.mrb[0].mxu0
  %v2852 = vpop.f32.mrb[0].mxu0
  %v2853 = vadd.f32 0.0, %v2852
  %v2854 = vpop.f32.mrb[0].mxu0
  %2855 = vmatprep.mubr.bf16.mxu0 %v2313
  %2856 = vmatmul.mubr.bf16.gmra.mrb[0].mxu0 %v2312
  %v2857 = vpop.f32.mrb[0].mxu0
  %v2858 = vadd.f32 0.0, %v2857
  %v2859 = vpop.f32.mrb[0].mxu0
  %v2860 = vpop.f32.mrb[0].mxu0
  %v2861 = vadd.f32 0.0, %v2860
  %v2862 = vpop.f32.mrb[0].mxu0
  %2863 = vmatprep.mubr.bf16.mxu0 %v2328
  %2864 = vmatmul.mubr.bf16.gmra.mrb[0].mxu0 %v2327
  %v2865 = vpop.f32.mrb[0].mxu0
  %v2866 = vadd.f32 0.0, %v2865
  %v2867 = vpop.f32.mrb[0].mxu0
  %v2868 = vpop.f32.mrb[0].mxu0
  %v2869 = vadd.f32 0.0, %v2868
  %v2870 = vpop.f32.mrb[0].mxu0
  %2871 = vmatprep.mubr.bf16.mxu0 %v2343
  %2872 = vmatmul.mubr.bf16.gmra.mrb[0].mxu0 %v2342
  %v2873 = vpop.f32.mrb[0].mxu0
  %v2874 = vadd.f32 0.0, %v2873
  %v2875 = vpop.f32.mrb[0].mxu0
  %v2876 = vpop.f32.mrb[0].mxu0
  %v2877 = vadd.f32 0.0, %v2876
  %v2878 = vpop.f32.mrb[0].mxu0
  %2879 = vmatprep.mubr.bf16.mxu0 %v2358
  %2880 = vmatmul.mubr.bf16.gmra.mrb[0].mxu0 %v2357
  %v2881 = vpop.f32.mrb[0].mxu0
  %v2882 = vadd.f32 0.0, %v2881
  %v2883 = vpop.f32.mrb[0].mxu0
  %v2884 = vpop.f32.mrb[0].mxu0
  %v2885 = vadd.f32 0.0, %v2884
  %v2886 = vpop.f32.mrb[0].mxu0
  %2887 = vmatprep.mubr.bf16.mxu0 %v2373
  %2888 = vmatmul.mubr.bf16.gmra.mrb[0].mxu0 %v2372
  %v2889 = vpop.f32.mrb[0].mxu0
  %v2890 = vadd.f32 0.0, %v2889
  %v2891 = vpop.f32.mrb[0].mxu0
  %v2892 = vpop.f32.mrb[0].mxu0
  %v2893 = vadd.f32 0.0, %v2892
  %v2894 = vpop.f32.mrb[0].mxu0
  %2895 = vdwg.mxu0
  %2896 = vmatprep.subr.bf16.mxu0 0
  %2897 = vmatpush1.bf16.msra.mxu0 %v1130
  %2898 = vmatprep.subr.bf16.mxu0 0
  %2899 = vmatpush1.bf16.msra.mxu0 %v1131
  %2900 = vmatprep.subr.bf16.mxu0 0
  %2901 = vmatpush1.bf16.msra.mxu0 %v1132
  %2902 = vmatprep.subr.bf16.mxu0 0
  %2903 = vmatpush1.bf16.msra.mxu0 %v1133
  %2904 = vmatprep.subr.bf16.mxu0 0
  %2905 = vmatpush1.bf16.msra.mxu0 %v1134
  %2906 = vmatprep.subr.bf16.mxu0 0
  %2907 = vmatpush1.bf16.msra.mxu0 %v1135
  %2908 = vmatprep.subr.bf16.mxu0 0
  %2909 = vmatpush1.bf16.msra.mxu0 %v1136
  %2910 = vmatprep.subr.bf16.mxu0 0
  %2911 = vmatpush1.bf16.msra.mxu0 %v1137
  %2912 = vmatprep.subr.bf16.mxu0 0
  %2913 = vmatpush1.bf16.msra.mxu0 %v1138
  %2914 = vmatprep.subr.bf16.mxu0 0
  %2915 = vmatpush1.bf16.msra.mxu0 %v1139
  %2916 = vmatprep.subr.bf16.mxu0 0
  %2917 = vmatpush1.bf16.msra.mxu0 %v1140
  %2918 = vmatprep.subr.bf16.mxu0 0
  %2919 = vmatpush1.bf16.msra.mxu0 %v1141
  %2920 = vmatprep.subr.bf16.mxu0 0
  %2921 = vmatpush1.bf16.msra.mxu0 %v1142
  %2922 = vmatprep.subr.bf16.mxu0 0
  %2923 = vmatpush1.bf16.msra.mxu0 %v1143
  %2924 = vmatprep.subr.bf16.mxu0 0
  %2925 = vmatpush1.bf16.msra.mxu0 %v1144
  %2926 = vmatprep.subr.bf16.mxu0 0
  %2927 = vmatpush1.bf16.msra.mxu0 %v1145
  %2928 = vmatprep.mubr.bf16.mxu0 %v2105
  %2929 = vmatmul.mubr.bf16.gmra.mrb[0].mxu0 %v2104
  %v2930 = vpop.f32.mrb[0].mxu0
  %v2931 = vadd.f32 %v2746, %v2930
  %v2932 = vpop.f32.mrb[0].mxu0
  %v2933 = vpop.f32.mrb[0].mxu0
  %v2934 = vadd.f32 %v2749, %v2933
  %v2935 = vpop.f32.mrb[0].mxu0
  %2936 = vmatprep.mubr.bf16.mxu0 %v2120
  %2937 = vmatmul.mubr.bf16.gmra.mrb[0].mxu0 %v2119
  %v2938 = vpop.f32.mrb[0].mxu0
  %v2939 = vadd.f32 %v2754, %v2938
  %v2940 = vpop.f32.mrb[0].mxu0
  %v2941 = vpop.f32.mrb[0].mxu0
  %v2942 = vadd.f32 %v2757, %v2941
  %v2943 = vpop.f32.mrb[0].mxu0
  %2944 = vmatprep.mubr.bf16.mxu0 %v2135
  %2945 = vmatmul.mubr.bf16.gmra.mrb[0].mxu0 %v2134
  %v2946 = vpop.f32.mrb[0].mxu0
  %v2947 = vadd.f32 %v2762, %v2946
  %v2948 = vpop.f32.mrb[0].mxu0
  %v2949 = vpop.f32.mrb[0].mxu0
  %v2950 = vadd.f32 %v2765, %v2949
  %v2951 = vpop.f32.mrb[0].mxu0
  %2952 = vmatprep.mubr.bf16.mxu0 %v2150
  %2953 = vmatmul.mubr.bf16.gmra.mrb[0].mxu0 %v2149
  %v2954 = vpop.f32.mrb[0].mxu0
  %v2955 = vadd.f32 %v2770, %v2954
  %v2956 = vpop.f32.mrb[0].mxu0
  %v2957 = vpop.f32.mrb[0].mxu0
  %v2958 = vadd.f32 %v2773, %v2957
  %v2959 = vpop.f32.mrb[0].mxu0
  %2960 = vmatprep.mubr.bf16.mxu0 %v2165
  %2961 = vmatmul.mubr.bf16.gmra.mrb[0].mxu0 %v2164
  %v2962 = vpop.f32.mrb[0].mxu0
  %v2963 = vadd.f32 %v2778, %v2962
  %v2964 = vpop.f32.mrb[0].mxu0
  %v2965 = vpop.f32.mrb[0].mxu0
  %v2966 = vadd.f32 %v2781, %v2965
  %v2967 = vpop.f32.mrb[0].mxu0
  %2968 = vmatprep.mubr.bf16.mxu0 %v2180
  %2969 = vmatmul.mubr.bf16.gmra.mrb[0].mxu0 %v2179
  %v2970 = vpop.f32.mrb[0].mxu0
  %v2971 = vadd.f32 %v2786, %v2970
  %v2972 = vpop.f32.mrb[0].mxu0
  %v2973 = vpop.f32.mrb[0].mxu0
  %v2974 = vadd.f32 %v2789, %v2973
  %v2975 = vpop.f32.mrb[0].mxu0
  %2976 = vmatprep.mubr.bf16.mxu0 %v2195
  %2977 = vmatmul.mubr.bf16.gmra.mrb[0].mxu0 %v2194
  %v2978 = vpop.f32.mrb[0].mxu0
  %v2979 = vadd.f32 %v2794, %v2978
  %v2980 = vpop.f32.mrb[0].mxu0
  %v2981 = vpop.f32.mrb[0].mxu0
  %v2982 = vadd.f32 %v2797, %v2981
  %v2983 = vpop.f32.mrb[0].mxu0
  %2984 = vmatprep.mubr.bf16.mxu0 %v2210
  %2985 = vmatmul.mubr.bf16.gmra.mrb[0].mxu0 %v2209
  %v2986 = vpop.f32.mrb[0].mxu0
  %v2987 = vadd.f32 %v2802, %v2986
  %v2988 = vpop.f32.mrb[0].mxu0
  %v2989 = vpop.f32.mrb[0].mxu0
  %v2990 = vadd.f32 %v2805, %v2989
  %v2991 = vpop.f32.mrb[0].mxu0
  %2992 = vmatprep.mubr.bf16.mxu0 %v2225
  %2993 = vmatmul.mubr.bf16.gmra.mrb[0].mxu0 %v2224
  %v2994 = vpop.f32.mrb[0].mxu0
  %v2995 = vadd.f32 %v2810, %v2994
  %v2996 = vpop.f32.mrb[0].mxu0
  %v2997 = vpop.f32.mrb[0].mxu0
  %v2998 = vadd.f32 %v2813, %v2997
  %v2999 = vpop.f32.mrb[0].mxu0
  %3000 = vmatprep.mubr.bf16.mxu0 %v2240
  %3001 = vmatmul.mubr.bf16.gmra.mrb[0].mxu0 %v2239
  %v3002 = vpop.f32.mrb[0].mxu0
  %v3003 = vadd.f32 %v2818, %v3002
  %v3004 = vpop.f32.mrb[0].mxu0
  %v3005 = vpop.f32.mrb[0].mxu0
  %v3006 = vadd.f32 %v2821, %v3005
  %v3007 = vpop.f32.mrb[0].mxu0
  %3008 = vmatprep.mubr.bf16.mxu0 %v2255
  %3009 = vmatmul.mubr.bf16.gmra.mrb[0].mxu0 %v2254
  %v3010 = vpop.f32.mrb[0].mxu0
  %v3011 = vadd.f32 %v2826, %v3010
  %v3012 = vpop.f32.mrb[0].mxu0
  %v3013 = vpop.f32.mrb[0].mxu0
  %v3014 = vadd.f32 %v2829, %v3013
  %v3015 = vpop.f32.mrb[0].mxu0
  %3016 = vmatprep.mubr.bf16.mxu0 %v2270
  %3017 = vmatmul.mubr.bf16.gmra.mrb[0].mxu0 %v2269
  %v3018 = vpop.f32.mrb[0].mxu0
  %v3019 = vadd.f32 %v2834, %v3018
  %v3020 = vpop.f32.mrb[0].mxu0
  %v3021 = vpop.f32.mrb[0].mxu0
  %v3022 = vadd.f32 %v2837, %v3021
  %v3023 = vpop.f32.mrb[0].mxu0
  %3024 = vmatprep.mubr.bf16.mxu0 %v2285
  %3025 = vmatmul.mubr.bf16.gmra.mrb[0].mxu0 %v2284
  %v3026 = vpop.f32.mrb[0].mxu0
  %v3027 = vadd.f32 %v2842, %v3026
  %v3028 = vpop.f32.mrb[0].mxu0
  %v3029 = vpop.f32.mrb[0].mxu0
  %v3030 = vadd.f32 %v2845, %v3029
  %v3031 = vpop.f32.mrb[0].mxu0
  %3032 = vmatprep.mubr.bf16.mxu0 %v2300
  %3033 = vmatmul.mubr.bf16.gmra.mrb[0].mxu0 %v2299
  %v3034 = vpop.f32.mrb[0].mxu0
  %v3035 = vadd.f32 %v2850, %v3034
  %v3036 = vpop.f32.mrb[0].mxu0
  %v3037 = vpop.f32.mrb[0].mxu0
  %v3038 = vadd.f32 %v2853, %v3037
  %v3039 = vpop.f32.mrb[0].mxu0
  %3040 = vmatprep.mubr.bf16.mxu0 %v2315
  %3041 = vmatmul.mubr.bf16.gmra.mrb[0].mxu0 %v2314
  %v3042 = vpop.f32.mrb[0].mxu0
  %v3043 = vadd.f32 %v2858, %v3042
  %v3044 = vpop.f32.mrb[0].mxu0
  %v3045 = vpop.f32.mrb[0].mxu0
  %v3046 = vadd.f32 %v2861, %v3045
  %v3047 = vpop.f32.mrb[0].mxu0
  %3048 = vmatprep.mubr.bf16.mxu0 %v2330
  %3049 = vmatmul.mubr.bf16.gmra.mrb[0].mxu0 %v2329
  %v3050 = vpop.f32.mrb[0].mxu0
  %v3051 = vadd.f32 %v2866, %v3050
  %v3052 = vpop.f32.mrb[0].mxu0
  %v3053 = vpop.f32.mrb[0].mxu0
  %v3054 = vadd.f32 %v2869, %v3053
  %v3055 = vpop.f32.mrb[0].mxu0
  %3056 = vmatprep.mubr.bf16.mxu0 %v2345
  %3057 = vmatmul.mubr.bf16.gmra.mrb[0].mxu0 %v2344
  %v3058 = vpop.f32.mrb[0].mxu0
  %v3059 = vadd.f32 %v2874, %v3058
  %v3060 = vpop.f32.mrb[0].mxu0
  %v3061 = vpop.f32.mrb[0].mxu0
  %v3062 = vadd.f32 %v2877, %v3061
  %v3063 = vpop.f32.mrb[0].mxu0
  %3064 = vmatprep.mubr.bf16.mxu0 %v2360
  %3065 = vmatmul.mubr.bf16.gmra.mrb[0].mxu0 %v2359
  %v3066 = vpop.f32.mrb[0].mxu0
  %v3067 = vadd.f32 %v2882, %v3066
  %v3068 = vpop.f32.mrb[0].mxu0
  %v3069 = vpop.f32.mrb[0].mxu0
  %v3070 = vadd.f32 %v2885, %v3069
  %v3071 = vpop.f32.mrb[0].mxu0
  %3072 = vmatprep.mubr.bf16.mxu0 %v2375
  %3073 = vmatmul.mubr.bf16.gmra.mrb[0].mxu0 %v2374
  %v3074 = vpop.f32.mrb[0].mxu0
  %v3075 = vadd.f32 %v2890, %v3074
  %v3076 = vpop.f32.mrb[0].mxu0
  %v3077 = vpop.f32.mrb[0].mxu0
  %v3078 = vadd.f32 %v2893, %v3077
  %v3079 = vpop.f32.mrb[0].mxu0
  %3080 = vdwg.mxu0
  %3081 = vmatprep.subr.bf16.mxu0 0
  %3082 = vmatpush1.bf16.msra.mxu0 %v1146
  %3083 = vmatprep.subr.bf16.mxu0 0
  %3084 = vmatpush1.bf16.msra.mxu0 %v1147
  %3085 = vmatprep.subr.bf16.mxu0 0
  %3086 = vmatpush1.bf16.msra.mxu0 %v1148
  %3087 = vmatprep.subr.bf16.mxu0 0
  %3088 = vmatpush1.bf16.msra.mxu0 %v1149
  %3089 = vmatprep.subr.bf16.mxu0 0
  %3090 = vmatpush1.bf16.msra.mxu0 %v1150
  %3091 = vmatprep.subr.bf16.mxu0 0
  %3092 = vmatpush1.bf16.msra.mxu0 %v1151
  %3093 = vmatprep.subr.bf16.mxu0 0
  %3094 = vmatpush1.bf16.msra.mxu0 %v1152
  %3095 = vmatprep.subr.bf16.mxu0 0
  %3096 = vmatpush1.bf16.msra.mxu0 %v1153
  %3097 = vmatprep.subr.bf16.mxu0 0
  %3098 = vmatpush1.bf16.msra.mxu0 %v1154
  %3099 = vmatprep.subr.bf16.mxu0 0
  %3100 = vmatpush1.bf16.msra.mxu0 %v1155
  %3101 = vmatprep.subr.bf16.mxu0 0
  %3102 = vmatpush1.bf16.msra.mxu0 %v1156
  %3103 = vmatprep.subr.bf16.mxu0 0
  %3104 = vmatpush1.bf16.msra.mxu0 %v1157
  %3105 = vmatprep.subr.bf16.mxu0 0
  %3106 = vmatpush1.bf16.msra.mxu0 %v1158
  %3107 = vmatprep.subr.bf16.mxu0 0
  %3108 = vmatpush1.bf16.msra.mxu0 %v1159
  %3109 = vmatprep.subr.bf16.mxu0 0
  %3110 = vmatpush1.bf16.msra.mxu0 %v1160
  %3111 = vmatprep.subr.bf16.mxu0 0
  %3112 = vmatpush1.bf16.msra.mxu0 %v1161
  %3113 = vmatprep.mubr.bf16.mxu0 %v2107
  %3114 = vmatmul.mubr.bf16.gmra.mrb[0].mxu0 %v2106
  %v3115 = vpop.f32.mrb[0].mxu0
  %v3116 = vadd.f32 %v2931, %v3115
  %v3117 = vpop.f32.mrb[0].mxu0
  %v3118 = vpop.f32.mrb[0].mxu0
  %v3119 = vadd.f32 %v2934, %v3118
  %v3120 = vpop.f32.mrb[0].mxu0
  %3121 = vmatprep.mubr.bf16.mxu0 %v2122
  %3122 = vmatmul.mubr.bf16.gmra.mrb[0].mxu0 %v2121
  %v3123 = vpop.f32.mrb[0].mxu0
  %v3124 = vadd.f32 %v2939, %v3123
  %v3125 = vpop.f32.mrb[0].mxu0
  %v3126 = vpop.f32.mrb[0].mxu0
  %v3127 = vadd.f32 %v2942, %v3126
  %v3128 = vpop.f32.mrb[0].mxu0
  %3129 = vmatprep.mubr.bf16.mxu0 %v2137
  %3130 = vmatmul.mubr.bf16.gmra.mrb[0].mxu0 %v2136
  %v3131 = vpop.f32.mrb[0].mxu0
  %v3132 = vadd.f32 %v2947, %v3131
  %v3133 = vpop.f32.mrb[0].mxu0
  %v3134 = vpop.f32.mrb[0].mxu0
  %v3135 = vadd.f32 %v2950, %v3134
  %v3136 = vpop.f32.mrb[0].mxu0
  %3137 = vmatprep.mubr.bf16.mxu0 %v2152
  %3138 = vmatmul.mubr.bf16.gmra.mrb[0].mxu0 %v2151
  %v3139 = vpop.f32.mrb[0].mxu0
  %v3140 = vadd.f32 %v2955, %v3139
  %v3141 = vpop.f32.mrb[0].mxu0
  %v3142 = vpop.f32.mrb[0].mxu0
  %v3143 = vadd.f32 %v2958, %v3142
  %v3144 = vpop.f32.mrb[0].mxu0
  %3145 = vmatprep.mubr.bf16.mxu0 %v2167
  %3146 = vmatmul.mubr.bf16.gmra.mrb[0].mxu0 %v2166
  %v3147 = vpop.f32.mrb[0].mxu0
  %v3148 = vadd.f32 %v2963, %v3147
  %v3149 = vpop.f32.mrb[0].mxu0
  %v3150 = vpop.f32.mrb[0].mxu0
  %v3151 = vadd.f32 %v2966, %v3150
  %v3152 = vpop.f32.mrb[0].mxu0
  %3153 = vmatprep.mubr.bf16.mxu0 %v2182
  %3154 = vmatmul.mubr.bf16.gmra.mrb[0].mxu0 %v2181
  %v3155 = vpop.f32.mrb[0].mxu0
  %v3156 = vadd.f32 %v2971, %v3155
  %v3157 = vpop.f32.mrb[0].mxu0
  %v3158 = vpop.f32.mrb[0].mxu0
  %v3159 = vadd.f32 %v2974, %v3158
  %v3160 = vpop.f32.mrb[0].mxu0
  %3161 = vmatprep.mubr.bf16.mxu0 %v2197
  %3162 = vmatmul.mubr.bf16.gmra.mrb[0].mxu0 %v2196
  %v3163 = vpop.f32.mrb[0].mxu0
  %v3164 = vadd.f32 %v2979, %v3163
  %v3165 = vpop.f32.mrb[0].mxu0
  %v3166 = vpop.f32.mrb[0].mxu0
  %v3167 = vadd.f32 %v2982, %v3166
  %v3168 = vpop.f32.mrb[0].mxu0
  %3169 = vmatprep.mubr.bf16.mxu0 %v2212
  %3170 = vmatmul.mubr.bf16.gmra.mrb[0].mxu0 %v2211
  %v3171 = vpop.f32.mrb[0].mxu0
  %v3172 = vadd.f32 %v2987, %v3171
  %v3173 = vpop.f32.mrb[0].mxu0
  %v3174 = vpop.f32.mrb[0].mxu0
  %v3175 = vadd.f32 %v2990, %v3174
  %v3176 = vpop.f32.mrb[0].mxu0
  %3177 = vmatprep.mubr.bf16.mxu0 %v2227
  %3178 = vmatmul.mubr.bf16.gmra.mrb[0].mxu0 %v2226
  %v3179 = vpop.f32.mrb[0].mxu0
  %v3180 = vadd.f32 %v2995, %v3179
  %v3181 = vpop.f32.mrb[0].mxu0
  %v3182 = vpop.f32.mrb[0].mxu0
  %v3183 = vadd.f32 %v2998, %v3182
  %v3184 = vpop.f32.mrb[0].mxu0
  %3185 = vmatprep.mubr.bf16.mxu0 %v2242
  %3186 = vmatmul.mubr.bf16.gmra.mrb[0].mxu0 %v2241
  %v3187 = vpop.f32.mrb[0].mxu0
  %v3188 = vadd.f32 %v3003, %v3187
  %v3189 = vpop.f32.mrb[0].mxu0
  %v3190 = vpop.f32.mrb[0].mxu0
  %v3191 = vadd.f32 %v3006, %v3190
  %v3192 = vpop.f32.mrb[0].mxu0
  %3193 = vmatprep.mubr.bf16.mxu0 %v2257
  %3194 = vmatmul.mubr.bf16.gmra.mrb[0].mxu0 %v2256
  %v3195 = vpop.f32.mrb[0].mxu0
  %v3196 = vadd.f32 %v3011, %v3195
  %v3197 = vpop.f32.mrb[0].mxu0
  %v3198 = vpop.f32.mrb[0].mxu0
  %v3199 = vadd.f32 %v3014, %v3198
  %v3200 = vpop.f32.mrb[0].mxu0
  %3201 = vmatprep.mubr.bf16.mxu0 %v2272
  %3202 = vmatmul.mubr.bf16.gmra.mrb[0].mxu0 %v2271
  %v3203 = vpop.f32.mrb[0].mxu0
  %v3204 = vadd.f32 %v3019, %v3203
  %v3205 = vpop.f32.mrb[0].mxu0
  %v3206 = vpop.f32.mrb[0].mxu0
  %v3207 = vadd.f32 %v3022, %v3206
  %v3208 = vpop.f32.mrb[0].mxu0
  %3209 = vmatprep.mubr.bf16.mxu0 %v2287
  %3210 = vmatmul.mubr.bf16.gmra.mrb[0].mxu0 %v2286
  %v3211 = vpop.f32.mrb[0].mxu0
  %v3212 = vadd.f32 %v3027, %v3211
  %v3213 = vpop.f32.mrb[0].mxu0
  %v3214 = vpop.f32.mrb[0].mxu0
  %v3215 = vadd.f32 %v3030, %v3214
  %v3216 = vpop.f32.mrb[0].mxu0
  %3217 = vmatprep.mubr.bf16.mxu0 %v2302
  %3218 = vmatmul.mubr.bf16.gmra.mrb[0].mxu0 %v2301
  %v3219 = vpop.f32.mrb[0].mxu0
  %v3220 = vadd.f32 %v3035, %v3219
  %v3221 = vpop.f32.mrb[0].mxu0
  %v3222 = vpop.f32.mrb[0].mxu0
  %v3223 = vadd.f32 %v3038, %v3222
  %v3224 = vpop.f32.mrb[0].mxu0
  %3225 = vmatprep.mubr.bf16.mxu0 %v2317
  %3226 = vmatmul.mubr.bf16.gmra.mrb[0].mxu0 %v2316
  %v3227 = vpop.f32.mrb[0].mxu0
  %v3228 = vadd.f32 %v3043, %v3227
  %v3229 = vpop.f32.mrb[0].mxu0
  %v3230 = vpop.f32.mrb[0].mxu0
  %v3231 = vadd.f32 %v3046, %v3230
  %v3232 = vpop.f32.mrb[0].mxu0
  %3233 = vmatprep.mubr.bf16.mxu0 %v2332
  %3234 = vmatmul.mubr.bf16.gmra.mrb[0].mxu0 %v2331
  %v3235 = vpop.f32.mrb[0].mxu0
  %v3236 = vadd.f32 %v3051, %v3235
  %v3237 = vpop.f32.mrb[0].mxu0
  %v3238 = vpop.f32.mrb[0].mxu0
  %v3239 = vadd.f32 %v3054, %v3238
  %v3240 = vpop.f32.mrb[0].mxu0
  %3241 = vmatprep.mubr.bf16.mxu0 %v2347
  %3242 = vmatmul.mubr.bf16.gmra.mrb[0].mxu0 %v2346
  %v3243 = vpop.f32.mrb[0].mxu0
  %v3244 = vadd.f32 %v3059, %v3243
  %v3245 = vpop.f32.mrb[0].mxu0
  %v3246 = vpop.f32.mrb[0].mxu0
  %v3247 = vadd.f32 %v3062, %v3246
  %v3248 = vpop.f32.mrb[0].mxu0
  %3249 = vmatprep.mubr.bf16.mxu0 %v2362
  %3250 = vmatmul.mubr.bf16.gmra.mrb[0].mxu0 %v2361
  %v3251 = vpop.f32.mrb[0].mxu0
  %v3252 = vadd.f32 %v3067, %v3251
  %v3253 = vpop.f32.mrb[0].mxu0
  %v3254 = vpop.f32.mrb[0].mxu0
  %v3255 = vadd.f32 %v3070, %v3254
  %v3256 = vpop.f32.mrb[0].mxu0
  %3257 = vmatprep.mubr.bf16.mxu0 %v2377
  %3258 = vmatmul.mubr.bf16.gmra.mrb[0].mxu0 %v2376
  %v3259 = vpop.f32.mrb[0].mxu0
  %v3260 = vadd.f32 %v3075, %v3259
  %v3261 = vpop.f32.mrb[0].mxu0
  %v3262 = vpop.f32.mrb[0].mxu0
  %v3263 = vadd.f32 %v3078, %v3262
  %v3264 = vpop.f32.mrb[0].mxu0
  %3265 = vdwg.mxu0
  %3266 = vmatprep.subr.bf16.mxu0 0
  %3267 = vmatpush1.bf16.msra.mxu0 %v1162
  %3268 = vmatprep.subr.bf16.mxu0 0
  %3269 = vmatpush1.bf16.msra.mxu0 %v1163
  %3270 = vmatprep.subr.bf16.mxu0 0
  %3271 = vmatpush1.bf16.msra.mxu0 %v1164
  %3272 = vmatprep.subr.bf16.mxu0 0
  %3273 = vmatpush1.bf16.msra.mxu0 %v1165
  %3274 = vmatprep.subr.bf16.mxu0 0
  %3275 = vmatpush1.bf16.msra.mxu0 %v1166
  %3276 = vmatprep.subr.bf16.mxu0 0
  %3277 = vmatpush1.bf16.msra.mxu0 %v1167
  %3278 = vmatprep.subr.bf16.mxu0 0
  %3279 = vmatpush1.bf16.msra.mxu0 %v1168
  %3280 = vmatprep.subr.bf16.mxu0 0
  %3281 = vmatpush1.bf16.msra.mxu0 %v1169
  %3282 = vmatprep.subr.bf16.mxu0 0
  %3283 = vmatpush1.bf16.msra.mxu0 %v1170
  %3284 = vmatprep.subr.bf16.mxu0 0
  %3285 = vmatpush1.bf16.msra.mxu0 %v1171
  %3286 = vmatprep.subr.bf16.mxu0 0
  %3287 = vmatpush1.bf16.msra.mxu0 %v1172
  %3288 = vmatprep.subr.bf16.mxu0 0
  %3289 = vmatpush1.bf16.msra.mxu0 %v1173
  %3290 = vmatprep.subr.bf16.mxu0 0
  %3291 = vmatpush1.bf16.msra.mxu0 %v1174
  %3292 = vmatprep.subr.bf16.mxu0 0
  %3293 = vmatpush1.bf16.msra.mxu0 %v1175
  %3294 = vmatprep.subr.bf16.mxu0 0
  %3295 = vmatpush1.bf16.msra.mxu0 %v1176
  %3296 = vmatprep.subr.bf16.mxu0 0
  %3297 = vmatpush1.bf16.msra.mxu0 %v1177
  %3298 = vmatprep.mubr.bf16.mxu0 %v2109
  %3299 = vmatmul.mubr.bf16.gmra.mrb[0].mxu0 %v2108
  %v3300 = vpop.f32.mrb[0].mxu0
  %v3301 = vadd.f32 %v3116, %v3300
  %v3302 = vpop.f32.mrb[0].mxu0
  %v3303 = vpop.f32.mrb[0].mxu0
  %v3304 = vadd.f32 %v3119, %v3303
  %v3305 = vpop.f32.mrb[0].mxu0
  %3306 = vmatprep.mubr.bf16.mxu0 %v2124
  %3307 = vmatmul.mubr.bf16.gmra.mrb[0].mxu0 %v2123
  %v3308 = vpop.f32.mrb[0].mxu0
  %v3309 = vadd.f32 %v3124, %v3308
  %v3310 = vpop.f32.mrb[0].mxu0
  %v3311 = vpop.f32.mrb[0].mxu0
  %v3312 = vadd.f32 %v3127, %v3311
  %v3313 = vpop.f32.mrb[0].mxu0
  %3314 = vmatprep.mubr.bf16.mxu0 %v2139
  %3315 = vmatmul.mubr.bf16.gmra.mrb[0].mxu0 %v2138
  %v3316 = vpop.f32.mrb[0].mxu0
  %v3317 = vadd.f32 %v3132, %v3316
  %v3318 = vpop.f32.mrb[0].mxu0
  %v3319 = vpop.f32.mrb[0].mxu0
  %v3320 = vadd.f32 %v3135, %v3319
  %v3321 = vpop.f32.mrb[0].mxu0
  %3322 = vmatprep.mubr.bf16.mxu0 %v2154
  %3323 = vmatmul.mubr.bf16.gmra.mrb[0].mxu0 %v2153
  %v3324 = vpop.f32.mrb[0].mxu0
  %v3325 = vadd.f32 %v3140, %v3324
  %v3326 = vpop.f32.mrb[0].mxu0
  %v3327 = vpop.f32.mrb[0].mxu0
  %v3328 = vadd.f32 %v3143, %v3327
  %v3329 = vpop.f32.mrb[0].mxu0
  %3330 = vmatprep.mubr.bf16.mxu0 %v2169
  %3331 = vmatmul.mubr.bf16.gmra.mrb[0].mxu0 %v2168
  %v3332 = vpop.f32.mrb[0].mxu0
  %v3333 = vadd.f32 %v3148, %v3332
  %v3334 = vpop.f32.mrb[0].mxu0
  %v3335 = vpop.f32.mrb[0].mxu0
  %v3336 = vadd.f32 %v3151, %v3335
  %v3337 = vpop.f32.mrb[0].mxu0
  %3338 = vmatprep.mubr.bf16.mxu0 %v2184
  %3339 = vmatmul.mubr.bf16.gmra.mrb[0].mxu0 %v2183
  %v3340 = vpop.f32.mrb[0].mxu0
  %v3341 = vadd.f32 %v3156, %v3340
  %v3342 = vpop.f32.mrb[0].mxu0
  %v3343 = vpop.f32.mrb[0].mxu0
  %v3344 = vadd.f32 %v3159, %v3343
  %v3345 = vpop.f32.mrb[0].mxu0
  %3346 = vmatprep.mubr.bf16.mxu0 %v2199
  %3347 = vmatmul.mubr.bf16.gmra.mrb[0].mxu0 %v2198
  %v3348 = vpop.f32.mrb[0].mxu0
  %v3349 = vadd.f32 %v3164, %v3348
  %v3350 = vpop.f32.mrb[0].mxu0
  %v3351 = vpop.f32.mrb[0].mxu0
  %v3352 = vadd.f32 %v3167, %v3351
  %v3353 = vpop.f32.mrb[0].mxu0
  %3354 = vmatprep.mubr.bf16.mxu0 %v2214
  %3355 = vmatmul.mubr.bf16.gmra.mrb[0].mxu0 %v2213
  %v3356 = vpop.f32.mrb[0].mxu0
  %v3357 = vadd.f32 %v3172, %v3356
  %v3358 = vpop.f32.mrb[0].mxu0
  %v3359 = vpop.f32.mrb[0].mxu0
  %v3360 = vadd.f32 %v3175, %v3359
  %v3361 = vpop.f32.mrb[0].mxu0
  %3362 = vmatprep.mubr.bf16.mxu0 %v2229
  %3363 = vmatmul.mubr.bf16.gmra.mrb[0].mxu0 %v2228
  %v3364 = vpop.f32.mrb[0].mxu0
  %v3365 = vadd.f32 %v3180, %v3364
  %v3366 = vpop.f32.mrb[0].mxu0
  %v3367 = vpop.f32.mrb[0].mxu0
  %v3368 = vadd.f32 %v3183, %v3367
  %v3369 = vpop.f32.mrb[0].mxu0
  %3370 = vmatprep.mubr.bf16.mxu0 %v2244
  %3371 = vmatmul.mubr.bf16.gmra.mrb[0].mxu0 %v2243
  %v3372 = vpop.f32.mrb[0].mxu0
  %v3373 = vadd.f32 %v3188, %v3372
  %v3374 = vpop.f32.mrb[0].mxu0
  %v3375 = vpop.f32.mrb[0].mxu0
  %v3376 = vadd.f32 %v3191, %v3375
  %v3377 = vpop.f32.mrb[0].mxu0
  %3378 = vmatprep.mubr.bf16.mxu0 %v2259
  %3379 = vmatmul.mubr.bf16.gmra.mrb[0].mxu0 %v2258
  %v3380 = vpop.f32.mrb[0].mxu0
  %v3381 = vadd.f32 %v3196, %v3380
  %v3382 = vpop.f32.mrb[0].mxu0
  %v3383 = vpop.f32.mrb[0].mxu0
  %v3384 = vadd.f32 %v3199, %v3383
  %v3385 = vpop.f32.mrb[0].mxu0
  %3386 = vmatprep.mubr.bf16.mxu0 %v2274
  %3387 = vmatmul.mubr.bf16.gmra.mrb[0].mxu0 %v2273
  %v3388 = vpop.f32.mrb[0].mxu0
  %v3389 = vadd.f32 %v3204, %v3388
  %v3390 = vpop.f32.mrb[0].mxu0
  %v3391 = vpop.f32.mrb[0].mxu0
  %v3392 = vadd.f32 %v3207, %v3391
  %v3393 = vpop.f32.mrb[0].mxu0
  %3394 = vmatprep.mubr.bf16.mxu0 %v2289
  %3395 = vmatmul.mubr.bf16.gmra.mrb[0].mxu0 %v2288
  %v3396 = vpop.f32.mrb[0].mxu0
  %v3397 = vadd.f32 %v3212, %v3396
  %v3398 = vpop.f32.mrb[0].mxu0
  %v3399 = vpop.f32.mrb[0].mxu0
  %v3400 = vadd.f32 %v3215, %v3399
  %v3401 = vpop.f32.mrb[0].mxu0
  %3402 = vmatprep.mubr.bf16.mxu0 %v2304
  %3403 = vmatmul.mubr.bf16.gmra.mrb[0].mxu0 %v2303
  %v3404 = vpop.f32.mrb[0].mxu0
  %v3405 = vadd.f32 %v3220, %v3404
  %v3406 = vpop.f32.mrb[0].mxu0
  %v3407 = vpop.f32.mrb[0].mxu0
  %v3408 = vadd.f32 %v3223, %v3407
  %v3409 = vpop.f32.mrb[0].mxu0
  %3410 = vmatprep.mubr.bf16.mxu0 %v2319
  %3411 = vmatmul.mubr.bf16.gmra.mrb[0].mxu0 %v2318
  %v3412 = vpop.f32.mrb[0].mxu0
  %v3413 = vadd.f32 %v3228, %v3412
  %v3414 = vpop.f32.mrb[0].mxu0
  %v3415 = vpop.f32.mrb[0].mxu0
  %v3416 = vadd.f32 %v3231, %v3415
  %v3417 = vpop.f32.mrb[0].mxu0
  %3418 = vmatprep.mubr.bf16.mxu0 %v2334
  %3419 = vmatmul.mubr.bf16.gmra.mrb[0].mxu0 %v2333
  %v3420 = vpop.f32.mrb[0].mxu0
  %v3421 = vadd.f32 %v3236, %v3420
  %v3422 = vpop.f32.mrb[0].mxu0
  %v3423 = vpop.f32.mrb[0].mxu0
  %v3424 = vadd.f32 %v3239, %v3423
  %v3425 = vpop.f32.mrb[0].mxu0
  %3426 = vmatprep.mubr.bf16.mxu0 %v2349
  %3427 = vmatmul.mubr.bf16.gmra.mrb[0].mxu0 %v2348
  %v3428 = vpop.f32.mrb[0].mxu0
  %v3429 = vadd.f32 %v3244, %v3428
  %v3430 = vpop.f32.mrb[0].mxu0
  %v3431 = vpop.f32.mrb[0].mxu0
  %v3432 = vadd.f32 %v3247, %v3431
  %v3433 = vpop.f32.mrb[0].mxu0
  %3434 = vmatprep.mubr.bf16.mxu0 %v2364
  %3435 = vmatmul.mubr.bf16.gmra.mrb[0].mxu0 %v2363
  %v3436 = vpop.f32.mrb[0].mxu0
  %v3437 = vadd.f32 %v3252, %v3436
  %v3438 = vpop.f32.mrb[0].mxu0
  %v3439 = vpop.f32.mrb[0].mxu0
  %v3440 = vadd.f32 %v3255, %v3439
  %v3441 = vpop.f32.mrb[0].mxu0
  %3442 = vmatprep.mubr.bf16.mxu0 %v2379
  %3443 = vmatmul.mubr.bf16.gmra.mrb[0].mxu0 %v2378
  %v3444 = vpop.f32.mrb[0].mxu0
  %v3445 = vadd.f32 %v3260, %v3444
  %v3446 = vpop.f32.mrb[0].mxu0
  %v3447 = vpop.f32.mrb[0].mxu0
  %v3448 = vadd.f32 %v3263, %v3447
  %v3449 = vpop.f32.mrb[0].mxu0
  %3450 = vdwg.mxu0
  %3451 = vmatprep.subr.bf16.mxu0 0
  %3452 = vmatpush1.bf16.msra.mxu0 %v1178
  %3453 = vmatprep.subr.bf16.mxu0 0
  %3454 = vmatpush1.bf16.msra.mxu0 %v1179
  %3455 = vmatprep.subr.bf16.mxu0 0
  %3456 = vmatpush1.bf16.msra.mxu0 %v1180
  %3457 = vmatprep.subr.bf16.mxu0 0
  %3458 = vmatpush1.bf16.msra.mxu0 %v1181
  %3459 = vmatprep.subr.bf16.mxu0 0
  %3460 = vmatpush1.bf16.msra.mxu0 %v1182
  %3461 = vmatprep.subr.bf16.mxu0 0
  %3462 = vmatpush1.bf16.msra.mxu0 %v1183
  %3463 = vmatprep.subr.bf16.mxu0 0
  %3464 = vmatpush1.bf16.msra.mxu0 %v1184
  %3465 = vmatprep.subr.bf16.mxu0 0
  %3466 = vmatpush1.bf16.msra.mxu0 %v1185
  %3467 = vmatprep.subr.bf16.mxu0 0
  %3468 = vmatpush1.bf16.msra.mxu0 %v1186
  %3469 = vmatprep.subr.bf16.mxu0 0
  %3470 = vmatpush1.bf16.msra.mxu0 %v1187
  %3471 = vmatprep.subr.bf16.mxu0 0
  %3472 = vmatpush1.bf16.msra.mxu0 %v1188
  %3473 = vmatprep.subr.bf16.mxu0 0
  %3474 = vmatpush1.bf16.msra.mxu0 %v1189
  %3475 = vmatprep.subr.bf16.mxu0 0
  %3476 = vmatpush1.bf16.msra.mxu0 %v1190
  %3477 = vmatprep.subr.bf16.mxu0 0
  %3478 = vmatpush1.bf16.msra.mxu0 %v1191
  %3479 = vmatprep.subr.bf16.mxu0 0
  %3480 = vmatpush1.bf16.msra.mxu0 %v1192
  %3481 = vmatprep.subr.bf16.mxu0 0
  %3482 = vmatpush1.bf16.msra.mxu0 %v1193
  %3483 = vmatprep.mubr.bf16.mxu0 %v2111
  %3484 = vmatmul.mubr.bf16.gmra.mrb[0].mxu0 %v2110
  %v3485 = vpop.f32.mrb[0].mxu0
  %v3486 = vadd.f32 %v3301, %v3485
  %v3487 = vpop.f32.mrb[0].mxu0
  %v3488 = vpop.f32.mrb[0].mxu0
  %v3489 = vadd.f32 %v3304, %v3488
  %v3490 = vpop.f32.mrb[0].mxu0
  %3491 = vmatprep.mubr.bf16.mxu0 %v2126
  %3492 = vmatmul.mubr.bf16.gmra.mrb[0].mxu0 %v2125
  %v3493 = vpop.f32.mrb[0].mxu0
  %v3494 = vadd.f32 %v3309, %v3493
  %v3495 = vpop.f32.mrb[0].mxu0
  %v3496 = vpop.f32.mrb[0].mxu0
  %v3497 = vadd.f32 %v3312, %v3496
  %v3498 = vpop.f32.mrb[0].mxu0
  %3499 = vmatprep.mubr.bf16.mxu0 %v2141
  %3500 = vmatmul.mubr.bf16.gmra.mrb[0].mxu0 %v2140
  %v3501 = vpop.f32.mrb[0].mxu0
  %v3502 = vadd.f32 %v3317, %v3501
  %v3503 = vpop.f32.mrb[0].mxu0
  %v3504 = vpop.f32.mrb[0].mxu0
  %v3505 = vadd.f32 %v3320, %v3504
  %v3506 = vpop.f32.mrb[0].mxu0
  %3507 = vmatprep.mubr.bf16.mxu0 %v2156
  %3508 = vmatmul.mubr.bf16.gmra.mrb[0].mxu0 %v2155
  %v3509 = vpop.f32.mrb[0].mxu0
  %v3510 = vadd.f32 %v3325, %v3509
  %v3511 = vpop.f32.mrb[0].mxu0
  %v3512 = vpop.f32.mrb[0].mxu0
  %v3513 = vadd.f32 %v3328, %v3512
  %v3514 = vpop.f32.mrb[0].mxu0
  %3515 = vmatprep.mubr.bf16.mxu0 %v2171
  %3516 = vmatmul.mubr.bf16.gmra.mrb[0].mxu0 %v2170
  %v3517 = vpop.f32.mrb[0].mxu0
  %v3518 = vadd.f32 %v3333, %v3517
  %v3519 = vpop.f32.mrb[0].mxu0
  %v3520 = vpop.f32.mrb[0].mxu0
  %v3521 = vadd.f32 %v3336, %v3520
  %v3522 = vpop.f32.mrb[0].mxu0
  %3523 = vmatprep.mubr.bf16.mxu0 %v2186
  %3524 = vmatmul.mubr.bf16.gmra.mrb[0].mxu0 %v2185
  %v3525 = vpop.f32.mrb[0].mxu0
  %v3526 = vadd.f32 %v3341, %v3525
  %v3527 = vpop.f32.mrb[0].mxu0
  %v3528 = vpop.f32.mrb[0].mxu0
  %v3529 = vadd.f32 %v3344, %v3528
  %v3530 = vpop.f32.mrb[0].mxu0
  %3531 = vmatprep.mubr.bf16.mxu0 %v2201
  %3532 = vmatmul.mubr.bf16.gmra.mrb[0].mxu0 %v2200
  %v3533 = vpop.f32.mrb[0].mxu0
  %v3534 = vadd.f32 %v3349, %v3533
  %v3535 = vpop.f32.mrb[0].mxu0
  %v3536 = vpop.f32.mrb[0].mxu0
  %v3537 = vadd.f32 %v3352, %v3536
  %v3538 = vpop.f32.mrb[0].mxu0
  %3539 = vmatprep.mubr.bf16.mxu0 %v2216
  %3540 = vmatmul.mubr.bf16.gmra.mrb[0].mxu0 %v2215
  %v3541 = vpop.f32.mrb[0].mxu0
  %v3542 = vadd.f32 %v3357, %v3541
  %v3543 = vpop.f32.mrb[0].mxu0
  %v3544 = vpop.f32.mrb[0].mxu0
  %v3545 = vadd.f32 %v3360, %v3544
  %v3546 = vpop.f32.mrb[0].mxu0
  %3547 = vmatprep.mubr.bf16.mxu0 %v2231
  %3548 = vmatmul.mubr.bf16.gmra.mrb[0].mxu0 %v2230
  %v3549 = vpop.f32.mrb[0].mxu0
  %v3550 = vadd.f32 %v3365, %v3549
  %v3551 = vpop.f32.mrb[0].mxu0
  %v3552 = vpop.f32.mrb[0].mxu0
  %v3553 = vadd.f32 %v3368, %v3552
  %v3554 = vpop.f32.mrb[0].mxu0
  %3555 = vmatprep.mubr.bf16.mxu0 %v2246
  %3556 = vmatmul.mubr.bf16.gmra.mrb[0].mxu0 %v2245
  %v3557 = vpop.f32.mrb[0].mxu0
  %v3558 = vadd.f32 %v3373, %v3557
  %v3559 = vpop.f32.mrb[0].mxu0
  %v3560 = vpop.f32.mrb[0].mxu0
  %v3561 = vadd.f32 %v3376, %v3560
  %v3562 = vpop.f32.mrb[0].mxu0
  %3563 = vmatprep.mubr.bf16.mxu0 %v2261
  %3564 = vmatmul.mubr.bf16.gmra.mrb[0].mxu0 %v2260
  %v3565 = vpop.f32.mrb[0].mxu0
  %v3566 = vadd.f32 %v3381, %v3565
  %v3567 = vpop.f32.mrb[0].mxu0
  %v3568 = vpop.f32.mrb[0].mxu0
  %v3569 = vadd.f32 %v3384, %v3568
  %v3570 = vpop.f32.mrb[0].mxu0
  %3571 = vmatprep.mubr.bf16.mxu0 %v2276
  %3572 = vmatmul.mubr.bf16.gmra.mrb[0].mxu0 %v2275
  %v3573 = vpop.f32.mrb[0].mxu0
  %v3574 = vadd.f32 %v3389, %v3573
  %v3575 = vpop.f32.mrb[0].mxu0
  %v3576 = vpop.f32.mrb[0].mxu0
  %v3577 = vadd.f32 %v3392, %v3576
  %v3578 = vpop.f32.mrb[0].mxu0
  %3579 = vmatprep.mubr.bf16.mxu0 %v2291
  %3580 = vmatmul.mubr.bf16.gmra.mrb[0].mxu0 %v2290
  %v3581 = vpop.f32.mrb[0].mxu0
  %v3582 = vadd.f32 %v3397, %v3581
  %v3583 = vpop.f32.mrb[0].mxu0
  %v3584 = vpop.f32.mrb[0].mxu0
  %v3585 = vadd.f32 %v3400, %v3584
  %v3586 = vpop.f32.mrb[0].mxu0
  %3587 = vmatprep.mubr.bf16.mxu0 %v2306
  %3588 = vmatmul.mubr.bf16.gmra.mrb[0].mxu0 %v2305
  %v3589 = vpop.f32.mrb[0].mxu0
  %v3590 = vadd.f32 %v3405, %v3589
  %v3591 = vpop.f32.mrb[0].mxu0
  %v3592 = vpop.f32.mrb[0].mxu0
  %v3593 = vadd.f32 %v3408, %v3592
  %v3594 = vpop.f32.mrb[0].mxu0
  %3595 = vmatprep.mubr.bf16.mxu0 %v2321
  %3596 = vmatmul.mubr.bf16.gmra.mrb[0].mxu0 %v2320
  %v3597 = vpop.f32.mrb[0].mxu0
  %v3598 = vadd.f32 %v3413, %v3597
  %v3599 = vpop.f32.mrb[0].mxu0
  %v3600 = vpop.f32.mrb[0].mxu0
  %v3601 = vadd.f32 %v3416, %v3600
  %v3602 = vpop.f32.mrb[0].mxu0
  %3603 = vmatprep.mubr.bf16.mxu0 %v2336
  %3604 = vmatmul.mubr.bf16.gmra.mrb[0].mxu0 %v2335
  %v3605 = vpop.f32.mrb[0].mxu0
  %v3606 = vadd.f32 %v3421, %v3605
  %v3607 = vpop.f32.mrb[0].mxu0
  %v3608 = vpop.f32.mrb[0].mxu0
  %v3609 = vadd.f32 %v3424, %v3608
  %v3610 = vpop.f32.mrb[0].mxu0
  %3611 = vmatprep.mubr.bf16.mxu0 %v2351
  %3612 = vmatmul.mubr.bf16.gmra.mrb[0].mxu0 %v2350
  %v3613 = vpop.f32.mrb[0].mxu0
  %v3614 = vadd.f32 %v3429, %v3613
  %v3615 = vpop.f32.mrb[0].mxu0
  %v3616 = vpop.f32.mrb[0].mxu0
  %v3617 = vadd.f32 %v3432, %v3616
  %v3618 = vpop.f32.mrb[0].mxu0
  %3619 = vmatprep.mubr.bf16.mxu0 %v2366
  %3620 = vmatmul.mubr.bf16.gmra.mrb[0].mxu0 %v2365
  %v3621 = vpop.f32.mrb[0].mxu0
  %v3622 = vadd.f32 %v3437, %v3621
  %v3623 = vpop.f32.mrb[0].mxu0
  %v3624 = vpop.f32.mrb[0].mxu0
  %v3625 = vadd.f32 %v3440, %v3624
  %v3626 = vpop.f32.mrb[0].mxu0
  %3627 = vmatprep.mubr.bf16.mxu0 %v2381
  %3628 = vmatmul.mubr.bf16.gmra.mrb[0].mxu0 %v2380
  %v3629 = vpop.f32.mrb[0].mxu0
  %v3630 = vadd.f32 %v3445, %v3629
  %v3631 = vpop.f32.mrb[0].mxu0
  %v3632 = vpop.f32.mrb[0].mxu0
  %v3633 = vadd.f32 %v3448, %v3632
  %v3634 = vpop.f32.mrb[0].mxu0
  %3635 = vdwg.mxu0
  %3636 = vmatprep.subr.bf16.mxu0 0
  %3637 = vmatpush1.bf16.msra.mxu0 %v1194
  %3638 = vmatprep.subr.bf16.mxu0 0
  %3639 = vmatpush1.bf16.msra.mxu0 %v1195
  %3640 = vmatprep.subr.bf16.mxu0 0
  %3641 = vmatpush1.bf16.msra.mxu0 %v1196
  %3642 = vmatprep.subr.bf16.mxu0 0
  %3643 = vmatpush1.bf16.msra.mxu0 %v1197
  %3644 = vmatprep.subr.bf16.mxu0 0
  %3645 = vmatpush1.bf16.msra.mxu0 %v1198
  %3646 = vmatprep.subr.bf16.mxu0 0
  %3647 = vmatpush1.bf16.msra.mxu0 %v1199
  %3648 = vmatprep.subr.bf16.mxu0 0
  %3649 = vmatpush1.bf16.msra.mxu0 %v1200
  %3650 = vmatprep.subr.bf16.mxu0 0
  %3651 = vmatpush1.bf16.msra.mxu0 %v1201
  %3652 = vmatprep.subr.bf16.mxu0 0
  %3653 = vmatpush1.bf16.msra.mxu0 %v1202
  %3654 = vmatprep.subr.bf16.mxu0 0
  %3655 = vmatpush1.bf16.msra.mxu0 %v1203
  %3656 = vmatprep.subr.bf16.mxu0 0
  %3657 = vmatpush1.bf16.msra.mxu0 %v1204
  %3658 = vmatprep.subr.bf16.mxu0 0
  %3659 = vmatpush1.bf16.msra.mxu0 %v1205
  %3660 = vmatprep.subr.bf16.mxu0 0
  %3661 = vmatpush1.bf16.msra.mxu0 %v1206
  %3662 = vmatprep.subr.bf16.mxu0 0
  %3663 = vmatpush1.bf16.msra.mxu0 %v1207
  %3664 = vmatprep.subr.bf16.mxu0 0
  %3665 = vmatpush1.bf16.msra.mxu0 %v1208
  %3666 = vmatprep.subr.bf16.mxu0 0
  %3667 = vmatpush1.bf16.msra.mxu0 %v1209
  %3668 = vmatprep.mubr.bf16.mxu0 %v2113
  %3669 = vmatmul.mubr.bf16.gmra.mrb[0].mxu0 %v2112
  %v3670 = vpop.f32.mrb[0].mxu0
  %v3671 = vadd.f32 %v3486, %v3670
  %v3672 = vpop.f32.mrb[0].mxu0
  %v3673 = vpop.f32.mrb[0].mxu0
  %v3674 = vadd.f32 %v3489, %v3673
  %v3675 = vpop.f32.mrb[0].mxu0
  %3676 = vmatprep.mubr.bf16.mxu0 %v2128
  %3677 = vmatmul.mubr.bf16.gmra.mrb[0].mxu0 %v2127
  %v3678 = vpop.f32.mrb[0].mxu0
  %v3679 = vadd.f32 %v3494, %v3678
  %v3680 = vpop.f32.mrb[0].mxu0
  %v3681 = vpop.f32.mrb[0].mxu0
  %v3682 = vadd.f32 %v3497, %v3681
  %v3683 = vpop.f32.mrb[0].mxu0
  %3684 = vmatprep.mubr.bf16.mxu0 %v2143
  %3685 = vmatmul.mubr.bf16.gmra.mrb[0].mxu0 %v2142
  %v3686 = vpop.f32.mrb[0].mxu0
  %v3687 = vadd.f32 %v3502, %v3686
  %v3688 = vpop.f32.mrb[0].mxu0
  %v3689 = vpop.f32.mrb[0].mxu0
  %v3690 = vadd.f32 %v3505, %v3689
  %v3691 = vpop.f32.mrb[0].mxu0
  %3692 = vmatprep.mubr.bf16.mxu0 %v2158
  %3693 = vmatmul.mubr.bf16.gmra.mrb[0].mxu0 %v2157
  %v3694 = vpop.f32.mrb[0].mxu0
  %v3695 = vadd.f32 %v3510, %v3694
  %v3696 = vpop.f32.mrb[0].mxu0
  %v3697 = vpop.f32.mrb[0].mxu0
  %v3698 = vadd.f32 %v3513, %v3697
  %v3699 = vpop.f32.mrb[0].mxu0
  %3700 = vmatprep.mubr.bf16.mxu0 %v2173
  %3701 = vmatmul.mubr.bf16.gmra.mrb[0].mxu0 %v2172
  %v3702 = vpop.f32.mrb[0].mxu0
  %v3703 = vadd.f32 %v3518, %v3702
  %v3704 = vpop.f32.mrb[0].mxu0
  %v3705 = vpop.f32.mrb[0].mxu0
  %v3706 = vadd.f32 %v3521, %v3705
  %v3707 = vpop.f32.mrb[0].mxu0
  %3708 = vmatprep.mubr.bf16.mxu0 %v2188
  %3709 = vmatmul.mubr.bf16.gmra.mrb[0].mxu0 %v2187
  %v3710 = vpop.f32.mrb[0].mxu0
  %v3711 = vadd.f32 %v3526, %v3710
  %v3712 = vpop.f32.mrb[0].mxu0
  %v3713 = vpop.f32.mrb[0].mxu0
  %v3714 = vadd.f32 %v3529, %v3713
  %v3715 = vpop.f32.mrb[0].mxu0
  %3716 = vmatprep.mubr.bf16.mxu0 %v2203
  %3717 = vmatmul.mubr.bf16.gmra.mrb[0].mxu0 %v2202
  %v3718 = vpop.f32.mrb[0].mxu0
  %v3719 = vadd.f32 %v3534, %v3718
  %v3720 = vpop.f32.mrb[0].mxu0
  %v3721 = vpop.f32.mrb[0].mxu0
  %v3722 = vadd.f32 %v3537, %v3721
  %v3723 = vpop.f32.mrb[0].mxu0
  %3724 = vmatprep.mubr.bf16.mxu0 %v2218
  %3725 = vmatmul.mubr.bf16.gmra.mrb[0].mxu0 %v2217
  %v3726 = vpop.f32.mrb[0].mxu0
  %v3727 = vadd.f32 %v3542, %v3726
  %v3728 = vpop.f32.mrb[0].mxu0
  %v3729 = vpop.f32.mrb[0].mxu0
  %v3730 = vadd.f32 %v3545, %v3729
  %v3731 = vpop.f32.mrb[0].mxu0
  %3732 = vmatprep.mubr.bf16.mxu0 %v2233
  %3733 = vmatmul.mubr.bf16.gmra.mrb[0].mxu0 %v2232
  %v3734 = vpop.f32.mrb[0].mxu0
  %v3735 = vadd.f32 %v3550, %v3734
  %v3736 = vpop.f32.mrb[0].mxu0
  %v3737 = vpop.f32.mrb[0].mxu0
  %v3738 = vadd.f32 %v3553, %v3737
  %v3739 = vpop.f32.mrb[0].mxu0
  %3740 = vmatprep.mubr.bf16.mxu0 %v2248
  %3741 = vmatmul.mubr.bf16.gmra.mrb[0].mxu0 %v2247
  %v3742 = vpop.f32.mrb[0].mxu0
  %v3743 = vadd.f32 %v3558, %v3742
  %v3744 = vpop.f32.mrb[0].mxu0
  %v3745 = vpop.f32.mrb[0].mxu0
  %v3746 = vadd.f32 %v3561, %v3745
  %v3747 = vpop.f32.mrb[0].mxu0
  %3748 = vmatprep.mubr.bf16.mxu0 %v2263
  %3749 = vmatmul.mubr.bf16.gmra.mrb[0].mxu0 %v2262
  %v3750 = vpop.f32.mrb[0].mxu0
  %v3751 = vadd.f32 %v3566, %v3750
  %v3752 = vpop.f32.mrb[0].mxu0
  %v3753 = vpop.f32.mrb[0].mxu0
  %v3754 = vadd.f32 %v3569, %v3753
  %v3755 = vpop.f32.mrb[0].mxu0
  %3756 = vmatprep.mubr.bf16.mxu0 %v2278
  %3757 = vmatmul.mubr.bf16.gmra.mrb[0].mxu0 %v2277
  %v3758 = vpop.f32.mrb[0].mxu0
  %v3759 = vadd.f32 %v3574, %v3758
  %v3760 = vpop.f32.mrb[0].mxu0
  %v3761 = vpop.f32.mrb[0].mxu0
  %v3762 = vadd.f32 %v3577, %v3761
  %v3763 = vpop.f32.mrb[0].mxu0
  %3764 = vmatprep.mubr.bf16.mxu0 %v2293
  %3765 = vmatmul.mubr.bf16.gmra.mrb[0].mxu0 %v2292
  %v3766 = vpop.f32.mrb[0].mxu0
  %v3767 = vadd.f32 %v3582, %v3766
  %v3768 = vpop.f32.mrb[0].mxu0
  %v3769 = vpop.f32.mrb[0].mxu0
  %v3770 = vadd.f32 %v3585, %v3769
  %v3771 = vpop.f32.mrb[0].mxu0
  %3772 = vmatprep.mubr.bf16.mxu0 %v2308
  %3773 = vmatmul.mubr.bf16.gmra.mrb[0].mxu0 %v2307
  %v3774 = vpop.f32.mrb[0].mxu0
  %v3775 = vadd.f32 %v3590, %v3774
  %v3776 = vpop.f32.mrb[0].mxu0
  %v3777 = vpop.f32.mrb[0].mxu0
  %v3778 = vadd.f32 %v3593, %v3777
  %v3779 = vpop.f32.mrb[0].mxu0
  %3780 = vmatprep.mubr.bf16.mxu0 %v2323
  %3781 = vmatmul.mubr.bf16.gmra.mrb[0].mxu0 %v2322
  %v3782 = vpop.f32.mrb[0].mxu0
  %v3783 = vadd.f32 %v3598, %v3782
  %v3784 = vpop.f32.mrb[0].mxu0
  %v3785 = vpop.f32.mrb[0].mxu0
  %v3786 = vadd.f32 %v3601, %v3785
  %v3787 = vpop.f32.mrb[0].mxu0
  %3788 = vmatprep.mubr.bf16.mxu0 %v2338
  %3789 = vmatmul.mubr.bf16.gmra.mrb[0].mxu0 %v2337
  %v3790 = vpop.f32.mrb[0].mxu0
  %v3791 = vadd.f32 %v3606, %v3790
  %v3792 = vpop.f32.mrb[0].mxu0
  %v3793 = vpop.f32.mrb[0].mxu0
  %v3794 = vadd.f32 %v3609, %v3793
  %v3795 = vpop.f32.mrb[0].mxu0
  %3796 = vmatprep.mubr.bf16.mxu0 %v2353
  %3797 = vmatmul.mubr.bf16.gmra.mrb[0].mxu0 %v2352
  %v3798 = vpop.f32.mrb[0].mxu0
  %v3799 = vadd.f32 %v3614, %v3798
  %v3800 = vpop.f32.mrb[0].mxu0
  %v3801 = vpop.f32.mrb[0].mxu0
  %v3802 = vadd.f32 %v3617, %v3801
  %v3803 = vpop.f32.mrb[0].mxu0
  %3804 = vmatprep.mubr.bf16.mxu0 %v2368
  %3805 = vmatmul.mubr.bf16.gmra.mrb[0].mxu0 %v2367
  %v3806 = vpop.f32.mrb[0].mxu0
  %v3807 = vadd.f32 %v3622, %v3806
  %v3808 = vpop.f32.mrb[0].mxu0
  %v3809 = vpop.f32.mrb[0].mxu0
  %v3810 = vadd.f32 %v3625, %v3809
  %v3811 = vpop.f32.mrb[0].mxu0
  %3812 = vmatprep.mubr.bf16.mxu0 %v2383
  %3813 = vmatmul.mubr.bf16.gmra.mrb[0].mxu0 %v2382
  %v3814 = vpop.f32.mrb[0].mxu0
  %v3815 = vadd.f32 %v3630, %v3814
  %v3816 = vpop.f32.mrb[0].mxu0
  %v3817 = vpop.f32.mrb[0].mxu0
  %v3818 = vadd.f32 %v3633, %v3817
  %v3819 = vpop.f32.mrb[0].mxu0
  %3820 = vdwg.mxu0
  %3821 = vmatprep.subr.bf16.mxu0 0
  %3822 = vmatpush1.bf16.msra.mxu0 %v1210
  %3823 = vmatprep.subr.bf16.mxu0 0
  %3824 = vmatpush1.bf16.msra.mxu0 %v1211
  %3825 = vmatprep.subr.bf16.mxu0 0
  %3826 = vmatpush1.bf16.msra.mxu0 %v1212
  %3827 = vmatprep.subr.bf16.mxu0 0
  %3828 = vmatpush1.bf16.msra.mxu0 %v1213
  %3829 = vmatprep.subr.bf16.mxu0 0
  %3830 = vmatpush1.bf16.msra.mxu0 %v1214
  %3831 = vmatprep.subr.bf16.mxu0 0
  %3832 = vmatpush1.bf16.msra.mxu0 %v1215
  %3833 = vmatprep.subr.bf16.mxu0 0
  %3834 = vmatpush1.bf16.msra.mxu0 %v1216
  %3835 = vmatprep.subr.bf16.mxu0 0
  %3836 = vmatpush1.bf16.msra.mxu0 %v1217
  %3837 = vmatprep.subr.bf16.mxu0 0
  %3838 = vmatpush1.bf16.msra.mxu0 %v1218
  %3839 = vmatprep.subr.bf16.mxu0 0
  %3840 = vmatpush1.bf16.msra.mxu0 %v1219
  %3841 = vmatprep.subr.bf16.mxu0 0
  %3842 = vmatpush1.bf16.msra.mxu0 %v1220
  %3843 = vmatprep.subr.bf16.mxu0 0
  %3844 = vmatpush1.bf16.msra.mxu0 %v1221
  %3845 = vmatprep.subr.bf16.mxu0 0
  %3846 = vmatpush1.bf16.msra.mxu0 %v1222
  %3847 = vmatprep.subr.bf16.mxu0 0
  %3848 = vmatpush1.bf16.msra.mxu0 %v1223
  %3849 = vmatprep.subr.bf16.mxu0 0
  %3850 = vmatpush1.bf16.msra.mxu0 %v1224
  %3851 = vmatprep.subr.bf16.mxu0 0
  %3852 = vmatpush1.bf16.msra.mxu0 %v1225
  %3853 = vmatprep.mubr.bf16.mxu0 %v2115
  %3854 = vmatmul.mubr.bf16.gmra.mrb[0].mxu0 %v2114
  %v3855 = vpop.f32.mrb[0].mxu0
  %v3856 = vadd.f32 %v3671, %v3855
  %v3857 = vpop.f32.mrb[0].mxu0
  %v3858 = vpop.f32.mrb[0].mxu0
  %v3859 = vadd.f32 %v3674, %v3858
  %v3860 = vpop.f32.mrb[0].mxu0
  %3861 = vmatprep.mubr.bf16.mxu0 %v2130
  %3862 = vmatmul.mubr.bf16.gmra.mrb[0].mxu0 %v2129
  %v3863 = vpop.f32.mrb[0].mxu0
  %v3864 = vadd.f32 %v3679, %v3863
  %v3865 = vpop.f32.mrb[0].mxu0
  %v3866 = vpop.f32.mrb[0].mxu0
  %v3867 = vadd.f32 %v3682, %v3866
  %v3868 = vpop.f32.mrb[0].mxu0
  %3869 = vmatprep.mubr.bf16.mxu0 %v2145
  %3870 = vmatmul.mubr.bf16.gmra.mrb[0].mxu0 %v2144
  %v3871 = vpop.f32.mrb[0].mxu0
  %v3872 = vadd.f32 %v3687, %v3871
  %v3873 = vpop.f32.mrb[0].mxu0
  %v3874 = vpop.f32.mrb[0].mxu0
  %v3875 = vadd.f32 %v3690, %v3874
  %v3876 = vpop.f32.mrb[0].mxu0
  %3877 = vmatprep.mubr.bf16.mxu0 %v2160
  %3878 = vmatmul.mubr.bf16.gmra.mrb[0].mxu0 %v2159
  %v3879 = vpop.f32.mrb[0].mxu0
  %v3880 = vadd.f32 %v3695, %v3879
  %v3881 = vpop.f32.mrb[0].mxu0
  %v3882 = vpop.f32.mrb[0].mxu0
  %v3883 = vadd.f32 %v3698, %v3882
  %v3884 = vpop.f32.mrb[0].mxu0
  %3885 = vmatprep.mubr.bf16.mxu0 %v2175
  %3886 = vmatmul.mubr.bf16.gmra.mrb[0].mxu0 %v2174
  %v3887 = vpop.f32.mrb[0].mxu0
  %v3888 = vadd.f32 %v3703, %v3887
  %v3889 = vpop.f32.mrb[0].mxu0
  %v3890 = vpop.f32.mrb[0].mxu0
  %v3891 = vadd.f32 %v3706, %v3890
  %v3892 = vpop.f32.mrb[0].mxu0
  %3893 = vmatprep.mubr.bf16.mxu0 %v2190
  %3894 = vmatmul.mubr.bf16.gmra.mrb[0].mxu0 %v2189
  %v3895 = vpop.f32.mrb[0].mxu0
  %v3896 = vadd.f32 %v3711, %v3895
  %v3897 = vpop.f32.mrb[0].mxu0
  %v3898 = vpop.f32.mrb[0].mxu0
  %v3899 = vadd.f32 %v3714, %v3898
  %v3900 = vpop.f32.mrb[0].mxu0
  %3901 = vmatprep.mubr.bf16.mxu0 %v2205
  %3902 = vmatmul.mubr.bf16.gmra.mrb[0].mxu0 %v2204
  %v3903 = vpop.f32.mrb[0].mxu0
  %v3904 = vadd.f32 %v3719, %v3903
  %v3905 = vpop.f32.mrb[0].mxu0
  %v3906 = vpop.f32.mrb[0].mxu0
  %v3907 = vadd.f32 %v3722, %v3906
  %v3908 = vpop.f32.mrb[0].mxu0
  %3909 = vmatprep.mubr.bf16.mxu0 %v2220
  %3910 = vmatmul.mubr.bf16.gmra.mrb[0].mxu0 %v2219
  %v3911 = vpop.f32.mrb[0].mxu0
  %v3912 = vadd.f32 %v3727, %v3911
  %v3913 = vpop.f32.mrb[0].mxu0
  %v3914 = vpop.f32.mrb[0].mxu0
  %v3915 = vadd.f32 %v3730, %v3914
  %v3916 = vpop.f32.mrb[0].mxu0
  %3917 = vmatprep.mubr.bf16.mxu0 %v2235
  %3918 = vmatmul.mubr.bf16.gmra.mrb[0].mxu0 %v2234
  %v3919 = vpop.f32.mrb[0].mxu0
  %v3920 = vadd.f32 %v3735, %v3919
  %v3921 = vpop.f32.mrb[0].mxu0
  %v3922 = vpop.f32.mrb[0].mxu0
  %v3923 = vadd.f32 %v3738, %v3922
  %v3924 = vpop.f32.mrb[0].mxu0
  %3925 = vmatprep.mubr.bf16.mxu0 %v2250
  %3926 = vmatmul.mubr.bf16.gmra.mrb[0].mxu0 %v2249
  %v3927 = vpop.f32.mrb[0].mxu0
  %v3928 = vadd.f32 %v3743, %v3927
  %v3929 = vpop.f32.mrb[0].mxu0
  %v3930 = vpop.f32.mrb[0].mxu0
  %v3931 = vadd.f32 %v3746, %v3930
  %v3932 = vpop.f32.mrb[0].mxu0
  %3933 = vmatprep.mubr.bf16.mxu0 %v2265
  %3934 = vmatmul.mubr.bf16.gmra.mrb[0].mxu0 %v2264
  %v3935 = vpop.f32.mrb[0].mxu0
  %v3936 = vadd.f32 %v3751, %v3935
  %v3937 = vpop.f32.mrb[0].mxu0
  %v3938 = vpop.f32.mrb[0].mxu0
  %v3939 = vadd.f32 %v3754, %v3938
  %v3940 = vpop.f32.mrb[0].mxu0
  %3941 = vmatprep.mubr.bf16.mxu0 %v2280
  %3942 = vmatmul.mubr.bf16.gmra.mrb[0].mxu0 %v2279
  %v3943 = vpop.f32.mrb[0].mxu0
  %v3944 = vadd.f32 %v3759, %v3943
  %v3945 = vpop.f32.mrb[0].mxu0
  %v3946 = vpop.f32.mrb[0].mxu0
  %v3947 = vadd.f32 %v3762, %v3946
  %v3948 = vpop.f32.mrb[0].mxu0
  %3949 = vmatprep.mubr.bf16.mxu0 %v2295
  %3950 = vmatmul.mubr.bf16.gmra.mrb[0].mxu0 %v2294
  %v3951 = vpop.f32.mrb[0].mxu0
  %v3952 = vadd.f32 %v3767, %v3951
  %v3953 = vpop.f32.mrb[0].mxu0
  %v3954 = vpop.f32.mrb[0].mxu0
  %v3955 = vadd.f32 %v3770, %v3954
  %v3956 = vpop.f32.mrb[0].mxu0
  %3957 = vmatprep.mubr.bf16.mxu0 %v2310
  %3958 = vmatmul.mubr.bf16.gmra.mrb[0].mxu0 %v2309
  %v3959 = vpop.f32.mrb[0].mxu0
  %v3960 = vadd.f32 %v3775, %v3959
  %v3961 = vpop.f32.mrb[0].mxu0
  %v3962 = vpop.f32.mrb[0].mxu0
  %v3963 = vadd.f32 %v3778, %v3962
  %v3964 = vpop.f32.mrb[0].mxu0
  %3965 = vmatprep.mubr.bf16.mxu0 %v2325
  %3966 = vmatmul.mubr.bf16.gmra.mrb[0].mxu0 %v2324
  %v3967 = vpop.f32.mrb[0].mxu0
  %v3968 = vadd.f32 %v3783, %v3967
  %v3969 = vpop.f32.mrb[0].mxu0
  %v3970 = vpop.f32.mrb[0].mxu0
  %v3971 = vadd.f32 %v3786, %v3970
  %v3972 = vpop.f32.mrb[0].mxu0
  %3973 = vmatprep.mubr.bf16.mxu0 %v2340
  %3974 = vmatmul.mubr.bf16.gmra.mrb[0].mxu0 %v2339
  %v3975 = vpop.f32.mrb[0].mxu0
  %v3976 = vadd.f32 %v3791, %v3975
  %v3977 = vpop.f32.mrb[0].mxu0
  %v3978 = vpop.f32.mrb[0].mxu0
  %v3979 = vadd.f32 %v3794, %v3978
  %v3980 = vpop.f32.mrb[0].mxu0
  %3981 = vmatprep.mubr.bf16.mxu0 %v2355
  %3982 = vmatmul.mubr.bf16.gmra.mrb[0].mxu0 %v2354
  %v3983 = vpop.f32.mrb[0].mxu0
  %v3984 = vadd.f32 %v3799, %v3983
  %v3985 = vpop.f32.mrb[0].mxu0
  %v3986 = vpop.f32.mrb[0].mxu0
  %v3987 = vadd.f32 %v3802, %v3986
  %v3988 = vpop.f32.mrb[0].mxu0
  %3989 = vmatprep.mubr.bf16.mxu0 %v2370
  %3990 = vmatmul.mubr.bf16.gmra.mrb[0].mxu0 %v2369
  %v3991 = vpop.f32.mrb[0].mxu0
  %v3992 = vadd.f32 %v3807, %v3991
  %v3993 = vpop.f32.mrb[0].mxu0
  %v3994 = vpop.f32.mrb[0].mxu0
  %v3995 = vadd.f32 %v3810, %v3994
  %v3996 = vpop.f32.mrb[0].mxu0
  %3997 = vmatprep.mubr.bf16.mxu0 %v2385
  %3998 = vmatmul.mubr.bf16.gmra.mrb[0].mxu0 %v2384
  %v3999 = vpop.f32.mrb[0].mxu0
  %v4000 = vadd.f32 %v3815, %v3999
  %v4001 = vpop.f32.mrb[0].mxu0
  %v4002 = vpop.f32.mrb[0].mxu0
  %v4003 = vadd.f32 %v3818, %v4002
  %v4004 = vpop.f32.mrb[0].mxu0
  %4005 = vdwg.mxu0
  %4006 = vmatprep.subr.bf16.mxu0 0
  %4007 = vmatpush1.bf16.msra.mxu0 %v1226
  %4008 = vmatprep.subr.bf16.mxu0 0
  %4009 = vmatpush1.bf16.msra.mxu0 %v1227
  %4010 = vmatprep.subr.bf16.mxu0 0
  %4011 = vmatpush1.bf16.msra.mxu0 0
  %4012 = vmatprep.subr.bf16.mxu0 0
  %4013 = vmatpush1.bf16.msra.mxu0 0
  %4014 = vmatprep.subr.bf16.mxu0 0
  %4015 = vmatpush1.bf16.msra.mxu0 0
  %4016 = vmatprep.subr.bf16.mxu0 0
  %4017 = vmatpush1.bf16.msra.mxu0 0
  %4018 = vmatprep.subr.bf16.mxu0 0
  %4019 = vmatpush1.bf16.msra.mxu0 0
  %4020 = vmatprep.subr.bf16.mxu0 0
  %4021 = vmatpush1.bf16.msra.mxu0 0
  %4022 = vmatprep.subr.bf16.mxu0 0
  %4023 = vmatpush1.bf16.msra.mxu0 0
  %4024 = vmatprep.subr.bf16.mxu0 0
  %4025 = vmatpush1.bf16.msra.mxu0 0
  %4026 = vmatprep.subr.bf16.mxu0 0
  %4027 = vmatpush1.bf16.msra.mxu0 0
  %4028 = vmatprep.subr.bf16.mxu0 0
  %4029 = vmatpush1.bf16.msra.mxu0 0
  %4030 = vmatprep.subr.bf16.mxu0 0
  %4031 = vmatpush1.bf16.msra.mxu0 0
  %4032 = vmatprep.subr.bf16.mxu0 0
  %4033 = vmatpush1.bf16.msra.mxu0 0
  %4034 = vmatprep.subr.bf16.mxu0 0
  %4035 = vmatpush1.bf16.msra.mxu0 0
  %4036 = vmatprep.subr.bf16.mxu0 0
  %4037 = vmatpush1.bf16.msra.mxu0 0
  %4038 = vmatprep.mubr.bf16.mxu0 0
  %4039 = vmatmul.mubr.bf16.gmra.mrb[0].mxu0 %v2655
  %v4040 = vpop.f32.mrb[0].mxu0
  %v4041 = vadd.f32 %v3856, %v4040
  %v4042 = vpop.f32.mrb[0].mxu0
  %v4043 = vpop.f32.mrb[0].mxu0
  %v4044 = vadd.f32 %v3859, %v4043
  %v4045 = vpop.f32.mrb[0].mxu0
  %4046 = vmatprep.mubr.bf16.mxu0 0
  %4047 = vmatmul.mubr.bf16.gmra.mrb[0].mxu0 %v2658
  %v4048 = vpop.f32.mrb[0].mxu0
  %v4049 = vadd.f32 %v3864, %v4048
  %v4050 = vpop.f32.mrb[0].mxu0
  %v4051 = vpop.f32.mrb[0].mxu0
  %v4052 = vadd.f32 %v3867, %v4051
  %v4053 = vpop.f32.mrb[0].mxu0
  %4054 = vmatprep.mubr.bf16.mxu0 0
  %4055 = vmatmul.mubr.bf16.gmra.mrb[0].mxu0 %v2661
  %v4056 = vpop.f32.mrb[0].mxu0
  %v4057 = vadd.f32 %v3872, %v4056
  %v4058 = vpop.f32.mrb[0].mxu0
  %v4059 = vpop.f32.mrb[0].mxu0
  %v4060 = vadd.f32 %v3875, %v4059
  %v4061 = vpop.f32.mrb[0].mxu0
  %4062 = vmatprep.mubr.bf16.mxu0 0
  %4063 = vmatmul.mubr.bf16.gmra.mrb[0].mxu0 %v2664
  %v4064 = vpop.f32.mrb[0].mxu0
  %v4065 = vadd.f32 %v3880, %v4064
  %v4066 = vpop.f32.mrb[0].mxu0
  %v4067 = vpop.f32.mrb[0].mxu0
  %v4068 = vadd.f32 %v3883, %v4067
  %v4069 = vpop.f32.mrb[0].mxu0
  %4070 = vmatprep.mubr.bf16.mxu0 0
  %4071 = vmatmul.mubr.bf16.gmra.mrb[0].mxu0 %v2667
  %v4072 = vpop.f32.mrb[0].mxu0
  %v4073 = vadd.f32 %v3888, %v4072
  %v4074 = vpop.f32.mrb[0].mxu0
  %v4075 = vpop.f32.mrb[0].mxu0
  %v4076 = vadd.f32 %v3891, %v4075
  %v4077 = vpop.f32.mrb[0].mxu0
  %4078 = vmatprep.mubr.bf16.mxu0 0
  %4079 = vmatmul.mubr.bf16.gmra.mrb[0].mxu0 %v2670
  %v4080 = vpop.f32.mrb[0].mxu0
  %v4081 = vadd.f32 %v3896, %v4080
  %v4082 = vpop.f32.mrb[0].mxu0
  %v4083 = vpop.f32.mrb[0].mxu0
  %v4084 = vadd.f32 %v3899, %v4083
  %v4085 = vpop.f32.mrb[0].mxu0
  %4086 = vmatprep.mubr.bf16.mxu0 0
  %4087 = vmatmul.mubr.bf16.gmra.mrb[0].mxu0 %v2673
  %v4088 = vpop.f32.mrb[0].mxu0
  %v4089 = vadd.f32 %v3904, %v4088
  %v4090 = vpop.f32.mrb[0].mxu0
  %v4091 = vpop.f32.mrb[0].mxu0
  %v4092 = vadd.f32 %v3907, %v4091
  %v4093 = vpop.f32.mrb[0].mxu0
  %4094 = vmatprep.mubr.bf16.mxu0 0
  %4095 = vmatmul.mubr.bf16.gmra.mrb[0].mxu0 %v2676
  %v4096 = vpop.f32.mrb[0].mxu0
  %v4097 = vadd.f32 %v3912, %v4096
  %v4098 = vpop.f32.mrb[0].mxu0
  %v4099 = vpop.f32.mrb[0].mxu0
  %v4100 = vadd.f32 %v3915, %v4099
  %v4101 = vpop.f32.mrb[0].mxu0
  %4102 = vmatprep.mubr.bf16.mxu0 0
  %4103 = vmatmul.mubr.bf16.gmra.mrb[0].mxu0 %v2679
  %v4104 = vpop.f32.mrb[0].mxu0
  %v4105 = vadd.f32 %v3920, %v4104
  %v4106 = vpop.f32.mrb[0].mxu0
  %v4107 = vpop.f32.mrb[0].mxu0
  %v4108 = vadd.f32 %v3923, %v4107
  %v4109 = vpop.f32.mrb[0].mxu0
  %4110 = vmatprep.mubr.bf16.mxu0 0
  %4111 = vmatmul.mubr.bf16.gmra.mrb[0].mxu0 %v2682
  %v4112 = vpop.f32.mrb[0].mxu0
  %v4113 = vadd.f32 %v3928, %v4112
  %v4114 = vpop.f32.mrb[0].mxu0
  %v4115 = vpop.f32.mrb[0].mxu0
  %v4116 = vadd.f32 %v3931, %v4115
  %v4117 = vpop.f32.mrb[0].mxu0
  %4118 = vmatprep.mubr.bf16.mxu0 0
  %4119 = vmatmul.mubr.bf16.gmra.mrb[0].mxu0 %v2685
  %v4120 = vpop.f32.mrb[0].mxu0
  %v4121 = vadd.f32 %v3936, %v4120
  %v4122 = vpop.f32.mrb[0].mxu0
  %v4123 = vpop.f32.mrb[0].mxu0
  %v4124 = vadd.f32 %v3939, %v4123
  %v4125 = vpop.f32.mrb[0].mxu0
  %4126 = vmatprep.mubr.bf16.mxu0 0
  %4127 = vmatmul.mubr.bf16.gmra.mrb[0].mxu0 %v2688
  %v4128 = vpop.f32.mrb[0].mxu0
  %v4129 = vadd.f32 %v3944, %v4128
  %v4130 = vpop.f32.mrb[0].mxu0
  %v4131 = vpop.f32.mrb[0].mxu0
  %v4132 = vadd.f32 %v3947, %v4131
  %v4133 = vpop.f32.mrb[0].mxu0
  %4134 = vmatprep.mubr.bf16.mxu0 0
  %4135 = vmatmul.mubr.bf16.gmra.mrb[0].mxu0 %v2691
  %v4136 = vpop.f32.mrb[0].mxu0
  %v4137 = vadd.f32 %v3952, %v4136
  %v4138 = vpop.f32.mrb[0].mxu0
  %v4139 = vpop.f32.mrb[0].mxu0
  %v4140 = vadd.f32 %v3955, %v4139
  %v4141 = vpop.f32.mrb[0].mxu0
  %4142 = vmatprep.mubr.bf16.mxu0 0
  %4143 = vmatmul.mubr.bf16.gmra.mrb[0].mxu0 %v2694
  %v4144 = vpop.f32.mrb[0].mxu0
  %v4145 = vadd.f32 %v3960, %v4144
  %v4146 = vpop.f32.mrb[0].mxu0
  %v4147 = vpop.f32.mrb[0].mxu0
  %v4148 = vadd.f32 %v3963, %v4147
  %v4149 = vpop.f32.mrb[0].mxu0
  %4150 = vmatprep.mubr.bf16.mxu0 0
  %4151 = vmatmul.mubr.bf16.gmra.mrb[0].mxu0 %v2697
  %v4152 = vpop.f32.mrb[0].mxu0
  %v4153 = vadd.f32 %v3968, %v4152
  %v4154 = vpop.f32.mrb[0].mxu0
  %v4155 = vpop.f32.mrb[0].mxu0
  %v4156 = vadd.f32 %v3971, %v4155
  %v4157 = vpop.f32.mrb[0].mxu0
  %4158 = vmatprep.mubr.bf16.mxu0 0
  %4159 = vmatmul.mubr.bf16.gmra.mrb[0].mxu0 %v2700
  %v4160 = vpop.f32.mrb[0].mxu0
  %v4161 = vadd.f32 %v3976, %v4160
  %v4162 = vpop.f32.mrb[0].mxu0
  %v4163 = vpop.f32.mrb[0].mxu0
  %v4164 = vadd.f32 %v3979, %v4163
  %v4165 = vpop.f32.mrb[0].mxu0
  %4166 = vmatprep.mubr.bf16.mxu0 0
  %4167 = vmatmul.mubr.bf16.gmra.mrb[0].mxu0 %v2703
  %v4168 = vpop.f32.mrb[0].mxu0
  %v4169 = vadd.f32 %v3984, %v4168
  %v4170 = vpop.f32.mrb[0].mxu0
  %v4171 = vpop.f32.mrb[0].mxu0
  %v4172 = vadd.f32 %v3987, %v4171
  %v4173 = vpop.f32.mrb[0].mxu0
  %4174 = vmatprep.mubr.bf16.mxu0 0
  %4175 = vmatmul.mubr.bf16.gmra.mrb[0].mxu0 %v2706
  %v4176 = vpop.f32.mrb[0].mxu0
  %v4177 = vadd.f32 %v3992, %v4176
  %v4178 = vpop.f32.mrb[0].mxu0
  %v4179 = vpop.f32.mrb[0].mxu0
  %v4180 = vadd.f32 %v3995, %v4179
  %v4181 = vpop.f32.mrb[0].mxu0
  %4182 = vmatprep.mubr.bf16.mxu0 0
  %4183 = vmatmul.mubr.bf16.gmra.mrb[0].mxu0 %v2709
  %v4184 = vpop.f32.mrb[0].mxu0
  %v4185 = vadd.f32 %v4000, %v4184
  %v4186 = vpop.f32.mrb[0].mxu0
  %v4187 = vpop.f32.mrb[0].mxu0
  %v4188 = vadd.f32 %v4003, %v4187
  %v4189 = vpop.f32.mrb[0].mxu0
  %4190 = vdwg.mxu0
  %vm4191 = vcmask 400384
  %v4192 = vsel %vm4191, %v4041, 0.0
  %4193 = vadd.xlane.f32.xlu0 %v4192
  %v4194 = vpop.xlane.xlu0 %4193
  %v4195 = vsel %vm4191, %v4044, 0.0
  %4196 = vadd.xlane.f32.xlu0 %v4195
  %v4197 = vpop.xlane.xlu0 %4196
  %v4198 = vsel %vm4191, %v4049, 0.0
  %4199 = vadd.xlane.f32.xlu0 %v4198
  %v4200 = vpop.xlane.xlu0 %4199
  %v4201 = vsel %vm4191, %v4052, 0.0
  %4202 = vadd.xlane.f32.xlu0 %v4201
  %v4203 = vpop.xlane.xlu0 %4202
  %v4204 = vsel %vm4191, %v4057, 0.0
  %4205 = vadd.xlane.f32.xlu0 %v4204
  %v4206 = vpop.xlane.xlu0 %4205
  %v4207 = vsel %vm4191, %v4060, 0.0
  %4208 = vadd.xlane.f32.xlu0 %v4207
  %v4209 = vpop.xlane.xlu0 %4208
  %v4210 = vsel %vm4191, %v4065, 0.0
  %4211 = vadd.xlane.f32.xlu0 %v4210
  %v4212 = vpop.xlane.xlu0 %4211
  %v4213 = vsel %vm4191, %v4068, 0.0
  %4214 = vadd.xlane.f32.xlu0 %v4213
  %v4215 = vpop.xlane.xlu0 %4214
  %v4216 = vsel %vm4191, %v4073, 0.0
  %4217 = vadd.xlane.f32.xlu0 %v4216
  %v4218 = vpop.xlane.xlu0 %4217
  %v4219 = vsel %vm4191, %v4076, 0.0
  %4220 = vadd.xlane.f32.xlu0 %v4219
  %v4221 = vpop.xlane.xlu0 %4220
  %v4222 = vsel %vm4191, %v4081, 0.0
  %4223 = vadd.xlane.f32.xlu0 %v4222
  %v4224 = vpop.xlane.xlu0 %4223
  %v4225 = vsel %vm4191, %v4084, 0.0
  %4226 = vadd.xlane.f32.xlu0 %v4225
  %v4227 = vpop.xlane.xlu0 %4226
  %v4228 = vsel %vm4191, %v4089, 0.0
  %4229 = vadd.xlane.f32.xlu0 %v4228
  %v4230 = vpop.xlane.xlu0 %4229
  %v4231 = vsel %vm4191, %v4092, 0.0
  %4232 = vadd.xlane.f32.xlu0 %v4231
  %v4233 = vpop.xlane.xlu0 %4232
  %v4234 = vsel %vm4191, %v4097, 0.0
  %4235 = vadd.xlane.f32.xlu0 %v4234
  %v4236 = vpop.xlane.xlu0 %4235
  %v4237 = vsel %vm4191, %v4100, 0.0
  %4238 = vadd.xlane.f32.xlu0 %v4237
  %v4239 = vpop.xlane.xlu0 %4238
  %v4240 = vsel %vm4191, %v4105, 0.0
  %4241 = vadd.xlane.f32.xlu0 %v4240
  %v4242 = vpop.xlane.xlu0 %4241
  %v4243 = vsel %vm4191, %v4108, 0.0
  %4244 = vadd.xlane.f32.xlu0 %v4243
  %v4245 = vpop.xlane.xlu0 %4244
  %v4246 = vsel %vm4191, %v4113, 0.0
  %4247 = vadd.xlane.f32.xlu0 %v4246
  %v4248 = vpop.xlane.xlu0 %4247
  %v4249 = vsel %vm4191, %v4116, 0.0
  %4250 = vadd.xlane.f32.xlu0 %v4249
  %v4251 = vpop.xlane.xlu0 %4250
  %v4252 = vsel %vm4191, %v4121, 0.0
  %4253 = vadd.xlane.f32.xlu0 %v4252
  %v4254 = vpop.xlane.xlu0 %4253
  %v4255 = vsel %vm4191, %v4124, 0.0
  %4256 = vadd.xlane.f32.xlu0 %v4255
  %v4257 = vpop.xlane.xlu0 %4256
  %v4258 = vsel %vm4191, %v4129, 0.0
  %4259 = vadd.xlane.f32.xlu0 %v4258
  %v4260 = vpop.xlane.xlu0 %4259
  %v4261 = vsel %vm4191, %v4132, 0.0
  %4262 = vadd.xlane.f32.xlu0 %v4261
  %v4263 = vpop.xlane.xlu0 %4262
  %v4264 = vsel %vm4191, %v4137, 0.0
  %4265 = vadd.xlane.f32.xlu0 %v4264
  %v4266 = vpop.xlane.xlu0 %4265
  %v4267 = vsel %vm4191, %v4140, 0.0
  %4268 = vadd.xlane.f32.xlu0 %v4267
  %v4269 = vpop.xlane.xlu0 %4268
  %v4270 = vsel %vm4191, %v4145, 0.0
  %4271 = vadd.xlane.f32.xlu0 %v4270
  %v4272 = vpop.xlane.xlu0 %4271
  %v4273 = vsel %vm4191, %v4148, 0.0
  %4274 = vadd.xlane.f32.xlu0 %v4273
  %v4275 = vpop.xlane.xlu0 %4274
  %v4276 = vsel %vm4191, %v4153, 0.0
  %4277 = vadd.xlane.f32.xlu0 %v4276
  %v4278 = vpop.xlane.xlu0 %4277
  %v4279 = vsel %vm4191, %v4156, 0.0
  %4280 = vadd.xlane.f32.xlu0 %v4279
  %v4281 = vpop.xlane.xlu0 %4280
  %v4282 = vsel %vm4191, %v4161, 0.0
  %4283 = vadd.xlane.f32.xlu0 %v4282
  %v4284 = vpop.xlane.xlu0 %4283
  %v4285 = vsel %vm4191, %v4164, 0.0
  %4286 = vadd.xlane.f32.xlu0 %v4285
  %v4287 = vpop.xlane.xlu0 %4286
  %v4288 = vsel %vm4191, %v4169, 0.0
  %4289 = vadd.xlane.f32.xlu0 %v4288
  %v4290 = vpop.xlane.xlu0 %4289
  %v4291 = vsel %vm4191, %v4172, 0.0
  %4292 = vadd.xlane.f32.xlu0 %v4291
  %v4293 = vpop.xlane.xlu0 %4292
  %v4294 = vsel %vm4191, %v4177, 0.0
  %4295 = vadd.xlane.f32.xlu0 %v4294
  %v4296 = vpop.xlane.xlu0 %4295
  %v4297 = vsel %vm4191, %v4180, 0.0
  %4298 = vadd.xlane.f32.xlu0 %v4297
  %v4299 = vpop.xlane.xlu0 %4298
  %v4300 = vsel %vm4191, %v4185, 0.0
  %4301 = vadd.xlane.f32.xlu0 %v4300
  %v4302 = vpop.xlane.xlu0 %4301
  %v4303 = vsel %vm4191, %v4188, 0.0
  %4304 = vadd.xlane.f32.xlu0 %v4303
  %v4305 = vpop.xlane.xlu0 %4304
  %v4306 = vmul.f32 %v4194, 0.020408163
  %v4307 = vmul.f32 %v4197, 0.020408163
  %v4308 = vmul.f32 %v4200, 0.020408163
  %v4309 = vmul.f32 %v4203, 0.020408163
  %v4310 = vmul.f32 %v4206, 0.020408163
  %v4311 = vmul.f32 %v4209, 0.020408163
  %v4312 = vmul.f32 %v4212, 0.020408163
  %v4313 = vmul.f32 %v4215, 0.020408163
  %v4314 = vmul.f32 %v4218, 0.020408163
  %v4315 = vmul.f32 %v4221, 0.020408163
  %v4316 = vmul.f32 %v4224, 0.020408163
  %v4317 = vmul.f32 %v4227, 0.020408163
  %v4318 = vmul.f32 %v4230, 0.020408163
  %v4319 = vmul.f32 %v4233, 0.020408163
  %v4320 = vmul.f32 %v4236, 0.020408163
  %v4321 = vmul.f32 %v4239, 0.020408163
  %v4322 = vmul.f32 %v4242, 0.020408163
  %v4323 = vmul.f32 %v4245, 0.020408163
  %v4324 = vmul.f32 %v4248, 0.020408163
  %v4325 = vmul.f32 %v4251, 0.020408163
  %v4326 = vmul.f32 %v4254, 0.020408163
  %v4327 = vmul.f32 %v4257, 0.020408163
  %v4328 = vmul.f32 %v4260, 0.020408163
  %v4329 = vmul.f32 %v4263, 0.020408163
  %v4330 = vmul.f32 %v4266, 0.020408163
  %v4331 = vmul.f32 %v4269, 0.020408163
  %v4332 = vmul.f32 %v4272, 0.020408163
  %v4333 = vmul.f32 %v4275, 0.020408163
  %v4334 = vmul.f32 %v4278, 0.020408163
  %v4335 = vmul.f32 %v4281, 0.020408163
  %v4336 = vmul.f32 %v4284, 0.020408163
  %v4337 = vmul.f32 %v4287, 0.020408163
  %v4338 = vmul.f32 %v4290, 0.020408163
  %v4339 = vmul.f32 %v4293, 0.020408163
  %v4340 = vmul.f32 %v4296, 0.020408163
  %v4341 = vmul.f32 %v4299, 0.020408163
  %v4342 = vmul.f32 %v4302, 0.020408163
  %v4343 = vmul.f32 %v4305, 0.020408163
  %v4344 = vmul.f32 %v4041, %v4041
  %v4345 = vmul.f32 %v4044, %v4044
  %v4346 = vmul.f32 %v4049, %v4049
  %v4347 = vmul.f32 %v4052, %v4052
  %v4348 = vmul.f32 %v4057, %v4057
  %v4349 = vmul.f32 %v4060, %v4060
  %v4350 = vmul.f32 %v4065, %v4065
  %v4351 = vmul.f32 %v4068, %v4068
  %v4352 = vmul.f32 %v4073, %v4073
  %v4353 = vmul.f32 %v4076, %v4076
  %v4354 = vmul.f32 %v4081, %v4081
  %v4355 = vmul.f32 %v4084, %v4084
  %v4356 = vmul.f32 %v4089, %v4089
  %v4357 = vmul.f32 %v4092, %v4092
  %v4358 = vmul.f32 %v4097, %v4097
  %v4359 = vmul.f32 %v4100, %v4100
  %v4360 = vmul.f32 %v4105, %v4105
  %v4361 = vmul.f32 %v4108, %v4108
  %v4362 = vmul.f32 %v4113, %v4113
  %v4363 = vmul.f32 %v4116, %v4116
  %v4364 = vmul.f32 %v4121, %v4121
  %v4365 = vmul.f32 %v4124, %v4124
  %v4366 = vmul.f32 %v4129, %v4129
  %v4367 = vmul.f32 %v4132, %v4132
  %v4368 = vmul.f32 %v4137, %v4137
  %v4369 = vmul.f32 %v4140, %v4140
  %v4370 = vmul.f32 %v4145, %v4145
  %v4371 = vmul.f32 %v4148, %v4148
  %v4372 = vmul.f32 %v4153, %v4153
  %v4373 = vmul.f32 %v4156, %v4156
  %v4374 = vmul.f32 %v4161, %v4161
  %v4375 = vmul.f32 %v4164, %v4164
  %v4376 = vmul.f32 %v4169, %v4169
  %v4377 = vmul.f32 %v4172, %v4172
  %v4378 = vmul.f32 %v4177, %v4177
  %v4379 = vmul.f32 %v4180, %v4180
  %v4380 = vmul.f32 %v4185, %v4185
  %v4381 = vmul.f32 %v4188, %v4188
  %v4382 = vsel %vm4191, %v4344, 0.0
  %4383 = vadd.xlane.f32.xlu0 %v4382
  %v4384 = vpop.xlane.xlu0 %4383
  %v4385 = vsel %vm4191, %v4345, 0.0
  %4386 = vadd.xlane.f32.xlu0 %v4385
  %v4387 = vpop.xlane.xlu0 %4386
  %v4388 = vsel %vm4191, %v4346, 0.0
  %4389 = vadd.xlane.f32.xlu0 %v4388
  %v4390 = vpop.xlane.xlu0 %4389
  %v4391 = vsel %vm4191, %v4347, 0.0
  %4392 = vadd.xlane.f32.xlu0 %v4391
  %v4393 = vpop.xlane.xlu0 %4392
  %v4394 = vsel %vm4191, %v4348, 0.0
  %4395 = vadd.xlane.f32.xlu0 %v4394
  %v4396 = vpop.xlane.xlu0 %4395
  %v4397 = vsel %vm4191, %v4349, 0.0
  %4398 = vadd.xlane.f32.xlu0 %v4397
  %v4399 = vpop.xlane.xlu0 %4398
  %v4400 = vsel %vm4191, %v4350, 0.0
  %4401 = vadd.xlane.f32.xlu0 %v4400
  %v4402 = vpop.xlane.xlu0 %4401
  %v4403 = vsel %vm4191, %v4351, 0.0
  %4404 = vadd.xlane.f32.xlu0 %v4403
  %v4405 = vpop.xlane.xlu0 %4404
  %v4406 = vsel %vm4191, %v4352, 0.0
  %4407 = vadd.xlane.f32.xlu0 %v4406
  %v4408 = vpop.xlane.xlu0 %4407
  %v4409 = vsel %vm4191, %v4353, 0.0
  %4410 = vadd.xlane.f32.xlu0 %v4409
  %v4411 = vpop.xlane.xlu0 %4410
  %v4412 = vsel %vm4191, %v4354, 0.0
  %4413 = vadd.xlane.f32.xlu0 %v4412
  %v4414 = vpop.xlane.xlu0 %4413
  %v4415 = vsel %vm4191, %v4355, 0.0
  %4416 = vadd.xlane.f32.xlu0 %v4415
  %v4417 = vpop.xlane.xlu0 %4416
  %v4418 = vsel %vm4191, %v4356, 0.0
  %4419 = vadd.xlane.f32.xlu0 %v4418
  %v4420 = vpop.xlane.xlu0 %4419
  %v4421 = vsel %vm4191, %v4357, 0.0
  %4422 = vadd.xlane.f32.xlu0 %v4421
  %v4423 = vpop.xlane.xlu0 %4422
  %v4424 = vsel %vm4191, %v4358, 0.0
  %4425 = vadd.xlane.f32.xlu0 %v4424
  %v4426 = vpop.xlane.xlu0 %4425
  %v4427 = vsel %vm4191, %v4359, 0.0
  %4428 = vadd.xlane.f32.xlu0 %v4427
  %v4429 = vpop.xlane.xlu0 %4428
  %v4430 = vsel %vm4191, %v4360, 0.0
  %4431 = vadd.xlane.f32.xlu0 %v4430
  %v4432 = vpop.xlane.xlu0 %4431
  %v4433 = vsel %vm4191, %v4361, 0.0
  %4434 = vadd.xlane.f32.xlu0 %v4433
  %v4435 = vpop.xlane.xlu0 %4434
  %v4436 = vsel %vm4191, %v4362, 0.0
  %4437 = vadd.xlane.f32.xlu0 %v4436
  %v4438 = vpop.xlane.xlu0 %4437
  %v4439 = vsel %vm4191, %v4363, 0.0
  %4440 = vadd.xlane.f32.xlu0 %v4439
  %v4441 = vpop.xlane.xlu0 %4440
  %v4442 = vsel %vm4191, %v4364, 0.0
  %4443 = vadd.xlane.f32.xlu0 %v4442
  %v4444 = vpop.xlane.xlu0 %4443
  %v4445 = vsel %vm4191, %v4365, 0.0
  %4446 = vadd.xlane.f32.xlu0 %v4445
  %v4447 = vpop.xlane.xlu0 %4446
  %v4448 = vsel %vm4191, %v4366, 0.0
  %4449 = vadd.xlane.f32.xlu0 %v4448
  %v4450 = vpop.xlane.xlu0 %4449
  %v4451 = vsel %vm4191, %v4367, 0.0
  %4452 = vadd.xlane.f32.xlu0 %v4451
  %v4453 = vpop.xlane.xlu0 %4452
  %v4454 = vsel %vm4191, %v4368, 0.0
  %4455 = vadd.xlane.f32.xlu0 %v4454
  %v4456 = vpop.xlane.xlu0 %4455
  %v4457 = vsel %vm4191, %v4369, 0.0
  %4458 = vadd.xlane.f32.xlu0 %v4457
  %v4459 = vpop.xlane.xlu0 %4458
  %v4460 = vsel %vm4191, %v4370, 0.0
  %4461 = vadd.xlane.f32.xlu0 %v4460
  %v4462 = vpop.xlane.xlu0 %4461
  %v4463 = vsel %vm4191, %v4371, 0.0
  %4464 = vadd.xlane.f32.xlu0 %v4463
  %v4465 = vpop.xlane.xlu0 %4464
  %v4466 = vsel %vm4191, %v4372, 0.0
  %4467 = vadd.xlane.f32.xlu0 %v4466
  %v4468 = vpop.xlane.xlu0 %4467
  %v4469 = vsel %vm4191, %v4373, 0.0
  %4470 = vadd.xlane.f32.xlu0 %v4469
  %v4471 = vpop.xlane.xlu0 %4470
  %v4472 = vsel %vm4191, %v4374, 0.0
  %4473 = vadd.xlane.f32.xlu0 %v4472
  %v4474 = vpop.xlane.xlu0 %4473
  %v4475 = vsel %vm4191, %v4375, 0.0
  %4476 = vadd.xlane.f32.xlu0 %v4475
  %v4477 = vpop.xlane.xlu0 %4476
  %v4478 = vsel %vm4191, %v4376, 0.0
  %4479 = vadd.xlane.f32.xlu0 %v4478
  %v4480 = vpop.xlane.xlu0 %4479
  %v4481 = vsel %vm4191, %v4377, 0.0
  %4482 = vadd.xlane.f32.xlu0 %v4481
  %v4483 = vpop.xlane.xlu0 %4482
  %v4484 = vsel %vm4191, %v4378, 0.0
  %4485 = vadd.xlane.f32.xlu0 %v4484
  %v4486 = vpop.xlane.xlu0 %4485
  %v4487 = vsel %vm4191, %v4379, 0.0
  %4488 = vadd.xlane.f32.xlu0 %v4487
  %v4489 = vpop.xlane.xlu0 %4488
  %v4490 = vsel %vm4191, %v4380, 0.0
  %4491 = vadd.xlane.f32.xlu0 %v4490
  %v4492 = vpop.xlane.xlu0 %4491
  %v4493 = vsel %vm4191, %v4381, 0.0
  %4494 = vadd.xlane.f32.xlu0 %v4493
  %v4495 = vpop.xlane.xlu0 %4494
  %v4496 = vmul.f32 %v4384, 0.020408163
  %v4497 = vmul.f32 %v4387, 0.020408163
  %v4498 = vmul.f32 %v4390, 0.020408163
  %v4499 = vmul.f32 %v4393, 0.020408163
  %v4500 = vmul.f32 %v4396, 0.020408163
  %v4501 = vmul.f32 %v4399, 0.020408163
  %v4502 = vmul.f32 %v4402, 0.020408163
  %v4503 = vmul.f32 %v4405, 0.020408163
  %v4504 = vmul.f32 %v4408, 0.020408163
  %v4505 = vmul.f32 %v4411, 0.020408163
  %v4506 = vmul.f32 %v4414, 0.020408163
  %v4507 = vmul.f32 %v4417, 0.020408163
  %v4508 = vmul.f32 %v4420, 0.020408163
  %v4509 = vmul.f32 %v4423, 0.020408163
  %v4510 = vmul.f32 %v4426, 0.020408163
  %v4511 = vmul.f32 %v4429, 0.020408163
  %v4512 = vmul.f32 %v4432, 0.020408163
  %v4513 = vmul.f32 %v4435, 0.020408163
  %v4514 = vmul.f32 %v4438, 0.020408163
  %v4515 = vmul.f32 %v4441, 0.020408163
  %v4516 = vmul.f32 %v4444, 0.020408163
  %v4517 = vmul.f32 %v4447, 0.020408163
  %v4518 = vmul.f32 %v4450, 0.020408163
  %v4519 = vmul.f32 %v4453, 0.020408163
  %v4520 = vmul.f32 %v4456, 0.020408163
  %v4521 = vmul.f32 %v4459, 0.020408163
  %v4522 = vmul.f32 %v4462, 0.020408163
  %v4523 = vmul.f32 %v4465, 0.020408163
  %v4524 = vmul.f32 %v4468, 0.020408163
  %v4525 = vmul.f32 %v4471, 0.020408163
  %v4526 = vmul.f32 %v4474, 0.020408163
  %v4527 = vmul.f32 %v4477, 0.020408163
  %v4528 = vmul.f32 %v4480, 0.020408163
  %v4529 = vmul.f32 %v4483, 0.020408163
  %v4530 = vmul.f32 %v4486, 0.020408163
  %v4531 = vmul.f32 %v4489, 0.020408163
  %v4532 = vmul.f32 %v4492, 0.020408163
  %v4533 = vmul.f32 %v4495, 0.020408163
  %v4534 = vmul.f32 %v4306, %v4306
  %v4535 = vmul.f32 %v4307, %v4307
  %v4536 = vmul.f32 %v4308, %v4308
  %v4537 = vmul.f32 %v4309, %v4309
  %v4538 = vmul.f32 %v4310, %v4310
  %v4539 = vmul.f32 %v4311, %v4311
  %v4540 = vmul.f32 %v4312, %v4312
  %v4541 = vmul.f32 %v4313, %v4313
  %v4542 = vmul.f32 %v4314, %v4314
  %v4543 = vmul.f32 %v4315, %v4315
  %v4544 = vmul.f32 %v4316, %v4316
  %v4545 = vmul.f32 %v4317, %v4317
  %v4546 = vmul.f32 %v4318, %v4318
  %v4547 = vmul.f32 %v4319, %v4319
  %v4548 = vmul.f32 %v4320, %v4320
  %v4549 = vmul.f32 %v4321, %v4321
  %v4550 = vmul.f32 %v4322, %v4322
  %v4551 = vmul.f32 %v4323, %v4323
  %v4552 = vmul.f32 %v4324, %v4324
  %v4553 = vmul.f32 %v4325, %v4325
  %v4554 = vmul.f32 %v4326, %v4326
  %v4555 = vmul.f32 %v4327, %v4327
  %v4556 = vmul.f32 %v4328, %v4328
  %v4557 = vmul.f32 %v4329, %v4329
  %v4558 = vmul.f32 %v4330, %v4330
  %v4559 = vmul.f32 %v4331, %v4331
  %v4560 = vmul.f32 %v4332, %v4332
  %v4561 = vmul.f32 %v4333, %v4333
  %v4562 = vmul.f32 %v4334, %v4334
  %v4563 = vmul.f32 %v4335, %v4335
  %v4564 = vmul.f32 %v4336, %v4336
  %v4565 = vmul.f32 %v4337, %v4337
  %v4566 = vmul.f32 %v4338, %v4338
  %v4567 = vmul.f32 %v4339, %v4339
  %v4568 = vmul.f32 %v4340, %v4340
  %v4569 = vmul.f32 %v4341, %v4341
  %v4570 = vmul.f32 %v4342, %v4342
  %v4571 = vmul.f32 %v4343, %v4343
  %v4572 = vsub.f32 %v4496, %v4534
  %v4573 = vsub.f32 %v4497, %v4535
  %v4574 = vsub.f32 %v4498, %v4536
  %v4575 = vsub.f32 %v4499, %v4537
  %v4576 = vsub.f32 %v4500, %v4538
  %v4577 = vsub.f32 %v4501, %v4539
  %v4578 = vsub.f32 %v4502, %v4540
  %v4579 = vsub.f32 %v4503, %v4541
  %v4580 = vsub.f32 %v4504, %v4542
  %v4581 = vsub.f32 %v4505, %v4543
  %v4582 = vsub.f32 %v4506, %v4544
  %v4583 = vsub.f32 %v4507, %v4545
  %v4584 = vsub.f32 %v4508, %v4546
  %v4585 = vsub.f32 %v4509, %v4547
  %v4586 = vsub.f32 %v4510, %v4548
  %v4587 = vsub.f32 %v4511, %v4549
  %v4588 = vsub.f32 %v4512, %v4550
  %v4589 = vsub.f32 %v4513, %v4551
  %v4590 = vsub.f32 %v4514, %v4552
  %v4591 = vsub.f32 %v4515, %v4553
  %v4592 = vsub.f32 %v4516, %v4554
  %v4593 = vsub.f32 %v4517, %v4555
  %v4594 = vsub.f32 %v4518, %v4556
  %v4595 = vsub.f32 %v4519, %v4557
  %v4596 = vsub.f32 %v4520, %v4558
  %v4597 = vsub.f32 %v4521, %v4559
  %v4598 = vsub.f32 %v4522, %v4560
  %v4599 = vsub.f32 %v4523, %v4561
  %v4600 = vsub.f32 %v4524, %v4562
  %v4601 = vsub.f32 %v4525, %v4563
  %v4602 = vsub.f32 %v4526, %v4564
  %v4603 = vsub.f32 %v4527, %v4565
  %v4604 = vsub.f32 %v4528, %v4566
  %v4605 = vsub.f32 %v4529, %v4567
  %v4606 = vsub.f32 %v4530, %v4568
  %v4607 = vsub.f32 %v4531, %v4569
  %v4608 = vsub.f32 %v4532, %v4570
  %v4609 = vsub.f32 %v4533, %v4571
  %v4610 = vmax.f32 %v4572, 0.0
  %v4611 = vmax.f32 %v4573, 0.0
  %v4612 = vmax.f32 %v4574, 0.0
  %v4613 = vmax.f32 %v4575, 0.0
  %v4614 = vmax.f32 %v4576, 0.0
  %v4615 = vmax.f32 %v4577, 0.0
  %v4616 = vmax.f32 %v4578, 0.0
  %v4617 = vmax.f32 %v4579, 0.0
  %v4618 = vmax.f32 %v4580, 0.0
  %v4619 = vmax.f32 %v4581, 0.0
  %v4620 = vmax.f32 %v4582, 0.0
  %v4621 = vmax.f32 %v4583, 0.0
  %v4622 = vmax.f32 %v4584, 0.0
  %v4623 = vmax.f32 %v4585, 0.0
  %v4624 = vmax.f32 %v4586, 0.0
  %v4625 = vmax.f32 %v4587, 0.0
  %v4626 = vmax.f32 %v4588, 0.0
  %v4627 = vmax.f32 %v4589, 0.0
  %v4628 = vmax.f32 %v4590, 0.0
  %v4629 = vmax.f32 %v4591, 0.0
  %v4630 = vmax.f32 %v4592, 0.0
  %v4631 = vmax.f32 %v4593, 0.0
  %v4632 = vmax.f32 %v4594, 0.0
  %v4633 = vmax.f32 %v4595, 0.0
  %v4634 = vmax.f32 %v4596, 0.0
  %v4635 = vmax.f32 %v4597, 0.0
  %v4636 = vmax.f32 %v4598, 0.0
  %v4637 = vmax.f32 %v4599, 0.0
  %v4638 = vmax.f32 %v4600, 0.0
  %v4639 = vmax.f32 %v4601, 0.0
  %v4640 = vmax.f32 %v4602, 0.0
  %v4641 = vmax.f32 %v4603, 0.0
  %v4642 = vmax.f32 %v4604, 0.0
  %v4643 = vmax.f32 %v4605, 0.0
  %v4644 = vmax.f32 %v4606, 0.0
  %v4645 = vmax.f32 %v4607, 0.0
  %v4646 = vmax.f32 %v4608, 0.0
  %v4647 = vmax.f32 %v4609, 0.0
  %v4648 = vadd.f32 %v4610, 0.001
  %v4649 = vadd.f32 %v4611, 0.001
  %v4650 = vadd.f32 %v4612, 0.001
  %v4651 = vadd.f32 %v4613, 0.001
  %v4652 = vadd.f32 %v4614, 0.001
  %v4653 = vadd.f32 %v4615, 0.001
  %v4654 = vadd.f32 %v4616, 0.001
  %v4655 = vadd.f32 %v4617, 0.001
  %v4656 = vadd.f32 %v4618, 0.001
  %v4657 = vadd.f32 %v4619, 0.001
  %v4658 = vadd.f32 %v4620, 0.001
  %v4659 = vadd.f32 %v4621, 0.001
  %v4660 = vadd.f32 %v4622, 0.001
  %v4661 = vadd.f32 %v4623, 0.001
  %v4662 = vadd.f32 %v4624, 0.001
  %v4663 = vadd.f32 %v4625, 0.001
  %v4664 = vadd.f32 %v4626, 0.001
  %v4665 = vadd.f32 %v4627, 0.001
  %v4666 = vadd.f32 %v4628, 0.001
  %v4667 = vadd.f32 %v4629, 0.001
  %v4668 = vadd.f32 %v4630, 0.001
  %v4669 = vadd.f32 %v4631, 0.001
  %v4670 = vadd.f32 %v4632, 0.001
  %v4671 = vadd.f32 %v4633, 0.001
  %v4672 = vadd.f32 %v4634, 0.001
  %v4673 = vadd.f32 %v4635, 0.001
  %v4674 = vadd.f32 %v4636, 0.001
  %v4675 = vadd.f32 %v4637, 0.001
  %v4676 = vadd.f32 %v4638, 0.001
  %v4677 = vadd.f32 %v4639, 0.001
  %v4678 = vadd.f32 %v4640, 0.001
  %v4679 = vadd.f32 %v4641, 0.001
  %v4680 = vadd.f32 %v4642, 0.001
  %v4681 = vadd.f32 %v4643, 0.001
  %v4682 = vadd.f32 %v4644, 0.001
  %v4683 = vadd.f32 %v4645, 0.001
  %v4684 = vadd.f32 %v4646, 0.001
  %v4685 = vadd.f32 %v4647, 0.001
  %v4686 = vrsqrt.pop %v4648
  %v4687 = vrsqrt.pop %v4649
  %v4688 = vrsqrt.pop %v4650
  %v4689 = vrsqrt.pop %v4651
  %v4690 = vrsqrt.pop %v4652
  %v4691 = vrsqrt.pop %v4653
  %v4692 = vrsqrt.pop %v4654
  %v4693 = vrsqrt.pop %v4655
  %v4694 = vrsqrt.pop %v4656
  %v4695 = vrsqrt.pop %v4657
  %v4696 = vrsqrt.pop %v4658
  %v4697 = vrsqrt.pop %v4659
  %v4698 = vrsqrt.pop %v4660
  %v4699 = vrsqrt.pop %v4661
  %v4700 = vrsqrt.pop %v4662
  %v4701 = vrsqrt.pop %v4663
  %v4702 = vrsqrt.pop %v4664
  %v4703 = vrsqrt.pop %v4665
  %v4704 = vrsqrt.pop %v4666
  %v4705 = vrsqrt.pop %v4667
  %v4706 = vrsqrt.pop %v4668
  %v4707 = vrsqrt.pop %v4669
  %v4708 = vrsqrt.pop %v4670
  %v4709 = vrsqrt.pop %v4671
  %v4710 = vrsqrt.pop %v4672
  %v4711 = vrsqrt.pop %v4673
  %v4712 = vrsqrt.pop %v4674
  %v4713 = vrsqrt.pop %v4675
  %v4714 = vrsqrt.pop %v4676
  %v4715 = vrsqrt.pop %v4677
  %v4716 = vrsqrt.pop %v4678
  %v4717 = vrsqrt.pop %v4679
  %v4718 = vrsqrt.pop %v4680
  %v4719 = vrsqrt.pop %v4681
  %v4720 = vrsqrt.pop %v4682
  %v4721 = vrsqrt.pop %v4683
  %v4722 = vrsqrt.pop %v4684
  %v4723 = vrsqrt.pop %v4685
  %v4724 = vld [vmem:[%s3] sm:$0xff]
  %v4725 = vld [vmem:[%s3 + $0x8] sm:$0xff]
  %v4726 = vld [vmem:[%s3 + $0x10] sm:$0xff]
  %v4727 = vld [vmem:[%s3 + $0x18] sm:$0xff]
  %v4728 = vld [vmem:[%s3 + $0x20] sm:$0xff]
  %v4729 = vld [vmem:[%s3 + $0x28] sm:$0xff]
  %v4730 = vld [vmem:[%s3 + $0x30] sm:$0xff]
  %v4731 = vld [vmem:[%s3 + $0x38] sm:$0xff]
  %v4732 = vld [vmem:[%s3 + $0x40] sm:$0xff]
  %v4733 = vld [vmem:[%s3 + $0x48] sm:$0xff]
  %v4734 = vld [vmem:[%s3 + $0x50] sm:$0xff]
  %v4735 = vld [vmem:[%s3 + $0x58] sm:$0xff]
  %v4736 = vld [vmem:[%s3 + $0x60] sm:$0xff]
  %v4737 = vld [vmem:[%s3 + $0x68] sm:$0xff]
  %v4738 = vld [vmem:[%s3 + $0x70] sm:$0xff]
  %v4739 = vld [vmem:[%s3 + $0x78] sm:$0xff]
  %v4740 = vld [vmem:[%s3 + $0x80] sm:$0xff]
  %v4741 = vld [vmem:[%s3 + $0x88] sm:$0xff]
  %v4742 = vld [vmem:[%s3 + $0x90] sm:$0xff]
  %v4743 = vld [vmem:[%s3 + $0x98] sm:$0xff]
  %v4744 = vld [vmem:[%s3 + $0xa0] sm:$0xff]
  %v4745 = vld [vmem:[%s3 + $0xa8] sm:$0xff]
  %v4746 = vld [vmem:[%s3 + $0xb0] sm:$0xff]
  %v4747 = vld [vmem:[%s3 + $0xb8] sm:$0xff]
  %v4748 = vld [vmem:[%s3 + $0xc0] sm:$0xff]
  %v4749 = vld [vmem:[%s3 + $0xc8] sm:$0xff]
  %v4750 = vld [vmem:[%s3 + $0xd0] sm:$0xff]
  %v4751 = vld [vmem:[%s3 + $0xd8] sm:$0xff]
  %v4752 = vld [vmem:[%s3 + $0xe0] sm:$0xff]
  %v4753 = vld [vmem:[%s3 + $0xe8] sm:$0xff]
  %v4754 = vld [vmem:[%s3 + $0xf0] sm:$0xff]
  %v4755 = vld [vmem:[%s3 + $0xf8] sm:$0xff]
  %v4756 = vld [vmem:[%s3 + $0x100] sm:$0xff]
  %v4757 = vld [vmem:[%s3 + $0x108] sm:$0xff]
  %v4758 = vld [vmem:[%s3 + $0x110] sm:$0xff]
  %v4759 = vld [vmem:[%s3 + $0x118] sm:$0xff]
  %v4760 = vld [vmem:[%s3 + $0x120] sm:$0xff]
  %v4761 = vld [vmem:[%s3 + $0x128] sm:$0xff]
  %v4762 = vmul.f32 %v4686, %v4724
  %v4763 = vmul.f32 %v4687, %v4725
  %v4764 = vmul.f32 %v4688, %v4726
  %v4765 = vmul.f32 %v4689, %v4727
  %v4766 = vmul.f32 %v4690, %v4728
  %v4767 = vmul.f32 %v4691, %v4729
  %v4768 = vmul.f32 %v4692, %v4730
  %v4769 = vmul.f32 %v4693, %v4731
  %v4770 = vmul.f32 %v4694, %v4732
  %v4771 = vmul.f32 %v4695, %v4733
  %v4772 = vmul.f32 %v4696, %v4734
  %v4773 = vmul.f32 %v4697, %v4735
  %v4774 = vmul.f32 %v4698, %v4736
  %v4775 = vmul.f32 %v4699, %v4737
  %v4776 = vmul.f32 %v4700, %v4738
  %v4777 = vmul.f32 %v4701, %v4739
  %v4778 = vmul.f32 %v4702, %v4740
  %v4779 = vmul.f32 %v4703, %v4741
  %v4780 = vmul.f32 %v4704, %v4742
  %v4781 = vmul.f32 %v4705, %v4743
  %v4782 = vmul.f32 %v4706, %v4744
  %v4783 = vmul.f32 %v4707, %v4745
  %v4784 = vmul.f32 %v4708, %v4746
  %v4785 = vmul.f32 %v4709, %v4747
  %v4786 = vmul.f32 %v4710, %v4748
  %v4787 = vmul.f32 %v4711, %v4749
  %v4788 = vmul.f32 %v4712, %v4750
  %v4789 = vmul.f32 %v4713, %v4751
  %v4790 = vmul.f32 %v4714, %v4752
  %v4791 = vmul.f32 %v4715, %v4753
  %v4792 = vmul.f32 %v4716, %v4754
  %v4793 = vmul.f32 %v4717, %v4755
  %v4794 = vmul.f32 %v4718, %v4756
  %v4795 = vmul.f32 %v4719, %v4757
  %v4796 = vmul.f32 %v4720, %v4758
  %v4797 = vmul.f32 %v4721, %v4759
  %v4798 = vmul.f32 %v4722, %v4760
  %v4799 = vmul.f32 %v4723, %v4761
  %v4800 = vsub.f32 %v4041, %v4306
  %v4801 = vsub.f32 %v4044, %v4307
  %v4802 = vsub.f32 %v4049, %v4308
  %v4803 = vsub.f32 %v4052, %v4309
  %v4804 = vsub.f32 %v4057, %v4310
  %v4805 = vsub.f32 %v4060, %v4311
  %v4806 = vsub.f32 %v4065, %v4312
  %v4807 = vsub.f32 %v4068, %v4313
  %v4808 = vsub.f32 %v4073, %v4314
  %v4809 = vsub.f32 %v4076, %v4315
  %v4810 = vsub.f32 %v4081, %v4316
  %v4811 = vsub.f32 %v4084, %v4317
  %v4812 = vsub.f32 %v4089, %v4318
  %v4813 = vsub.f32 %v4092, %v4319
  %v4814 = vsub.f32 %v4097, %v4320
  %v4815 = vsub.f32 %v4100, %v4321
  %v4816 = vsub.f32 %v4105, %v4322
  %v4817 = vsub.f32 %v4108, %v4323
  %v4818 = vsub.f32 %v4113, %v4324
  %v4819 = vsub.f32 %v4116, %v4325
  %v4820 = vsub.f32 %v4121, %v4326
  %v4821 = vsub.f32 %v4124, %v4327
  %v4822 = vsub.f32 %v4129, %v4328
  %v4823 = vsub.f32 %v4132, %v4329
  %v4824 = vsub.f32 %v4137, %v4330
  %v4825 = vsub.f32 %v4140, %v4331
  %v4826 = vsub.f32 %v4145, %v4332
  %v4827 = vsub.f32 %v4148, %v4333
  %v4828 = vsub.f32 %v4153, %v4334
  %v4829 = vsub.f32 %v4156, %v4335
  %v4830 = vsub.f32 %v4161, %v4336
  %v4831 = vsub.f32 %v4164, %v4337
  %v4832 = vsub.f32 %v4169, %v4338
  %v4833 = vsub.f32 %v4172, %v4339
  %v4834 = vsub.f32 %v4177, %v4340
  %v4835 = vsub.f32 %v4180, %v4341
  %v4836 = vsub.f32 %v4185, %v4342
  %v4837 = vsub.f32 %v4188, %v4343
  %4839 = vset.pattern.permute.xlu0 0
  %4840 = vperm.xlu0 %4839, %v4762
  %v4841 = vpop.permute.xlu0 %4840
  %4844 = vset.pattern.permute.xlu0 0
  %4845 = vperm.xlu0 %4844, %v4763
  %v4846 = vpop.permute.xlu0 %4845
  %4849 = vset.pattern.permute.xlu0 0
  %4850 = vperm.xlu0 %4849, %v4764
  %v4851 = vpop.permute.xlu0 %4850
  %4854 = vset.pattern.permute.xlu0 0
  %4855 = vperm.xlu0 %4854, %v4765
  %v4856 = vpop.permute.xlu0 %4855
  %4859 = vset.pattern.permute.xlu0 0
  %4860 = vperm.xlu0 %4859, %v4766
  %v4861 = vpop.permute.xlu0 %4860
  %4864 = vset.pattern.permute.xlu0 0
  %4865 = vperm.xlu0 %4864, %v4767
  %v4866 = vpop.permute.xlu0 %4865
  %4869 = vset.pattern.permute.xlu0 0
  %4870 = vperm.xlu0 %4869, %v4768
  %v4871 = vpop.permute.xlu0 %4870
  %4874 = vset.pattern.permute.xlu0 0
  %4875 = vperm.xlu0 %4874, %v4769
  %v4876 = vpop.permute.xlu0 %4875
  %4879 = vset.pattern.permute.xlu0 0
  %4880 = vperm.xlu0 %4879, %v4770
  %v4881 = vpop.permute.xlu0 %4880
  %4884 = vset.pattern.permute.xlu0 0
  %4885 = vperm.xlu0 %4884, %v4771
  %v4886 = vpop.permute.xlu0 %4885
  %4889 = vset.pattern.permute.xlu0 0
  %4890 = vperm.xlu0 %4889, %v4772
  %v4891 = vpop.permute.xlu0 %4890
  %4894 = vset.pattern.permute.xlu0 0
  %4895 = vperm.xlu0 %4894, %v4773
  %v4896 = vpop.permute.xlu0 %4895
  %4899 = vset.pattern.permute.xlu0 0
  %4900 = vperm.xlu0 %4899, %v4774
  %v4901 = vpop.permute.xlu0 %4900
  %4904 = vset.pattern.permute.xlu0 0
  %4905 = vperm.xlu0 %4904, %v4775
  %v4906 = vpop.permute.xlu0 %4905
  %4909 = vset.pattern.permute.xlu0 0
  %4910 = vperm.xlu0 %4909, %v4776
  %v4911 = vpop.permute.xlu0 %4910
  %4914 = vset.pattern.permute.xlu0 0
  %4915 = vperm.xlu0 %4914, %v4777
  %v4916 = vpop.permute.xlu0 %4915
  %4919 = vset.pattern.permute.xlu0 0
  %4920 = vperm.xlu0 %4919, %v4778
  %v4921 = vpop.permute.xlu0 %4920
  %4924 = vset.pattern.permute.xlu0 0
  %4925 = vperm.xlu0 %4924, %v4779
  %v4926 = vpop.permute.xlu0 %4925
  %4929 = vset.pattern.permute.xlu0 0
  %4930 = vperm.xlu0 %4929, %v4780
  %v4931 = vpop.permute.xlu0 %4930
  %4934 = vset.pattern.permute.xlu0 0
  %4935 = vperm.xlu0 %4934, %v4781
  %v4936 = vpop.permute.xlu0 %4935
  %4939 = vset.pattern.permute.xlu0 0
  %4940 = vperm.xlu0 %4939, %v4782
  %v4941 = vpop.permute.xlu0 %4940
  %4944 = vset.pattern.permute.xlu0 0
  %4945 = vperm.xlu0 %4944, %v4783
  %v4946 = vpop.permute.xlu0 %4945
  %4949 = vset.pattern.permute.xlu0 0
  %4950 = vperm.xlu0 %4949, %v4784
  %v4951 = vpop.permute.xlu0 %4950
  %4954 = vset.pattern.permute.xlu0 0
  %4955 = vperm.xlu0 %4954, %v4785
  %v4956 = vpop.permute.xlu0 %4955
  %4959 = vset.pattern.permute.xlu0 0
  %4960 = vperm.xlu0 %4959, %v4786
  %v4961 = vpop.permute.xlu0 %4960
  %4964 = vset.pattern.permute.xlu0 0
  %4965 = vperm.xlu0 %4964, %v4787
  %v4966 = vpop.permute.xlu0 %4965
  %4969 = vset.pattern.permute.xlu0 0
  %4970 = vperm.xlu0 %4969, %v4788
  %v4971 = vpop.permute.xlu0 %4970
  %4974 = vset.pattern.permute.xlu0 0
  %4975 = vperm.xlu0 %4974, %v4789
  %v4976 = vpop.permute.xlu0 %4975
  %4979 = vset.pattern.permute.xlu0 0
  %4980 = vperm.xlu0 %4979, %v4790
  %v4981 = vpop.permute.xlu0 %4980
  %4984 = vset.pattern.permute.xlu0 0
  %4985 = vperm.xlu0 %4984, %v4791
  %v4986 = vpop.permute.xlu0 %4985
  %4989 = vset.pattern.permute.xlu0 0
  %4990 = vperm.xlu0 %4989, %v4792
  %v4991 = vpop.permute.xlu0 %4990
  %4994 = vset.pattern.permute.xlu0 0
  %4995 = vperm.xlu0 %4994, %v4793
  %v4996 = vpop.permute.xlu0 %4995
  %4999 = vset.pattern.permute.xlu0 0
  %5000 = vperm.xlu0 %4999, %v4794
  %v5001 = vpop.permute.xlu0 %5000
  %5004 = vset.pattern.permute.xlu0 0
  %5005 = vperm.xlu0 %5004, %v4795
  %v5006 = vpop.permute.xlu0 %5005
  %5009 = vset.pattern.permute.xlu0 0
  %5010 = vperm.xlu0 %5009, %v4796
  %v5011 = vpop.permute.xlu0 %5010
  %5014 = vset.pattern.permute.xlu0 0
  %5015 = vperm.xlu0 %5014, %v4797
  %v5016 = vpop.permute.xlu0 %5015
  %5019 = vset.pattern.permute.xlu0 0
  %5020 = vperm.xlu0 %5019, %v4798
  %v5021 = vpop.permute.xlu0 %5020
  %5024 = vset.pattern.permute.xlu0 0
  %5025 = vperm.xlu0 %5024, %v4799
  %v5026 = vpop.permute.xlu0 %5025
  %v5028 = vmul.f32 %v4800, %v4841
  %v5029 = vmul.f32 %v4801, %v4846
  %v5030 = vmul.f32 %v4802, %v4851
  %v5031 = vmul.f32 %v4803, %v4856
  %v5032 = vmul.f32 %v4804, %v4861
  %v5033 = vmul.f32 %v4805, %v4866
  %v5034 = vmul.f32 %v4806, %v4871
  %v5035 = vmul.f32 %v4807, %v4876
  %v5036 = vmul.f32 %v4808, %v4881
  %v5037 = vmul.f32 %v4809, %v4886
  %v5038 = vmul.f32 %v4810, %v4891
  %v5039 = vmul.f32 %v4811, %v4896
  %v5040 = vmul.f32 %v4812, %v4901
  %v5041 = vmul.f32 %v4813, %v4906
  %v5042 = vmul.f32 %v4814, %v4911
  %v5043 = vmul.f32 %v4815, %v4916
  %v5044 = vmul.f32 %v4816, %v4921
  %v5045 = vmul.f32 %v4817, %v4926
  %v5046 = vmul.f32 %v4818, %v4931
  %v5047 = vmul.f32 %v4819, %v4936
  %v5048 = vmul.f32 %v4820, %v4941
  %v5049 = vmul.f32 %v4821, %v4946
  %v5050 = vmul.f32 %v4822, %v4951
  %v5051 = vmul.f32 %v4823, %v4956
  %v5052 = vmul.f32 %v4824, %v4961
  %v5053 = vmul.f32 %v4825, %v4966
  %v5054 = vmul.f32 %v4826, %v4971
  %v5055 = vmul.f32 %v4827, %v4976
  %v5056 = vmul.f32 %v4828, %v4981
  %v5057 = vmul.f32 %v4829, %v4986
  %v5058 = vmul.f32 %v4830, %v4991
  %v5059 = vmul.f32 %v4831, %v4996
  %v5060 = vmul.f32 %v4832, %v5001
  %v5061 = vmul.f32 %v4833, %v5006
  %v5062 = vmul.f32 %v4834, %v5011
  %v5063 = vmul.f32 %v4835, %v5016
  %v5064 = vmul.f32 %v4836, %v5021
  %v5065 = vmul.f32 %v4837, %v5026
  %v5066 = vld [vmem:[%s4] sm:$0xff]
  %v5067 = vld [vmem:[%s4 + $0x8] sm:$0xff]
  %v5068 = vld [vmem:[%s4 + $0x10] sm:$0xff]
  %v5069 = vld [vmem:[%s4 + $0x18] sm:$0xff]
  %v5070 = vld [vmem:[%s4 + $0x20] sm:$0xff]
  %v5071 = vld [vmem:[%s4 + $0x28] sm:$0xff]
  %v5072 = vld [vmem:[%s4 + $0x30] sm:$0xff]
  %v5073 = vld [vmem:[%s4 + $0x38] sm:$0xff]
  %v5074 = vld [vmem:[%s4 + $0x40] sm:$0xff]
  %v5075 = vld [vmem:[%s4 + $0x48] sm:$0xff]
  %v5076 = vld [vmem:[%s4 + $0x50] sm:$0xff]
  %v5077 = vld [vmem:[%s4 + $0x58] sm:$0xff]
  %v5078 = vld [vmem:[%s4 + $0x60] sm:$0xff]
  %v5079 = vld [vmem:[%s4 + $0x68] sm:$0xff]
  %v5080 = vld [vmem:[%s4 + $0x70] sm:$0xff]
  %v5081 = vld [vmem:[%s4 + $0x78] sm:$0xff]
  %v5082 = vld [vmem:[%s4 + $0x80] sm:$0xff]
  %v5083 = vld [vmem:[%s4 + $0x88] sm:$0xff]
  %v5084 = vld [vmem:[%s4 + $0x90] sm:$0xff]
  %v5085 = vld [vmem:[%s4 + $0x98] sm:$0xff]
  %v5086 = vld [vmem:[%s4 + $0xa0] sm:$0xff]
  %v5087 = vld [vmem:[%s4 + $0xa8] sm:$0xff]
  %v5088 = vld [vmem:[%s4 + $0xb0] sm:$0xff]
  %v5089 = vld [vmem:[%s4 + $0xb8] sm:$0xff]
  %v5090 = vld [vmem:[%s4 + $0xc0] sm:$0xff]
  %v5091 = vld [vmem:[%s4 + $0xc8] sm:$0xff]
  %v5092 = vld [vmem:[%s4 + $0xd0] sm:$0xff]
  %v5093 = vld [vmem:[%s4 + $0xd8] sm:$0xff]
  %v5094 = vld [vmem:[%s4 + $0xe0] sm:$0xff]
  %v5095 = vld [vmem:[%s4 + $0xe8] sm:$0xff]
  %v5096 = vld [vmem:[%s4 + $0xf0] sm:$0xff]
  %v5097 = vld [vmem:[%s4 + $0xf8] sm:$0xff]
  %v5098 = vld [vmem:[%s4 + $0x100] sm:$0xff]
  %v5099 = vld [vmem:[%s4 + $0x108] sm:$0xff]
  %v5100 = vld [vmem:[%s4 + $0x110] sm:$0xff]
  %v5101 = vld [vmem:[%s4 + $0x118] sm:$0xff]
  %v5102 = vld [vmem:[%s4 + $0x120] sm:$0xff]
  %v5103 = vld [vmem:[%s4 + $0x128] sm:$0xff]
  %5105 = vset.pattern.permute.xlu0 0
  %5106 = vperm.xlu0 %5105, %v5066
  %v5107 = vpop.permute.xlu0 %5106
  %5110 = vset.pattern.permute.xlu0 0
  %5111 = vperm.xlu0 %5110, %v5067
  %v5112 = vpop.permute.xlu0 %5111
  %5115 = vset.pattern.permute.xlu0 0
  %5116 = vperm.xlu0 %5115, %v5068
  %v5117 = vpop.permute.xlu0 %5116
  %5120 = vset.pattern.permute.xlu0 0
  %5121 = vperm.xlu0 %5120, %v5069
  %v5122 = vpop.permute.xlu0 %5121
  %5125 = vset.pattern.permute.xlu0 0
  %5126 = vperm.xlu0 %5125, %v5070
  %v5127 = vpop.permute.xlu0 %5126
  %5130 = vset.pattern.permute.xlu0 0
  %5131 = vperm.xlu0 %5130, %v5071
  %v5132 = vpop.permute.xlu0 %5131
  %5135 = vset.pattern.permute.xlu0 0
  %5136 = vperm.xlu0 %5135, %v5072
  %v5137 = vpop.permute.xlu0 %5136
  %5140 = vset.pattern.permute.xlu0 0
  %5141 = vperm.xlu0 %5140, %v5073
  %v5142 = vpop.permute.xlu0 %5141
  %5145 = vset.pattern.permute.xlu0 0
  %5146 = vperm.xlu0 %5145, %v5074
  %v5147 = vpop.permute.xlu0 %5146
  %5150 = vset.pattern.permute.xlu0 0
  %5151 = vperm.xlu0 %5150, %v5075
  %v5152 = vpop.permute.xlu0 %5151
  %5155 = vset.pattern.permute.xlu0 0
  %5156 = vperm.xlu0 %5155, %v5076
  %v5157 = vpop.permute.xlu0 %5156
  %5160 = vset.pattern.permute.xlu0 0
  %5161 = vperm.xlu0 %5160, %v5077
  %v5162 = vpop.permute.xlu0 %5161
  %5165 = vset.pattern.permute.xlu0 0
  %5166 = vperm.xlu0 %5165, %v5078
  %v5167 = vpop.permute.xlu0 %5166
  %5170 = vset.pattern.permute.xlu0 0
  %5171 = vperm.xlu0 %5170, %v5079
  %v5172 = vpop.permute.xlu0 %5171
  %5175 = vset.pattern.permute.xlu0 0
  %5176 = vperm.xlu0 %5175, %v5080
  %v5177 = vpop.permute.xlu0 %5176
  %5180 = vset.pattern.permute.xlu0 0
  %5181 = vperm.xlu0 %5180, %v5081
  %v5182 = vpop.permute.xlu0 %5181
  %5185 = vset.pattern.permute.xlu0 0
  %5186 = vperm.xlu0 %5185, %v5082
  %v5187 = vpop.permute.xlu0 %5186
  %5190 = vset.pattern.permute.xlu0 0
  %5191 = vperm.xlu0 %5190, %v5083
  %v5192 = vpop.permute.xlu0 %5191
  %5195 = vset.pattern.permute.xlu0 0
  %5196 = vperm.xlu0 %5195, %v5084
  %v5197 = vpop.permute.xlu0 %5196
  %5200 = vset.pattern.permute.xlu0 0
  %5201 = vperm.xlu0 %5200, %v5085
  %v5202 = vpop.permute.xlu0 %5201
  %5205 = vset.pattern.permute.xlu0 0
  %5206 = vperm.xlu0 %5205, %v5086
  %v5207 = vpop.permute.xlu0 %5206
  %5210 = vset.pattern.permute.xlu0 0
  %5211 = vperm.xlu0 %5210, %v5087
  %v5212 = vpop.permute.xlu0 %5211
  %5215 = vset.pattern.permute.xlu0 0
  %5216 = vperm.xlu0 %5215, %v5088
  %v5217 = vpop.permute.xlu0 %5216
  %5220 = vset.pattern.permute.xlu0 0
  %5221 = vperm.xlu0 %5220, %v5089
  %v5222 = vpop.permute.xlu0 %5221
  %5225 = vset.pattern.permute.xlu0 0
  %5226 = vperm.xlu0 %5225, %v5090
  %v5227 = vpop.permute.xlu0 %5226
  %5230 = vset.pattern.permute.xlu0 0
  %5231 = vperm.xlu0 %5230, %v5091
  %v5232 = vpop.permute.xlu0 %5231
  %5235 = vset.pattern.permute.xlu0 0
  %5236 = vperm.xlu0 %5235, %v5092
  %v5237 = vpop.permute.xlu0 %5236
  %5240 = vset.pattern.permute.xlu0 0
  %5241 = vperm.xlu0 %5240, %v5093
  %v5242 = vpop.permute.xlu0 %5241
  %5245 = vset.pattern.permute.xlu0 0
  %5246 = vperm.xlu0 %5245, %v5094
  %v5247 = vpop.permute.xlu0 %5246
  %5250 = vset.pattern.permute.xlu0 0
  %5251 = vperm.xlu0 %5250, %v5095
  %v5252 = vpop.permute.xlu0 %5251
  %5255 = vset.pattern.permute.xlu0 0
  %5256 = vperm.xlu0 %5255, %v5096
  %v5257 = vpop.permute.xlu0 %5256
  %5260 = vset.pattern.permute.xlu0 0
  %5261 = vperm.xlu0 %5260, %v5097
  %v5262 = vpop.permute.xlu0 %5261
  %5265 = vset.pattern.permute.xlu0 0
  %5266 = vperm.xlu0 %5265, %v5098
  %v5267 = vpop.permute.xlu0 %5266
  %5270 = vset.pattern.permute.xlu0 0
  %5271 = vperm.xlu0 %5270, %v5099
  %v5272 = vpop.permute.xlu0 %5271
  %5275 = vset.pattern.permute.xlu0 0
  %5276 = vperm.xlu0 %5275, %v5100
  %v5277 = vpop.permute.xlu0 %5276
  %5280 = vset.pattern.permute.xlu0 0
  %5281 = vperm.xlu0 %5280, %v5101
  %v5282 = vpop.permute.xlu0 %5281
  %5285 = vset.pattern.permute.xlu0 0
  %5286 = vperm.xlu0 %5285, %v5102
  %v5287 = vpop.permute.xlu0 %5286
  %5290 = vset.pattern.permute.xlu0 0
  %5291 = vperm.xlu0 %5290, %v5103
  %v5292 = vpop.permute.xlu0 %5291
  %v5294 = vadd.f32 %v5028, %v5107
  %v5295 = vadd.f32 %v5029, %v5112
  %v5296 = vadd.f32 %v5030, %v5117
  %v5297 = vadd.f32 %v5031, %v5122
  %v5298 = vadd.f32 %v5032, %v5127
  %v5299 = vadd.f32 %v5033, %v5132
  %v5300 = vadd.f32 %v5034, %v5137
  %v5301 = vadd.f32 %v5035, %v5142
  %v5302 = vadd.f32 %v5036, %v5147
  %v5303 = vadd.f32 %v5037, %v5152
  %v5304 = vadd.f32 %v5038, %v5157
  %v5305 = vadd.f32 %v5039, %v5162
  %v5306 = vadd.f32 %v5040, %v5167
  %v5307 = vadd.f32 %v5041, %v5172
  %v5308 = vadd.f32 %v5042, %v5177
  %v5309 = vadd.f32 %v5043, %v5182
  %v5310 = vadd.f32 %v5044, %v5187
  %v5311 = vadd.f32 %v5045, %v5192
  %v5312 = vadd.f32 %v5046, %v5197
  %v5313 = vadd.f32 %v5047, %v5202
  %v5314 = vadd.f32 %v5048, %v5207
  %v5315 = vadd.f32 %v5049, %v5212
  %v5316 = vadd.f32 %v5050, %v5217
  %v5317 = vadd.f32 %v5051, %v5222
  %v5318 = vadd.f32 %v5052, %v5227
  %v5319 = vadd.f32 %v5053, %v5232
  %v5320 = vadd.f32 %v5054, %v5237
  %v5321 = vadd.f32 %v5055, %v5242
  %v5322 = vadd.f32 %v5056, %v5247
  %v5323 = vadd.f32 %v5057, %v5252
  %v5324 = vadd.f32 %v5058, %v5257
  %v5325 = vadd.f32 %v5059, %v5262
  %v5326 = vadd.f32 %v5060, %v5267
  %v5327 = vadd.f32 %v5061, %v5272
  %v5328 = vadd.f32 %v5062, %v5277
  %v5329 = vadd.f32 %v5063, %v5282
  %v5330 = vadd.f32 %v5064, %v5287
  %v5331 = vadd.f32 %v5065, %v5292
  %5332 = vst.msk [vmem:[%s5] sm:$0xff] %vm4191, %v5294
  %5333 = vst.msk [vmem:[%s5 + $0x8] sm:$0xff] %vm4191, %v5295
  %5334 = vst.msk [vmem:[%s5 + $0x10] sm:$0xff] %vm4191, %v5296
  %5335 = vst.msk [vmem:[%s5 + $0x18] sm:$0xff] %vm4191, %v5297
  %5336 = vst.msk [vmem:[%s5 + $0x20] sm:$0xff] %vm4191, %v5298
  %5337 = vst.msk [vmem:[%s5 + $0x28] sm:$0xff] %vm4191, %v5299
  %5338 = vst.msk [vmem:[%s5 + $0x30] sm:$0xff] %vm4191, %v5300
  %5339 = vst.msk [vmem:[%s5 + $0x38] sm:$0xff] %vm4191, %v5301
  %5340 = vst.msk [vmem:[%s5 + $0x40] sm:$0xff] %vm4191, %v5302
  %5341 = vst.msk [vmem:[%s5 + $0x48] sm:$0xff] %vm4191, %v5303
  %5342 = vst.msk [vmem:[%s5 + $0x50] sm:$0xff] %vm4191, %v5304
  %5343 = vst.msk [vmem:[%s5 + $0x58] sm:$0xff] %vm4191, %v5305
  %5344 = vst.msk [vmem:[%s5 + $0x60] sm:$0xff] %vm4191, %v5306
  %5345 = vst.msk [vmem:[%s5 + $0x68] sm:$0xff] %vm4191, %v5307
  %5346 = vst.msk [vmem:[%s5 + $0x70] sm:$0xff] %vm4191, %v5308
  %5347 = vst.msk [vmem:[%s5 + $0x78] sm:$0xff] %vm4191, %v5309
  %5348 = vst.msk [vmem:[%s5 + $0x80] sm:$0xff] %vm4191, %v5310
  %5349 = vst.msk [vmem:[%s5 + $0x88] sm:$0xff] %vm4191, %v5311
  %5350 = vst.msk [vmem:[%s5 + $0x90] sm:$0xff] %vm4191, %v5312
  %5351 = vst.msk [vmem:[%s5 + $0x98] sm:$0xff] %vm4191, %v5313
  %5352 = vst.msk [vmem:[%s5 + $0xa0] sm:$0xff] %vm4191, %v5314
  %5353 = vst.msk [vmem:[%s5 + $0xa8] sm:$0xff] %vm4191, %v5315
  %5354 = vst.msk [vmem:[%s5 + $0xb0] sm:$0xff] %vm4191, %v5316
  %5355 = vst.msk [vmem:[%s5 + $0xb8] sm:$0xff] %vm4191, %v5317
  %5356 = vst.msk [vmem:[%s5 + $0xc0] sm:$0xff] %vm4191, %v5318
  %5357 = vst.msk [vmem:[%s5 + $0xc8] sm:$0xff] %vm4191, %v5319
  %5358 = vst.msk [vmem:[%s5 + $0xd0] sm:$0xff] %vm4191, %v5320
  %5359 = vst.msk [vmem:[%s5 + $0xd8] sm:$0xff] %vm4191, %v5321
  %5360 = vst.msk [vmem:[%s5 + $0xe0] sm:$0xff] %vm4191, %v5322
  %5361 = vst.msk [vmem:[%s5 + $0xe8] sm:$0xff] %vm4191, %v5323
  %5362 = vst.msk [vmem:[%s5 + $0xf0] sm:$0xff] %vm4191, %v5324
  %5363 = vst.msk [vmem:[%s5 + $0xf8] sm:$0xff] %vm4191, %v5325
  %5364 = vst.msk [vmem:[%s5 + $0x100] sm:$0xff] %vm4191, %v5326
  %5365 = vst.msk [vmem:[%s5 + $0x108] sm:$0xff] %vm4191, %v5327
  %5366 = vst.msk [vmem:[%s5 + $0x110] sm:$0xff] %vm4191, %v5328
  %5367 = vst.msk [vmem:[%s5 + $0x118] sm:$0xff] %vm4191, %v5329
  %5368 = vst.msk [vmem:[%s5 + $0x120] sm:$0xff] %vm4191, %v5330
  %5369 = vst.msk [vmem:[%s5 + $0x128] sm:$0xff] %vm4191, %v5331
  // Predicated region
  $region22: #{tpu_custom_call.1} parent=0 // pred_check
    _
  $region23: #{tpu_custom_call.1} parent=0 // pred_check_branch
    %5371 = sbr.rel (0) target = $region25
  $region24: #{tpu_custom_call.1} parent=0 // pred_region
    _
  $region25: #{tpu_custom_call.1} parent=0 // pred_fallthru
    _
  // Predicated region
  $region26: #{tpu_custom_call.1} parent=0 // pred_check
    _
  $region27: #{tpu_custom_call.1} parent=0 // pred_check_branch
    %5373 = sbr.rel (0) target = $region29
  $region28: #{tpu_custom_call.1} parent=0 // pred_region
    _
  $region29: #{tpu_custom_call.1} parent=0 // pred_fallthru
    _

</llo_original>
